<compile_context>
chip_gen: v6e
topology: v6e:2x2x1
jax: 0.10.0
libtpu: 0.0.40
codegen_flags: <defaults>
</compile_context>

<pallas_src>
import functools
import math

import jax
import jax.numpy as jnp
from jax.experimental import pallas as pl
from jax.experimental.pallas import tpu as pltpu

# -------------------- model hyper-params (from the module __init__) -----------
DIM = 128          # feature dim (small stand-in for 1024 / CLIP projection_dim)
NUM_HEADS = 8
ETA_CRITICAL_TOPO = 0.01
ALPHA_FEEDBACK_TOPO = 0.05

# -------------------- packed-slab chunk indices (weights & biases share order) --
W_TC1, W_TC2, W_IC1, W_IC2 = 0, 1, 2, 3
W_MS0 = 4                                   # ms0, ms1, ms2 = 4, 5, 6
W_CMQ, W_CMK, W_CMV, W_CMO = 7, 8, 9, 10
W_TPQ, W_TPK, W_TPV, W_TPO = 11, 12, 13, 14
W_CC, W_DO, W_CLS = 15, 16, 17
NW = 18
LN_TP_G, LN_TP_B, LN_CC_G, LN_CC_B = NW + 0, NW + 1, NW + 2, NW + 3   # rows in p_slab
NP = NW + 4


# ============================== fused Pallas kernel ===========================

def _sden_kernel(xt_ref, xi_ref, w_ref, p_ref, big_o, small_o, *, B, S, D, H, Dh):
    f32 = jnp.float32
    bf16 = jnp.bfloat16
    M = B * S

    def W(i, n=1):
        # bf16 weight chunk(s), lane-aligned static slice of the packed slab.
        return w_ref[:, i * D:(i + n) * D]                     # (D, n*D) bf16

    def P(i):
        return p_ref[i:i + 1, :]                               # (1, D) f32

    def mm(x, w, b=None):
        y = jnp.dot(x.astype(bf16), w, preferred_element_type=f32)
        if b is not None:
            y = y + b
        return y

    def ln(x, g, b):
        mu = jnp.mean(x, axis=-1, keepdims=True)
        var = jnp.mean(jnp.square(x - mu), axis=-1, keepdims=True)
        return (x - mu) * jax.lax.rsqrt(var + 1e-5) * g + b

    def softmax_last(s):
        m = jnp.max(s, axis=-1, keepdims=True)
        e = jnp.exp(s - m)
        z = jnp.sum(e, axis=-1, keepdims=True)
        return e * pl.reciprocal(z, approx=True)

    def softmax_entropy_last(s):
        # p = softmax(s);  H = lse(s) - sum(p*s)   (one log per row, no +eps bias)
        m = jnp.max(s, axis=-1, keepdims=True)
        e = jnp.exp(s - m)
        z = jnp.sum(e, axis=-1, keepdims=True)
        rz = pl.reciprocal(z, approx=True)
        ent = m + jnp.log(z) - rz * jnp.sum(e * s, axis=-1, keepdims=True)
        return e * rz, ent

    x_t = xt_ref[...]                                          # (M, D) bf16
    x_i = xi_ref[...]

    # ---- BidirectionalEmergenceCore: per-modality Linear-GELU-Linear ---------
    # TODO(synk): exact BidirectionalEmergenceCore internals undefined in the spec.
    t_bc = mm(jax.nn.gelu(mm(x_t, W(W_TC1), P(W_TC1)), approximate=True), W(W_TC2), P(W_TC2))
    i_bc = mm(jax.nn.gelu(mm(x_i, W(W_IC1), P(W_IC1)), approximate=True), W(W_IC2), P(W_IC2))

    # ---- MultiScaleEmergenceModule: fused (D,3D) projection, entropy weighting ----
    msw = W(W_MS0, 3)                                          # hoisted: used for both modalities

    def multiscale(x):
        y = mm(x, msw)                                         # (M, 3D)
        scales, negents = [], []
        for j in range(3):
            s = jnp.tanh(y[:, j * D:(j + 1) * D] + P(W_MS0 + j))
            _, ent = softmax_entropy_last(s)                   # (M, 1)
            scales.append(s)
            negents.append(-ent)
        mx = jnp.maximum(jnp.maximum(negents[0], negents[1]), negents[2])
        w0 = jnp.exp(negents[0] - mx)
        w1 = jnp.exp(negents[1] - mx)
        w2 = jnp.exp(negents[2] - mx)
        rz = pl.reciprocal(w0 + w1 + w2, approx=True)
        return (w0 * scales[0] + w1 * scales[1] + w2 * scales[2]) * rz

    ms_t = multiscale(t_bc)                                    # (M, D) f32
    ms_i = multiscale(i_bc)

    # ---- semantic graph: softmax(text . image^T / sqrt(D)) -------------------
    scale_d = 1.0 / math.sqrt(D)
    ms_t3b = ms_t.reshape(B, S, D).astype(bf16)
    ms_i3b = ms_i.reshape(B, S, D).astype(bf16)
    sem = softmax_last(jnp.einsum('bqd,bkd->bqk', ms_t3b, ms_i3b,
                                  preferred_element_type=f32) * scale_d)     # (B,S,S)

    # ---- CrossModalAttention: text attends to image, residual fuse ----------
    q = mm(ms_t, W(W_CMQ), P(W_CMQ))                           # (M, D)
    kv = mm(ms_i, W(W_CMK, 2))                                 # fused (D, 2D) K/V
    k = kv[:, 0:D] + P(W_CMK)
    v = kv[:, D:2 * D] + P(W_CMV)
    cs = jnp.einsum('bqd,bkd->bqk', q.reshape(B, S, D).astype(bf16),
                    k.reshape(B, S, D).astype(bf16), preferred_element_type=f32) * scale_d
    cp = softmax_last(cs)
    co = jnp.einsum('bqk,bkd->bqd', cp.astype(bf16),
                    v.reshape(B, S, D).astype(bf16), preferred_element_type=f32)
    fused = ms_t + mm(co.reshape(M, D), W(W_CMO), P(W_CMO))    # emerged_raw_output

    # ---- DynamicTopologyCoupler: multi-head self attention -------------------
    xn = ln(fused, P(LN_TP_G), P(LN_TP_B))
    qkv = mm(xn, W(W_TPQ, 3))                                  # ONE fused (D,3D) QKV matmul
    qh = (qkv[:, 0:D] + P(W_TPQ)).reshape(B, S, D).astype(bf16)
    kh = (qkv[:, D:2 * D] + P(W_TPK)).reshape(B, S, D).astype(bf16)
    vh = (qkv[:, 2 * D:3 * D] + P(W_TPV)).reshape(B, S, D).astype(bf16)

    lane = jax.lax.broadcasted_iota(jnp.int32, (1, 1, D), 2)
    scale_h = 1.0 / math.sqrt(Dh)
    adj_sum = jnp.zeros((B, S, S), f32)
    heads_out = jnp.zeros((B, S, D), f32)
    for h in range(H):                                         # head lanes selected by mask;
        hmask = ((lane >= h * Dh) & (lane < (h + 1) * Dh)).astype(bf16)
        k_h = kh * hmask                                       # no unaligned lane slicing
        v_h = vh * hmask
        s_h = jnp.einsum('bqd,bkd->bqk', qh, k_h, preferred_element_type=f32) * scale_h
        p_h = softmax_last(s_h)                                # (B, S, S) f32
        adj_sum = adj_sum + p_h
        heads_out = heads_out + jnp.einsum('bqk,bkd->bqd', p_h.astype(bf16), v_h,
                                           preferred_element_type=f32)
    adj = adj_sum * (1.0 / H)                                  # head-mean adjacency
    topo = fused + mm(heads_out.reshape(M, D), W(W_TPO), P(W_TPO))   # ONE dense Wo matmul

    # ---- graph entropy + eta-based PTCI feedback (scalar) --------------------
    h_graph = -jnp.sum(adj * jnp.log(adj + 1e-8), axis=-1, keepdims=True)    # (B,S,1)
    h_mean = jnp.mean(h_graph.reshape(M, 1), axis=0, keepdims=True)          # (1,1)
    eta = -ALPHA_FEEDBACK_TOPO * jnp.tanh(h_mean - ETA_CRITICAL_TOPO)        # (1,1)

    # ---- TopologyEntropyController: per-token feature entropy re-weighting ---
    topo3 = topo.reshape(B, S, D)
    _, h_feat = softmax_entropy_last(topo3)                    # (B,S,1)
    neg = -h_feat
    nmax = jnp.max(neg, axis=1, keepdims=True)                 # softmax over S axis
    e_w = jnp.exp(neg - nmax)
    ew = e_w * pl.reciprocal(jnp.sum(e_w, axis=1, keepdims=True), approx=True)   # (B,S,1)
    controlled = (topo3 * (S * ew)).reshape(M, D)

    # ---- CriticalDynamicsController: LN + tanh-linear residual ---------------
    cn = ln(controlled, P(LN_CC_G), P(LN_CC_B))
    crit = controlled + jnp.tanh(mm(cn, W(W_CC), P(W_CC)))

    # ---- DualEmergenceOptimizer + classifier ----------------------------------
    opt = crit + jax.nn.gelu(mm(crit, W(W_DO), P(W_DO)), approximate=True)
    pooled = jnp.mean(opt.reshape(B, S, D), axis=1)            # (B, D)
    logits = mm(pooled, W(W_CLS), P(W_CLS))

    # ---- lane-dense packed output slabs (2 writeback DMAs) -------------------
    big_o[0:M, :] = ms_t
    big_o[M:2 * M, :] = ms_i
    big_o[2 * M:3 * M, :] = fused
    big_o[3 * M:4 * M, :] = opt
    big_o[4 * M:4 * M + B, :] = logits

    small_o[...] = jnp.zeros_like(small_o)
    small_o[0:M, 0:S] = sem.reshape(M, S)
    small_o[M:2 * M, 0:S] = adj.reshape(M, S)
    small_o[2 * M:3 * M, 0:1] = ew.reshape(M, 1)
    small_o[3 * M:3 * M + 1, :] = jnp.zeros((1, D), f32) + eta


# ============================ parameter construction ==========================

def _dense_init(key, d_in, d_out):
    kw, kb = jax.random.split(key)
    w = jax.random.normal(kw, (d_in, d_out), jnp.float32) / math.sqrt(d_in)
    b = jax.random.normal(kb, (d_out,), jnp.float32) * 0.01
    return w, b


def init_params(key, dim):
    keys = jax.random.split(key, 20)
    p = {}
    # BidirectionalEmergenceCore: text / image EmergenceCore MLPs
    p["tc1_w"], p["tc1_b"] = _dense_init(keys[0], dim, dim)
    p["tc2_w"], p["tc2_b"] = _dense_init(keys[1], dim, dim)
    p["ic1_w"], p["ic1_b"] = _dense_init(keys[2], dim, dim)
    p["ic2_w"], p["ic2_b"] = _dense_init(keys[3], dim, dim)
    # MultiScaleEmergenceModule: 3 scale projections (micro / meso / macro)
    p["ms0_w"], p["ms0_b"] = _dense_init(keys[4], dim, dim)
    p["ms1_w"], p["ms1_b"] = _dense_init(keys[5], dim, dim)
    p["ms2_w"], p["ms2_b"] = _dense_init(keys[6], dim, dim)
    # CrossModalAttention (q from text, k/v from image)
    p["cm_wq"], p["cm_bq"] = _dense_init(keys[7], dim, dim)
    p["cm_wk"], p["cm_bk"] = _dense_init(keys[8], dim, dim)
    p["cm_wv"], p["cm_bv"] = _dense_init(keys[9], dim, dim)
    p["cm_wo"], p["cm_bo"] = _dense_init(keys[10], dim, dim)
    # DynamicTopologyCoupler (multi-head self attention)
    p["tp_ln_g"] = jnp.ones((dim,), jnp.float32)
    p["tp_ln_b"] = jnp.zeros((dim,), jnp.float32)
    p["tp_wq"], p["tp_bq"] = _dense_init(keys[11], dim, dim)
    p["tp_wk"], p["tp_bk"] = _dense_init(keys[12], dim, dim)
    p["tp_wv"], p["tp_bv"] = _dense_init(keys[13], dim, dim)
    p["tp_wo"], p["tp_bo"] = _dense_init(keys[14], dim, dim)
    # CriticalDynamicsController
    p["cc_ln_g"] = jnp.ones((dim,), jnp.float32)
    p["cc_ln_b"] = jnp.zeros((dim,), jnp.float32)
    p["cc_w"], p["cc_b"] = _dense_init(keys[15], dim, dim)
    # DualEmergenceOptimizer
    p["do_w"], p["do_b"] = _dense_init(keys[16], dim, dim)
    # classifier = nn.Linear(dim, dim)
    p["cls_w"], p["cls_b"] = _dense_init(keys[17], dim, dim)
    return p


_W_ORDER = ["tc1_w", "tc2_w", "ic1_w", "ic2_w", "ms0_w", "ms1_w", "ms2_w",
            "cm_wq", "cm_wk", "cm_wv", "cm_wo", "tp_wq", "tp_wk", "tp_wv", "tp_wo",
            "cc_w", "do_w", "cls_w"]
_B_ORDER = ["tc1_b", "tc2_b", "ic1_b", "ic2_b", "ms0_b", "ms1_b", "ms2_b",
            "cm_bq", "cm_bk", "cm_bv", "cm_bo", "tp_bq", "tp_bk", "tp_bv", "tp_bo",
            "cc_b", "do_b", "cls_b"]


# ================================ forward pass ================================

def sden_forward(params, text_features, image_features):
    """Eval-mode forward of SymmetricDynamicEmergenceNetwork (both modalities)."""
    B, S, D = text_features.shape
    H = NUM_HEADS
    assert D % 128 == 0 and D % H == 0 and S <= D
    Dh = D // H
    M = B * S
    f32 = jnp.float32
    bf16 = jnp.bfloat16

    # ---- pack weights/biases into contiguous slabs (trace-time XLA ops) ------
    w_slab = jnp.concatenate([params[n] for n in _W_ORDER], axis=1).astype(bf16)   # (D, 18D)
    p_slab = jnp.concatenate(
        [jnp.stack([params[n] for n in _B_ORDER], axis=0),
         jnp.stack([params["tp_ln_g"], params["tp_ln_b"],
                    params["cc_ln_g"], params["cc_ln_b"]], axis=0)],
        axis=0).astype(f32)                                                         # (22, D)
    x_t = text_features.reshape(M, D).astype(bf16)
    x_i = image_features.reshape(M, D).astype(bf16)

    big_rows = 4 * M + B
    small_rows = 3 * M + 1
    out_shape = (jax.ShapeDtypeStruct((big_rows, D), f32),
                 jax.ShapeDtypeStruct((small_rows, D), f32))

    vmem = pl.BlockSpec(memory_space=pltpu.MemorySpace.VMEM)
    kernel = functools.partial(_sden_kernel, B=B, S=S, D=D, H=H, Dh=Dh)

    big, small = pl.pallas_call(
        kernel,
        out_shape=out_shape,
        in_specs=[vmem, vmem, vmem, vmem],
        out_specs=(vmem, vmem),
    )(x_t, x_i, w_slab, p_slab)

    # ---- unpack lane-dense slabs ----------------------------------------------
    ms_final_text = big[0:M].reshape(B, S, D)
    ms_final_image = big[M:2 * M].reshape(B, S, D)
    emerged_raw = big[2 * M:3 * M].reshape(B, S, D)
    optimized = big[3 * M:4 * M].reshape(B, S, D)
    logits = big[4 * M:4 * M + B]

    sem_graph = small[0:M, 0:S].reshape(B, S, S)
    adjacency = small[M:2 * M, 0:S].reshape(B, S, S)
    entropy_weights = small[2 * M:3 * M, 0].reshape(B, S)
    next_eta_feedback = small[3 * M, 0]
    entropy_ranking = jnp.argsort(entropy_weights, axis=-1)     # only argsort in XLA

    # total_loss_output is None in eval mode (training-only branch skipped).
    return (
        ms_final_text,        # final_text_output
        ms_final_image,       # final_image_output
        optimized,            # global_emerged_output
        logits,               # logits_output
        None,                 # total_loss_output (eval mode)
        sem_graph,            # semantic_graph_output
        emerged_raw,          # emerged_raw_output
        adjacency,            # adjacency_output
        entropy_ranking,      # entropy_ranking_output
        next_eta_feedback,    # next_eta_feedback_for_loop
    )


# ==================================== main ====================================

if __name__ == "__main__":
    B, S, D = 2, 8, DIM
    key = jax.random.PRNGKey(0)
    k_par, k_txt, k_img = jax.random.split(key, 3)

    params = init_params(k_par, D)
    text_features = jax.random.normal(k_txt, (B, S, D), jnp.float32)
    image_features = jax.random.normal(k_img, (B, S, D), jnp.float32)

    outputs = jax.jit(sden_forward)(params, text_features, image_features)
    outputs = jax.block_until_ready(outputs)

    (final_text, final_image, global_emerged, logits, total_loss,
     semantic_graph, emerged_raw, adjacency, entropy_ranking, next_eta) = outputs

    assert final_text.shape == (B, S, D)
    assert final_image.shape == (B, S, D)
    assert global_emerged.shape == (B, S, D)
    assert logits.shape == (B, D)
    assert semantic_graph.shape == (B, S, S)
    assert emerged_raw.shape == (B, S, D)
    assert adjacency.shape == (B, S, S)
    assert entropy_ranking.shape == (B, S)
    assert next_eta.shape == ()
    assert total_loss is None
    assert bool(jnp.all(jnp.isfinite(global_emerged)))
    assert bool(jnp.all(jnp.isfinite(logits)))
    assert bool(jnp.all(jnp.isfinite(adjacency)))
    assert bool(jnp.all(jnp.isfinite(semantic_graph)))
    print("KERNEL_OK")
</pallas_src>

<mosaic_0001>
module attributes {stable_mosaic.version = 11 : i64} {
  func.func @_sden_kernel(%arg0: memref<16x128xbf16, #tpu.memory_space<vmem>>, %arg1: memref<16x128xbf16, #tpu.memory_space<vmem>>, %arg2: memref<128x2304xbf16, #tpu.memory_space<vmem>>, %arg3: memref<22x128xf32, #tpu.memory_space<vmem>>, %arg4: memref<66x128xf32, #tpu.memory_space<vmem>>, %arg5: memref<49x128xf32, #tpu.memory_space<vmem>>) attributes {dimension_semantics = [], scalar_prefetch = 0 : i64, scratch_operands = 0 : i64, tpu.core_type = #tpu.core_type<tc>} {
    %c0 = arith.constant 0 : index
    %c0_0 = arith.constant 0 : index
    %0 = vector.load %arg0[%c0, %c0_0] : memref<16x128xbf16, #tpu.memory_space<vmem>>, vector<16x128xbf16>
    %c0_1 = arith.constant 0 : index
    %c0_2 = arith.constant 0 : index
    %1 = vector.load %arg1[%c0_1, %c0_2] : memref<16x128xbf16, #tpu.memory_space<vmem>>, vector<16x128xbf16>
    %c0_3 = arith.constant 0 : index
    %c0_4 = arith.constant 0 : index
    %2 = vector.load %arg2[%c0_3, %c0_4] : memref<128x2304xbf16, #tpu.memory_space<vmem>>, vector<128x128xbf16>
    %c0_5 = arith.constant 0 : index
    %c0_6 = arith.constant 0 : index
    %3 = vector.load %arg3[%c0_5, %c0_6] : memref<22x128xf32, #tpu.memory_space<vmem>>, vector<1x128xf32>
    %cst = arith.constant dense<0.000000e+00> : vector<16x128xf32>
    %4 = tpu.matmul %0, %2, %cst {dimension_numbers = #tpu.dot_dimension_numbers<[1], [0], [0], [1], [0, 0, 1, 1], [], []>} : vector<16x128xbf16>, vector<128x128xbf16>, vector<16x128xf32> -> vector<16x128xf32>
    %5 = vector.broadcast %3 : vector<1x128xf32> to vector<16x128xf32>
    %6 = arith.addf %4, %5 : vector<16x128xf32>
    %7 = arith.mulf %6, %6 : vector<16x128xf32>
    %8 = arith.mulf %6, %7 : vector<16x128xf32>
    %cst_7 = arith.constant 4.471500e-02 : f32
    %9 = vector.broadcast %cst_7 : f32 to vector<16x128xf32>
    %10 = arith.mulf %9, %8 : vector<16x128xf32>
    %11 = arith.addf %6, %10 : vector<16x128xf32>
    %cst_8 = arith.constant 0.797884583 : f32
    %12 = vector.broadcast %cst_8 : f32 to vector<16x128xf32>
    %13 = arith.mulf %12, %11 : vector<16x128xf32>
    %14 = math.tanh %13 : vector<16x128xf32>
    %cst_9 = arith.constant 1.000000e+00 : f32
    %15 = vector.broadcast %cst_9 : f32 to vector<16x128xf32>
    %16 = arith.addf %15, %14 : vector<16x128xf32>
    %cst_10 = arith.constant 5.000000e-01 : f32
    %17 = vector.broadcast %cst_10 : f32 to vector<16x128xf32>
    %18 = arith.mulf %17, %16 : vector<16x128xf32>
    %19 = arith.mulf %6, %18 : vector<16x128xf32>
    %c0_11 = arith.constant 0 : index
    %c128 = arith.constant 128 : index
    %20 = vector.load %arg2[%c0_11, %c128] : memref<128x2304xbf16, #tpu.memory_space<vmem>>, vector<128x128xbf16>
    %c1 = arith.constant 1 : index
    %c0_12 = arith.constant 0 : index
    %21 = vector.load %arg3[%c1, %c0_12] : memref<22x128xf32, #tpu.memory_space<vmem>>, vector<1x128xf32>
    %22 = arith.truncf %19 : vector<16x128xf32> to vector<16x128xbf16>
    %cst_13 = arith.constant dense<0.000000e+00> : vector<16x128xf32>
    %23 = tpu.matmul %22, %20, %cst_13 {dimension_numbers = #tpu.dot_dimension_numbers<[1], [0], [0], [1], [0, 0, 1, 1], [], []>} : vector<16x128xbf16>, vector<128x128xbf16>, vector<16x128xf32> -> vector<16x128xf32>
    %24 = vector.broadcast %21 : vector<1x128xf32> to vector<16x128xf32>
    %25 = arith.addf %23, %24 : vector<16x128xf32>
    %c0_14 = arith.constant 0 : index
    %c256 = arith.constant 256 : index
    %26 = vector.load %arg2[%c0_14, %c256] : memref<128x2304xbf16, #tpu.memory_space<vmem>>, vector<128x128xbf16>
    %c2 = arith.constant 2 : index
    %c0_15 = arith.constant 0 : index
    %27 = vector.load %arg3[%c2, %c0_15] : memref<22x128xf32, #tpu.memory_space<vmem>>, vector<1x128xf32>
    %cst_16 = arith.constant dense<0.000000e+00> : vector<16x128xf32>
    %28 = tpu.matmul %1, %26, %cst_16 {dimension_numbers = #tpu.dot_dimension_numbers<[1], [0], [0], [1], [0, 0, 1, 1], [], []>} : vector<16x128xbf16>, vector<128x128xbf16>, vector<16x128xf32> -> vector<16x128xf32>
    %29 = vector.broadcast %27 : vector<1x128xf32> to vector<16x128xf32>
    %30 = arith.addf %28, %29 : vector<16x128xf32>
    %31 = arith.mulf %30, %30 : vector<16x128xf32>
    %32 = arith.mulf %30, %31 : vector<16x128xf32>
    %cst_17 = arith.constant 4.471500e-02 : f32
    %33 = vector.broadcast %cst_17 : f32 to vector<16x128xf32>
    %34 = arith.mulf %33, %32 : vector<16x128xf32>
    %35 = arith.addf %30, %34 : vector<16x128xf32>
    %cst_18 = arith.constant 0.797884583 : f32
    %36 = vector.broadcast %cst_18 : f32 to vector<16x128xf32>
    %37 = arith.mulf %36, %35 : vector<16x128xf32>
    %38 = math.tanh %37 : vector<16x128xf32>
    %cst_19 = arith.constant 1.000000e+00 : f32
    %39 = vector.broadcast %cst_19 : f32 to vector<16x128xf32>
    %40 = arith.addf %39, %38 : vector<16x128xf32>
    %cst_20 = arith.constant 5.000000e-01 : f32
    %41 = vector.broadcast %cst_20 : f32 to vector<16x128xf32>
    %42 = arith.mulf %41, %40 : vector<16x128xf32>
    %43 = arith.mulf %30, %42 : vector<16x128xf32>
    %c0_21 = arith.constant 0 : index
    %c384 = arith.constant 384 : index
    %44 = vector.load %arg2[%c0_21, %c384] : memref<128x2304xbf16, #tpu.memory_space<vmem>>, vector<128x128xbf16>
    %c3 = arith.constant 3 : index
    %c0_22 = arith.constant 0 : index
    %45 = vector.load %arg3[%c3, %c0_22] : memref<22x128xf32, #tpu.memory_space<vmem>>, vector<1x128xf32>
    %46 = arith.truncf %43 : vector<16x128xf32> to vector<16x128xbf16>
    %cst_23 = arith.constant dense<0.000000e+00> : vector<16x128xf32>
    %47 = tpu.matmul %46, %44, %cst_23 {dimension_numbers = #tpu.dot_dimension_numbers<[1], [0], [0], [1], [0, 0, 1, 1], [], []>} : vector<16x128xbf16>, vector<128x128xbf16>, vector<16x128xf32> -> vector<16x128xf32>
    %48 = vector.broadcast %45 : vector<1x128xf32> to vector<16x128xf32>
    %49 = arith.addf %47, %48 : vector<16x128xf32>
    %c0_24 = arith.constant 0 : index
    %c512 = arith.constant 512 : index
    %50 = vector.load %arg2[%c0_24, %c512] : memref<128x2304xbf16, #tpu.memory_space<vmem>>, vector<128x384xbf16>
    %51 = arith.truncf %25 : vector<16x128xf32> to vector<16x128xbf16>
    %cst_25 = arith.constant dense<0.000000e+00> : vector<16x384xf32>
    %52 = tpu.matmul %51, %50, %cst_25 {dimension_numbers = #tpu.dot_dimension_numbers<[1], [0], [0], [1], [0, 0, 1, 1], [], []>} : vector<16x128xbf16>, vector<128x384xbf16>, vector<16x384xf32> -> vector<16x384xf32>
    %53 = vector.extract_strided_slice %52 {offsets = [0, 0], sizes = [16, 128], strides = [1, 1]} : vector<16x384xf32> to vector<16x128xf32>
    %c4 = arith.constant 4 : index
    %c0_26 = arith.constant 0 : index
    %54 = vector.load %arg3[%c4, %c0_26] : memref<22x128xf32, #tpu.memory_space<vmem>>, vector<1x128xf32>
    %55 = vector.broadcast %54 : vector<1x128xf32> to vector<16x128xf32>
    %56 = arith.addf %53, %55 : vector<16x128xf32>
    %57 = math.tanh %56 : vector<16x128xf32>
    %cst_27 = arith.constant dense<0xFF800000> : vector<16xf32>
    %58 = vector.multi_reduction <maximumf>, %57, %cst_27 [1] : vector<16x128xf32> to vector<16xf32>
    %59 = vector.shape_cast %58 : vector<16xf32> to vector<16x1xf32>
    %60 = vector.broadcast %59 : vector<16x1xf32> to vector<16x128xf32>
    %61 = arith.subf %57, %60 : vector<16x128xf32>
    %62 = math.exp %61 : vector<16x128xf32>
    %cst_28 = arith.constant dense<0.000000e+00> : vector<16xf32>
    %63 = vector.multi_reduction <add>, %62, %cst_28 [1] : vector<16x128xf32> to vector<16xf32>
    %64 = vector.shape_cast %63 : vector<16xf32> to vector<16x1xf32>
    %65 = tpu.reciprocal %64 {approx = true} : vector<16x1xf32> -> vector<16x1xf32>
    %66 = math.log %64 : vector<16x1xf32>
    %67 = arith.addf %59, %66 : vector<16x1xf32>
    %68 = arith.mulf %62, %57 : vector<16x128xf32>
    %cst_29 = arith.constant dense<0.000000e+00> : vector<16xf32>
    %69 = vector.multi_reduction <add>, %68, %cst_29 [1] : vector<16x128xf32> to vector<16xf32>
    %70 = vector.shape_cast %69 : vector<16xf32> to vector<16x1xf32>
    %71 = arith.mulf %65, %70 : vector<16x1xf32>
    %72 = arith.subf %67, %71 : vector<16x1xf32>
    %cst_30 = arith.constant 0.000000e+00 : f32
    %73 = vector.broadcast %cst_30 : f32 to vector<16x1xf32>
    %74 = arith.subf %73, %72 : vector<16x1xf32>
    %75 = vector.extract_strided_slice %52 {offsets = [0, 128], sizes = [16, 128], strides = [1, 1]} : vector<16x384xf32> to vector<16x128xf32>
    %c5 = arith.constant 5 : index
    %c0_31 = arith.constant 0 : index
    %76 = vector.load %arg3[%c5, %c0_31] : memref<22x128xf32, #tpu.memory_space<vmem>>, vector<1x128xf32>
    %77 = vector.broadcast %76 : vector<1x128xf32> to vector<16x128xf32>
    %78 = arith.addf %75, %77 : vector<16x128xf32>
    %79 = math.tanh %78 : vector<16x128xf32>
    %cst_32 = arith.constant dense<0xFF800000> : vector<16xf32>
    %80 = vector.multi_reduction <maximumf>, %79, %cst_32 [1] : vector<16x128xf32> to vector<16xf32>
    %81 = vector.shape_cast %80 : vector<16xf32> to vector<16x1xf32>
    %82 = vector.broadcast %81 : vector<16x1xf32> to vector<16x128xf32>
    %83 = arith.subf %79, %82 : vector<16x128xf32>
    %84 = math.exp %83 : vector<16x128xf32>
    %cst_33 = arith.constant dense<0.000000e+00> : vector<16xf32>
    %85 = vector.multi_reduction <add>, %84, %cst_33 [1] : vector<16x128xf32> to vector<16xf32>
    %86 = vector.shape_cast %85 : vector<16xf32> to vector<16x1xf32>
    %87 = tpu.reciprocal %86 {approx = true} : vector<16x1xf32> -> vector<16x1xf32>
    %88 = math.log %86 : vector<16x1xf32>
    %89 = arith.addf %81, %88 : vector<16x1xf32>
    %90 = arith.mulf %84, %79 : vector<16x128xf32>
    %cst_34 = arith.constant dense<0.000000e+00> : vector<16xf32>
    %91 = vector.multi_reduction <add>, %90, %cst_34 [1] : vector<16x128xf32> to vector<16xf32>
    %92 = vector.shape_cast %91 : vector<16xf32> to vector<16x1xf32>
    %93 = arith.mulf %87, %92 : vector<16x1xf32>
    %94 = arith.subf %89, %93 : vector<16x1xf32>
    %cst_35 = arith.constant 0.000000e+00 : f32
    %95 = vector.broadcast %cst_35 : f32 to vector<16x1xf32>
    %96 = arith.subf %95, %94 : vector<16x1xf32>
    %97 = vector.extract_strided_slice %52 {offsets = [0, 256], sizes = [16, 128], strides = [1, 1]} : vector<16x384xf32> to vector<16x128xf32>
    %c6 = arith.constant 6 : index
    %c0_36 = arith.constant 0 : index
    %98 = vector.load %arg3[%c6, %c0_36] : memref<22x128xf32, #tpu.memory_space<vmem>>, vector<1x128xf32>
    %99 = vector.broadcast %98 : vector<1x128xf32> to vector<16x128xf32>
    %100 = arith.addf %97, %99 : vector<16x128xf32>
    %101 = math.tanh %100 : vector<16x128xf32>
    %cst_37 = arith.constant dense<0xFF800000> : vector<16xf32>
    %102 = vector.multi_reduction <maximumf>, %101, %cst_37 [1] : vector<16x128xf32> to vector<16xf32>
    %103 = vector.shape_cast %102 : vector<16xf32> to vector<16x1xf32>
    %104 = vector.broadcast %103 : vector<16x1xf32> to vector<16x128xf32>
    %105 = arith.subf %101, %104 : vector<16x128xf32>
    %106 = math.exp %105 : vector<16x128xf32>
    %cst_38 = arith.constant dense<0.000000e+00> : vector<16xf32>
    %107 = vector.multi_reduction <add>, %106, %cst_38 [1] : vector<16x128xf32> to vector<16xf32>
    %108 = vector.shape_cast %107 : vector<16xf32> to vector<16x1xf32>
    %109 = tpu.reciprocal %108 {approx = true} : vector<16x1xf32> -> vector<16x1xf32>
    %110 = math.log %108 : vector<16x1xf32>
    %111 = arith.addf %103, %110 : vector<16x1xf32>
    %112 = arith.mulf %106, %101 : vector<16x128xf32>
    %cst_39 = arith.constant dense<0.000000e+00> : vector<16xf32>
    %113 = vector.multi_reduction <add>, %112, %cst_39 [1] : vector<16x128xf32> to vector<16xf32>
    %114 = vector.shape_cast %113 : vector<16xf32> to vector<16x1xf32>
    %115 = arith.mulf %109, %114 : vector<16x1xf32>
    %116 = arith.subf %111, %115 : vector<16x1xf32>
    %cst_40 = arith.constant 0.000000e+00 : f32
    %117 = vector.broadcast %cst_40 : f32 to vector<16x1xf32>
    %118 = arith.subf %117, %116 : vector<16x1xf32>
    %119 = arith.maximumf %74, %96 : vector<16x1xf32>
    %120 = arith.maximumf %119, %118 : vector<16x1xf32>
    %121 = arith.subf %74, %120 : vector<16x1xf32>
    %122 = math.exp %121 : vector<16x1xf32>
    %123 = arith.subf %96, %120 : vector<16x1xf32>
    %124 = math.exp %123 : vector<16x1xf32>
    %125 = arith.subf %118, %120 : vector<16x1xf32>
    %126 = math.exp %125 : vector<16x1xf32>
    %127 = arith.addf %122, %124 : vector<16x1xf32>
    %128 = arith.addf %127, %126 : vector<16x1xf32>
    %129 = tpu.reciprocal %128 {approx = true} : vector<16x1xf32> -> vector<16x1xf32>
    %130 = vector.broadcast %122 : vector<16x1xf32> to vector<16x128xf32>
    %131 = arith.mulf %130, %57 : vector<16x128xf32>
    %132 = vector.broadcast %124 : vector<16x1xf32> to vector<16x128xf32>
    %133 = arith.mulf %132, %79 : vector<16x128xf32>
    %134 = arith.addf %131, %133 : vector<16x128xf32>
    %135 = vector.broadcast %126 : vector<16x1xf32> to vector<16x128xf32>
    %136 = arith.mulf %135, %101 : vector<16x128xf32>
    %137 = arith.addf %134, %136 : vector<16x128xf32>
    %138 = vector.broadcast %129 : vector<16x1xf32> to vector<16x128xf32>
    %139 = arith.mulf %137, %138 : vector<16x128xf32>
    %140 = arith.truncf %49 : vector<16x128xf32> to vector<16x128xbf16>
    %cst_41 = arith.constant dense<0.000000e+00> : vector<16x384xf32>
    %141 = tpu.matmul %140, %50, %cst_41 {dimension_numbers = #tpu.dot_dimension_numbers<[1], [0], [0], [1], [0, 0, 1, 1], [], []>} : vector<16x128xbf16>, vector<128x384xbf16>, vector<16x384xf32> -> vector<16x384xf32>
    %142 = vector.extract_strided_slice %141 {offsets = [0, 0], sizes = [16, 128], strides = [1, 1]} : vector<16x384xf32> to vector<16x128xf32>
    %c4_42 = arith.constant 4 : index
    %c0_43 = arith.constant 0 : index
    %143 = vector.load %arg3[%c4_42, %c0_43] : memref<22x128xf32, #tpu.memory_space<vmem>>, vector<1x128xf32>
    %144 = vector.broadcast %143 : vector<1x128xf32> to vector<16x128xf32>
    %145 = arith.addf %142, %144 : vector<16x128xf32>
    %146 = math.tanh %145 : vector<16x128xf32>
    %cst_44 = arith.constant dense<0xFF800000> : vector<16xf32>
    %147 = vector.multi_reduction <maximumf>, %146, %cst_44 [1] : vector<16x128xf32> to vector<16xf32>
    %148 = vector.shape_cast %147 : vector<16xf32> to vector<16x1xf32>
    %149 = vector.broadcast %148 : vector<16x1xf32> to vector<16x128xf32>
    %150 = arith.subf %146, %149 : vector<16x128xf32>
    %151 = math.exp %150 : vector<16x128xf32>
    %cst_45 = arith.constant dense<0.000000e+00> : vector<16xf32>
    %152 = vector.multi_reduction <add>, %151, %cst_45 [1] : vector<16x128xf32> to vector<16xf32>
    %153 = vector.shape_cast %152 : vector<16xf32> to vector<16x1xf32>
    %154 = tpu.reciprocal %153 {approx = true} : vector<16x1xf32> -> vector<16x1xf32>
    %155 = math.log %153 : vector<16x1xf32>
    %156 = arith.addf %148, %155 : vector<16x1xf32>
    %157 = arith.mulf %151, %146 : vector<16x128xf32>
    %cst_46 = arith.constant dense<0.000000e+00> : vector<16xf32>
    %158 = vector.multi_reduction <add>, %157, %cst_46 [1] : vector<16x128xf32> to vector<16xf32>
    %159 = vector.shape_cast %158 : vector<16xf32> to vector<16x1xf32>
    %160 = arith.mulf %154, %159 : vector<16x1xf32>
    %161 = arith.subf %156, %160 : vector<16x1xf32>
    %cst_47 = arith.constant 0.000000e+00 : f32
    %162 = vector.broadcast %cst_47 : f32 to vector<16x1xf32>
    %163 = arith.subf %162, %161 : vector<16x1xf32>
    %164 = vector.extract_strided_slice %141 {offsets = [0, 128], sizes = [16, 128], strides = [1, 1]} : vector<16x384xf32> to vector<16x128xf32>
    %c5_48 = arith.constant 5 : index
    %c0_49 = arith.constant 0 : index
    %165 = vector.load %arg3[%c5_48, %c0_49] : memref<22x128xf32, #tpu.memory_space<vmem>>, vector<1x128xf32>
    %166 = vector.broadcast %165 : vector<1x128xf32> to vector<16x128xf32>
    %167 = arith.addf %164, %166 : vector<16x128xf32>
    %168 = math.tanh %167 : vector<16x128xf32>
    %cst_50 = arith.constant dense<0xFF800000> : vector<16xf32>
    %169 = vector.multi_reduction <maximumf>, %168, %cst_50 [1] : vector<16x128xf32> to vector<16xf32>
    %170 = vector.shape_cast %169 : vector<16xf32> to vector<16x1xf32>
    %171 = vector.broadcast %170 : vector<16x1xf32> to vector<16x128xf32>
    %172 = arith.subf %168, %171 : vector<16x128xf32>
    %173 = math.exp %172 : vector<16x128xf32>
    %cst_51 = arith.constant dense<0.000000e+00> : vector<16xf32>
    %174 = vector.multi_reduction <add>, %173, %cst_51 [1] : vector<16x128xf32> to vector<16xf32>
    %175 = vector.shape_cast %174 : vector<16xf32> to vector<16x1xf32>
    %176 = tpu.reciprocal %175 {approx = true} : vector<16x1xf32> -> vector<16x1xf32>
    %177 = math.log %175 : vector<16x1xf32>
    %178 = arith.addf %170, %177 : vector<16x1xf32>
    %179 = arith.mulf %173, %168 : vector<16x128xf32>
    %cst_52 = arith.constant dense<0.000000e+00> : vector<16xf32>
    %180 = vector.multi_reduction <add>, %179, %cst_52 [1] : vector<16x128xf32> to vector<16xf32>
    %181 = vector.shape_cast %180 : vector<16xf32> to vector<16x1xf32>
    %182 = arith.mulf %176, %181 : vector<16x1xf32>
    %183 = arith.subf %178, %182 : vector<16x1xf32>
    %cst_53 = arith.constant 0.000000e+00 : f32
    %184 = vector.broadcast %cst_53 : f32 to vector<16x1xf32>
    %185 = arith.subf %184, %183 : vector<16x1xf32>
    %186 = vector.extract_strided_slice %141 {offsets = [0, 256], sizes = [16, 128], strides = [1, 1]} : vector<16x384xf32> to vector<16x128xf32>
    %c6_54 = arith.constant 6 : index
    %c0_55 = arith.constant 0 : index
    %187 = vector.load %arg3[%c6_54, %c0_55] : memref<22x128xf32, #tpu.memory_space<vmem>>, vector<1x128xf32>
    %188 = vector.broadcast %187 : vector<1x128xf32> to vector<16x128xf32>
    %189 = arith.addf %186, %188 : vector<16x128xf32>
    %190 = math.tanh %189 : vector<16x128xf32>
    %cst_56 = arith.constant dense<0xFF800000> : vector<16xf32>
    %191 = vector.multi_reduction <maximumf>, %190, %cst_56 [1] : vector<16x128xf32> to vector<16xf32>
    %192 = vector.shape_cast %191 : vector<16xf32> to vector<16x1xf32>
    %193 = vector.broadcast %192 : vector<16x1xf32> to vector<16x128xf32>
    %194 = arith.subf %190, %193 : vector<16x128xf32>
    %195 = math.exp %194 : vector<16x128xf32>
    %cst_57 = arith.constant dense<0.000000e+00> : vector<16xf32>
    %196 = vector.multi_reduction <add>, %195, %cst_57 [1] : vector<16x128xf32> to vector<16xf32>
    %197 = vector.shape_cast %196 : vector<16xf32> to vector<16x1xf32>
    %198 = tpu.reciprocal %197 {approx = true} : vector<16x1xf32> -> vector<16x1xf32>
    %199 = math.log %197 : vector<16x1xf32>
    %200 = arith.addf %192, %199 : vector<16x1xf32>
    %201 = arith.mulf %195, %190 : vector<16x128xf32>
    %cst_58 = arith.constant dense<0.000000e+00> : vector<16xf32>
    %202 = vector.multi_reduction <add>, %201, %cst_58 [1] : vector<16x128xf32> to vector<16xf32>
    %203 = vector.shape_cast %202 : vector<16xf32> to vector<16x1xf32>
    %204 = arith.mulf %198, %203 : vector<16x1xf32>
    %205 = arith.subf %200, %204 : vector<16x1xf32>
    %cst_59 = arith.constant 0.000000e+00 : f32
    %206 = vector.broadcast %cst_59 : f32 to vector<16x1xf32>
    %207 = arith.subf %206, %205 : vector<16x1xf32>
    %208 = arith.maximumf %163, %185 : vector<16x1xf32>
    %209 = arith.maximumf %208, %207 : vector<16x1xf32>
    %210 = arith.subf %163, %209 : vector<16x1xf32>
    %211 = math.exp %210 : vector<16x1xf32>
    %212 = arith.subf %185, %209 : vector<16x1xf32>
    %213 = math.exp %212 : vector<16x1xf32>
    %214 = arith.subf %207, %209 : vector<16x1xf32>
    %215 = math.exp %214 : vector<16x1xf32>
    %216 = arith.addf %211, %213 : vector<16x1xf32>
    %217 = arith.addf %216, %215 : vector<16x1xf32>
    %218 = tpu.reciprocal %217 {approx = true} : vector<16x1xf32> -> vector<16x1xf32>
    %219 = vector.broadcast %211 : vector<16x1xf32> to vector<16x128xf32>
    %220 = arith.mulf %219, %146 : vector<16x128xf32>
    %221 = vector.broadcast %213 : vector<16x1xf32> to vector<16x128xf32>
    %222 = arith.mulf %221, %168 : vector<16x128xf32>
    %223 = arith.addf %220, %222 : vector<16x128xf32>
    %224 = vector.broadcast %215 : vector<16x1xf32> to vector<16x128xf32>
    %225 = arith.mulf %224, %190 : vector<16x128xf32>
    %226 = arith.addf %223, %225 : vector<16x128xf32>
    %227 = vector.broadcast %218 : vector<16x1xf32> to vector<16x128xf32>
    %228 = arith.mulf %226, %227 : vector<16x128xf32>
    %229 = vector.shape_cast %139 : vector<16x128xf32> to vector<2x8x128xf32>
    %230 = arith.truncf %229 : vector<2x8x128xf32> to vector<2x8x128xbf16>
    %231 = vector.shape_cast %228 : vector<16x128xf32> to vector<2x8x128xf32>
    %232 = arith.truncf %231 : vector<2x8x128xf32> to vector<2x8x128xbf16>
    "tpu.trace_start"() <{level = 10 : i32, message = "bqd,bkd->bqk"}> : () -> ()
    %cst_60 = arith.constant dense<0.000000e+00> : vector<2x8x8xf32>
    %233 = tpu.matmul %230, %232, %cst_60 {dimension_numbers = #tpu.dot_dimension_numbers<[2], [2], [1], [1], [0, 0, 0, 1, 1, 1], [0], [0]>} : vector<2x8x128xbf16>, vector<2x8x128xbf16>, vector<2x8x8xf32> -> vector<2x8x8xf32>
    "tpu.trace_stop"() : () -> ()
    %cst_61 = arith.constant 0.0883883461 : f32
    %234 = vector.broadcast %cst_61 : f32 to vector<2x8x8xf32>
    %235 = arith.mulf %233, %234 : vector<2x8x8xf32>
    %cst_62 = arith.constant dense<0xFF800000> : vector<2x8xf32>
    %236 = vector.multi_reduction <maximumf>, %235, %cst_62 [2] : vector<2x8x8xf32> to vector<2x8xf32>
    %237 = vector.shape_cast %236 : vector<2x8xf32> to vector<2x8x1xf32>
    %238 = vector.broadcast %237 : vector<2x8x1xf32> to vector<2x8x8xf32>
    %239 = arith.subf %235, %238 : vector<2x8x8xf32>
    %240 = math.exp %239 : vector<2x8x8xf32>
    %cst_63 = arith.constant dense<0.000000e+00> : vector<2x8xf32>
    %241 = vector.multi_reduction <add>, %240, %cst_63 [2] : vector<2x8x8xf32> to vector<2x8xf32>
    %242 = vector.shape_cast %241 : vector<2x8xf32> to vector<2x8x1xf32>
    %243 = tpu.reciprocal %242 {approx = true} : vector<2x8x1xf32> -> vector<2x8x1xf32>
    %244 = vector.broadcast %243 : vector<2x8x1xf32> to vector<2x8x8xf32>
    %245 = arith.mulf %240, %244 : vector<2x8x8xf32>
    %c0_64 = arith.constant 0 : index
    %c896 = arith.constant 896 : index
    %246 = vector.load %arg2[%c0_64, %c896] : memref<128x2304xbf16, #tpu.memory_space<vmem>>, vector<128x128xbf16>
    %c7 = arith.constant 7 : index
    %c0_65 = arith.constant 0 : index
    %247 = vector.load %arg3[%c7, %c0_65] : memref<22x128xf32, #tpu.memory_space<vmem>>, vector<1x128xf32>
    %248 = arith.truncf %139 : vector<16x128xf32> to vector<16x128xbf16>
    %cst_66 = arith.constant dense<0.000000e+00> : vector<16x128xf32>
    %249 = tpu.matmul %248, %246, %cst_66 {dimension_numbers = #tpu.dot_dimension_numbers<[1], [0], [0], [1], [0, 0, 1, 1], [], []>} : vector<16x128xbf16>, vector<128x128xbf16>, vector<16x128xf32> -> vector<16x128xf32>
    %250 = vector.broadcast %247 : vector<1x128xf32> to vector<16x128xf32>
    %251 = arith.addf %249, %250 : vector<16x128xf32>
    %c0_67 = arith.constant 0 : index
    %c1024 = arith.constant 1024 : index
    %252 = vector.load %arg2[%c0_67, %c1024] : memref<128x2304xbf16, #tpu.memory_space<vmem>>, vector<128x256xbf16>
    %253 = arith.truncf %228 : vector<16x128xf32> to vector<16x128xbf16>
    %cst_68 = arith.constant dense<0.000000e+00> : vector<16x256xf32>
    %254 = tpu.matmul %253, %252, %cst_68 {dimension_numbers = #tpu.dot_dimension_numbers<[1], [0], [0], [1], [0, 0, 1, 1], [], []>} : vector<16x128xbf16>, vector<128x256xbf16>, vector<16x256xf32> -> vector<16x256xf32>
    %255 = vector.extract_strided_slice %254 {offsets = [0, 0], sizes = [16, 128], strides = [1, 1]} : vector<16x256xf32> to vector<16x128xf32>
    %c8 = arith.constant 8 : index
    %c0_69 = arith.constant 0 : index
    %256 = vector.load %arg3[%c8, %c0_69] : memref<22x128xf32, #tpu.memory_space<vmem>>, vector<1x128xf32>
    %257 = vector.broadcast %256 : vector<1x128xf32> to vector<16x128xf32>
    %258 = arith.addf %255, %257 : vector<16x128xf32>
    %259 = vector.extract_strided_slice %254 {offsets = [0, 128], sizes = [16, 128], strides = [1, 1]} : vector<16x256xf32> to vector<16x128xf32>
    %c9 = arith.constant 9 : index
    %c0_70 = arith.constant 0 : index
    %260 = vector.load %arg3[%c9, %c0_70] : memref<22x128xf32, #tpu.memory_space<vmem>>, vector<1x128xf32>
    %261 = vector.broadcast %260 : vector<1x128xf32> to vector<16x128xf32>
    %262 = arith.addf %259, %261 : vector<16x128xf32>
    %263 = vector.shape_cast %251 : vector<16x128xf32> to vector<2x8x128xf32>
    %264 = arith.truncf %263 : vector<2x8x128xf32> to vector<2x8x128xbf16>
    %265 = vector.shape_cast %258 : vector<16x128xf32> to vector<2x8x128xf32>
    %266 = arith.truncf %265 : vector<2x8x128xf32> to vector<2x8x128xbf16>
    "tpu.trace_start"() <{level = 10 : i32, message = "bqd,bkd->bqk"}> : () -> ()
    %cst_71 = arith.constant dense<0.000000e+00> : vector<2x8x8xf32>
    %267 = tpu.matmul %264, %266, %cst_71 {dimension_numbers = #tpu.dot_dimension_numbers<[2], [2], [1], [1], [0, 0, 0, 1, 1, 1], [0], [0]>} : vector<2x8x128xbf16>, vector<2x8x128xbf16>, vector<2x8x8xf32> -> vector<2x8x8xf32>
    "tpu.trace_stop"() : () -> ()
    %cst_72 = arith.constant 0.0883883461 : f32
    %268 = vector.broadcast %cst_72 : f32 to vector<2x8x8xf32>
    %269 = arith.mulf %267, %268 : vector<2x8x8xf32>
    %cst_73 = arith.constant dense<0xFF800000> : vector<2x8xf32>
    %270 = vector.multi_reduction <maximumf>, %269, %cst_73 [2] : vector<2x8x8xf32> to vector<2x8xf32>
    %271 = vector.shape_cast %270 : vector<2x8xf32> to vector<2x8x1xf32>
    %272 = vector.broadcast %271 : vector<2x8x1xf32> to vector<2x8x8xf32>
    %273 = arith.subf %269, %272 : vector<2x8x8xf32>
    %274 = math.exp %273 : vector<2x8x8xf32>
    %cst_74 = arith.constant dense<0.000000e+00> : vector<2x8xf32>
    %275 = vector.multi_reduction <add>, %274, %cst_74 [2] : vector<2x8x8xf32> to vector<2x8xf32>
    %276 = vector.shape_cast %275 : vector<2x8xf32> to vector<2x8x1xf32>
    %277 = tpu.reciprocal %276 {approx = true} : vector<2x8x1xf32> -> vector<2x8x1xf32>
    %278 = vector.broadcast %277 : vector<2x8x1xf32> to vector<2x8x8xf32>
    %279 = arith.mulf %274, %278 : vector<2x8x8xf32>
    %280 = arith.truncf %279 : vector<2x8x8xf32> to vector<2x8x8xbf16>
    %281 = vector.shape_cast %262 : vector<16x128xf32> to vector<2x8x128xf32>
    %282 = arith.truncf %281 : vector<2x8x128xf32> to vector<2x8x128xbf16>
    "tpu.trace_start"() <{level = 10 : i32, message = "bqk,bkd->bqd"}> : () -> ()
    %cst_75 = arith.constant dense<0.000000e+00> : vector<2x8x128xf32>
    %283 = tpu.matmul %280, %282, %cst_75 {dimension_numbers = #tpu.dot_dimension_numbers<[2], [1], [1], [2], [0, 0, 0, 1, 1, 2], [0], [0]>} : vector<2x8x8xbf16>, vector<2x8x128xbf16>, vector<2x8x128xf32> -> vector<2x8x128xf32>
    "tpu.trace_stop"() : () -> ()
    %284 = vector.shape_cast %283 : vector<2x8x128xf32> to vector<16x128xf32>
    %c0_76 = arith.constant 0 : index
    %c1280 = arith.constant 1280 : index
    %285 = vector.load %arg2[%c0_76, %c1280] : memref<128x2304xbf16, #tpu.memory_space<vmem>>, vector<128x128xbf16>
    %c10 = arith.constant 10 : index
    %c0_77 = arith.constant 0 : index
    %286 = vector.load %arg3[%c10, %c0_77] : memref<22x128xf32, #tpu.memory_space<vmem>>, vector<1x128xf32>
    %287 = arith.truncf %284 : vector<16x128xf32> to vector<16x128xbf16>
    %cst_78 = arith.constant dense<0.000000e+00> : vector<16x128xf32>
    %288 = tpu.matmul %287, %285, %cst_78 {dimension_numbers = #tpu.dot_dimension_numbers<[1], [0], [0], [1], [0, 0, 1, 1], [], []>} : vector<16x128xbf16>, vector<128x128xbf16>, vector<16x128xf32> -> vector<16x128xf32>
    %289 = vector.broadcast %286 : vector<1x128xf32> to vector<16x128xf32>
    %290 = arith.addf %288, %289 : vector<16x128xf32>
    %291 = arith.addf %139, %290 : vector<16x128xf32>
    %c18 = arith.constant 18 : index
    %c0_79 = arith.constant 0 : index
    %292 = vector.load %arg3[%c18, %c0_79] : memref<22x128xf32, #tpu.memory_space<vmem>>, vector<1x128xf32>
    %c19 = arith.constant 19 : index
    %c0_80 = arith.constant 0 : index
    %293 = vector.load %arg3[%c19, %c0_80] : memref<22x128xf32, #tpu.memory_space<vmem>>, vector<1x128xf32>
    %cst_81 = arith.constant dense<0.000000e+00> : vector<16xf32>
    %294 = vector.multi_reduction <add>, %291, %cst_81 [1] : vector<16x128xf32> to vector<16xf32>
    %295 = vector.shape_cast %294 : vector<16xf32> to vector<16x1xf32>
    %cst_82 = arith.constant 1.280000e+02 : f32
    %296 = vector.broadcast %cst_82 : f32 to vector<16x1xf32>
    %297 = arith.divf %295, %296 : vector<16x1xf32>
    %298 = vector.broadcast %297 : vector<16x1xf32> to vector<16x128xf32>
    %299 = arith.subf %291, %298 : vector<16x128xf32>
    %300 = arith.mulf %299, %299 : vector<16x128xf32>
    %cst_83 = arith.constant dense<0.000000e+00> : vector<16xf32>
    %301 = vector.multi_reduction <add>, %300, %cst_83 [1] : vector<16x128xf32> to vector<16xf32>
    %302 = vector.shape_cast %301 : vector<16xf32> to vector<16x1xf32>
    %cst_84 = arith.constant 1.280000e+02 : f32
    %303 = vector.broadcast %cst_84 : f32 to vector<16x1xf32>
    %304 = arith.divf %302, %303 : vector<16x1xf32>
    %305 = vector.broadcast %297 : vector<16x1xf32> to vector<16x128xf32>
    %306 = arith.subf %291, %305 : vector<16x128xf32>
    %cst_85 = arith.constant 9.99999974E-6 : f32
    %307 = vector.broadcast %cst_85 : f32 to vector<16x1xf32>
    %308 = arith.addf %304, %307 : vector<16x1xf32>
    %309 = math.rsqrt %308 : vector<16x1xf32>
    %310 = vector.broadcast %309 : vector<16x1xf32> to vector<16x128xf32>
    %311 = arith.mulf %306, %310 : vector<16x128xf32>
    %312 = vector.broadcast %292 : vector<1x128xf32> to vector<16x128xf32>
    %313 = arith.mulf %311, %312 : vector<16x128xf32>
    %314 = vector.broadcast %293 : vector<1x128xf32> to vector<16x128xf32>
    %315 = arith.addf %313, %314 : vector<16x128xf32>
    %c0_86 = arith.constant 0 : index
    %c1408 = arith.constant 1408 : index
    %316 = vector.load %arg2[%c0_86, %c1408] : memref<128x2304xbf16, #tpu.memory_space<vmem>>, vector<128x384xbf16>
    %317 = arith.truncf %315 : vector<16x128xf32> to vector<16x128xbf16>
    %cst_87 = arith.constant dense<0.000000e+00> : vector<16x384xf32>
    %318 = tpu.matmul %317, %316, %cst_87 {dimension_numbers = #tpu.dot_dimension_numbers<[1], [0], [0], [1], [0, 0, 1, 1], [], []>} : vector<16x128xbf16>, vector<128x384xbf16>, vector<16x384xf32> -> vector<16x384xf32>
    %319 = vector.extract_strided_slice %318 {offsets = [0, 0], sizes = [16, 128], strides = [1, 1]} : vector<16x384xf32> to vector<16x128xf32>
    %c11 = arith.constant 11 : index
    %c0_88 = arith.constant 0 : index
    %320 = vector.load %arg3[%c11, %c0_88] : memref<22x128xf32, #tpu.memory_space<vmem>>, vector<1x128xf32>
    %321 = vector.broadcast %320 : vector<1x128xf32> to vector<16x128xf32>
    %322 = arith.addf %319, %321 : vector<16x128xf32>
    %323 = vector.shape_cast %322 : vector<16x128xf32> to vector<2x8x128xf32>
    %324 = arith.truncf %323 : vector<2x8x128xf32> to vector<2x8x128xbf16>
    %325 = vector.extract_strided_slice %318 {offsets = [0, 128], sizes = [16, 128], strides = [1, 1]} : vector<16x384xf32> to vector<16x128xf32>
    %c12 = arith.constant 12 : index
    %c0_89 = arith.constant 0 : index
    %326 = vector.load %arg3[%c12, %c0_89] : memref<22x128xf32, #tpu.memory_space<vmem>>, vector<1x128xf32>
    %327 = vector.broadcast %326 : vector<1x128xf32> to vector<16x128xf32>
    %328 = arith.addf %325, %327 : vector<16x128xf32>
    %329 = vector.shape_cast %328 : vector<16x128xf32> to vector<2x8x128xf32>
    %330 = arith.truncf %329 : vector<2x8x128xf32> to vector<2x8x128xbf16>
    %331 = vector.extract_strided_slice %318 {offsets = [0, 256], sizes = [16, 128], strides = [1, 1]} : vector<16x384xf32> to vector<16x128xf32>
    %c13 = arith.constant 13 : index
    %c0_90 = arith.constant 0 : index
    %332 = vector.load %arg3[%c13, %c0_90] : memref<22x128xf32, #tpu.memory_space<vmem>>, vector<1x128xf32>
    %333 = vector.broadcast %332 : vector<1x128xf32> to vector<16x128xf32>
    %334 = arith.addf %331, %333 : vector<16x128xf32>
    %335 = vector.shape_cast %334 : vector<16x128xf32> to vector<2x8x128xf32>
    %336 = arith.truncf %335 : vector<2x8x128xf32> to vector<2x8x128xbf16>
    %337 = tpu.iota {dimensions = array<i32: 2>} : vector<1x1x128xi32>
    %cst_91 = arith.constant 0.000000e+00 : f32
    %338 = vector.broadcast %cst_91 : f32 to vector<2x8x8xf32>
    %cst_92 = arith.constant 0.000000e+00 : f32
    %339 = vector.broadcast %cst_92 : f32 to vector<2x8x128xf32>
    %c0_i32 = arith.constant 0 : i32
    %340 = vector.broadcast %c0_i32 : i32 to vector<1x1x128xi32>
    %341 = arith.cmpi sge, %337, %340 : vector<1x1x128xi32>
    %c16_i32 = arith.constant 16 : i32
    %342 = vector.broadcast %c16_i32 : i32 to vector<1x1x128xi32>
    %343 = arith.cmpi slt, %337, %342 : vector<1x1x128xi32>
    %344 = arith.andi %341, %343 : vector<1x1x128xi1>
    %345 = arith.extui %344 : vector<1x1x128xi1> to vector<1x1x128xi32>
    %346 = arith.sitofp %345 : vector<1x1x128xi32> to vector<1x1x128xf32>
    %347 = arith.truncf %346 : vector<1x1x128xf32> to vector<1x1x128xbf16>
    %348 = vector.broadcast %347 : vector<1x1x128xbf16> to vector<2x8x128xbf16>
    %349 = arith.mulf %330, %348 : vector<2x8x128xbf16>
    %350 = vector.broadcast %347 : vector<1x1x128xbf16> to vector<2x8x128xbf16>
    %351 = arith.mulf %336, %350 : vector<2x8x128xbf16>
    "tpu.trace_start"() <{level = 10 : i32, message = "bqd,bkd->bqk"}> : () -> ()
    %cst_93 = arith.constant dense<0.000000e+00> : vector<2x8x8xf32>
    %352 = tpu.matmul %324, %349, %cst_93 {dimension_numbers = #tpu.dot_dimension_numbers<[2], [2], [1], [1], [0, 0, 0, 1, 1, 1], [0], [0]>} : vector<2x8x128xbf16>, vector<2x8x128xbf16>, vector<2x8x8xf32> -> vector<2x8x8xf32>
    "tpu.trace_stop"() : () -> ()
    %cst_94 = arith.constant 2.500000e-01 : f32
    %353 = vector.broadcast %cst_94 : f32 to vector<2x8x8xf32>
    %354 = arith.mulf %352, %353 : vector<2x8x8xf32>
    %cst_95 = arith.constant dense<0xFF800000> : vector<2x8xf32>
    %355 = vector.multi_reduction <maximumf>, %354, %cst_95 [2] : vector<2x8x8xf32> to vector<2x8xf32>
    %356 = vector.shape_cast %355 : vector<2x8xf32> to vector<2x8x1xf32>
    %357 = vector.broadcast %356 : vector<2x8x1xf32> to vector<2x8x8xf32>
    %358 = arith.subf %354, %357 : vector<2x8x8xf32>
    %359 = math.exp %358 : vector<2x8x8xf32>
    %cst_96 = arith.constant dense<0.000000e+00> : vector<2x8xf32>
    %360 = vector.multi_reduction <add>, %359, %cst_96 [2] : vector<2x8x8xf32> to vector<2x8xf32>
    %361 = vector.shape_cast %360 : vector<2x8xf32> to vector<2x8x1xf32>
    %362 = tpu.reciprocal %361 {approx = true} : vector<2x8x1xf32> -> vector<2x8x1xf32>
    %363 = vector.broadcast %362 : vector<2x8x1xf32> to vector<2x8x8xf32>
    %364 = arith.mulf %359, %363 : vector<2x8x8xf32>
    %365 = arith.addf %338, %364 : vector<2x8x8xf32>
    %366 = arith.truncf %364 : vector<2x8x8xf32> to vector<2x8x8xbf16>
    "tpu.trace_start"() <{level = 10 : i32, message = "bqk,bkd->bqd"}> : () -> ()
    %cst_97 = arith.constant dense<0.000000e+00> : vector<2x8x128xf32>
    %367 = tpu.matmul %366, %351, %cst_97 {dimension_numbers = #tpu.dot_dimension_numbers<[2], [1], [1], [2], [0, 0, 0, 1, 1, 2], [0], [0]>} : vector<2x8x8xbf16>, vector<2x8x128xbf16>, vector<2x8x128xf32> -> vector<2x8x128xf32>
    "tpu.trace_stop"() : () -> ()
    %368 = arith.addf %339, %367 : vector<2x8x128xf32>
    %c16_i32_98 = arith.constant 16 : i32
    %369 = vector.broadcast %c16_i32_98 : i32 to vector<1x1x128xi32>
    %370 = arith.cmpi sge, %337, %369 : vector<1x1x128xi32>
    %c32_i32 = arith.constant 32 : i32
    %371 = vector.broadcast %c32_i32 : i32 to vector<1x1x128xi32>
    %372 = arith.cmpi slt, %337, %371 : vector<1x1x128xi32>
    %373 = arith.andi %370, %372 : vector<1x1x128xi1>
    %374 = arith.extui %373 : vector<1x1x128xi1> to vector<1x1x128xi32>
    %375 = arith.sitofp %374 : vector<1x1x128xi32> to vector<1x1x128xf32>
    %376 = arith.truncf %375 : vector<1x1x128xf32> to vector<1x1x128xbf16>
    %377 = vector.broadcast %376 : vector<1x1x128xbf16> to vector<2x8x128xbf16>
    %378 = arith.mulf %330, %377 : vector<2x8x128xbf16>
    %379 = vector.broadcast %376 : vector<1x1x128xbf16> to vector<2x8x128xbf16>
    %380 = arith.mulf %336, %379 : vector<2x8x128xbf16>
    "tpu.trace_start"() <{level = 10 : i32, message = "bqd,bkd->bqk"}> : () -> ()
    %cst_99 = arith.constant dense<0.000000e+00> : vector<2x8x8xf32>
    %381 = tpu.matmul %324, %378, %cst_99 {dimension_numbers = #tpu.dot_dimension_numbers<[2], [2], [1], [1], [0, 0, 0, 1, 1, 1], [0], [0]>} : vector<2x8x128xbf16>, vector<2x8x128xbf16>, vector<2x8x8xf32> -> vector<2x8x8xf32>
    "tpu.trace_stop"() : () -> ()
    %cst_100 = arith.constant 2.500000e-01 : f32
    %382 = vector.broadcast %cst_100 : f32 to vector<2x8x8xf32>
    %383 = arith.mulf %381, %382 : vector<2x8x8xf32>
    %cst_101 = arith.constant dense<0xFF800000> : vector<2x8xf32>
    %384 = vector.multi_reduction <maximumf>, %383, %cst_101 [2] : vector<2x8x8xf32> to vector<2x8xf32>
    %385 = vector.shape_cast %384 : vector<2x8xf32> to vector<2x8x1xf32>
    %386 = vector.broadcast %385 : vector<2x8x1xf32> to vector<2x8x8xf32>
    %387 = arith.subf %383, %386 : vector<2x8x8xf32>
    %388 = math.exp %387 : vector<2x8x8xf32>
    %cst_102 = arith.constant dense<0.000000e+00> : vector<2x8xf32>
    %389 = vector.multi_reduction <add>, %388, %cst_102 [2] : vector<2x8x8xf32> to vector<2x8xf32>
    %390 = vector.shape_cast %389 : vector<2x8xf32> to vector<2x8x1xf32>
    %391 = tpu.reciprocal %390 {approx = true} : vector<2x8x1xf32> -> vector<2x8x1xf32>
    %392 = vector.broadcast %391 : vector<2x8x1xf32> to vector<2x8x8xf32>
    %393 = arith.mulf %388, %392 : vector<2x8x8xf32>
    %394 = arith.addf %365, %393 : vector<2x8x8xf32>
    %395 = arith.truncf %393 : vector<2x8x8xf32> to vector<2x8x8xbf16>
    "tpu.trace_start"() <{level = 10 : i32, message = "bqk,bkd->bqd"}> : () -> ()
    %cst_103 = arith.constant dense<0.000000e+00> : vector<2x8x128xf32>
    %396 = tpu.matmul %395, %380, %cst_103 {dimension_numbers = #tpu.dot_dimension_numbers<[2], [1], [1], [2], [0, 0, 0, 1, 1, 2], [0], [0]>} : vector<2x8x8xbf16>, vector<2x8x128xbf16>, vector<2x8x128xf32> -> vector<2x8x128xf32>
    "tpu.trace_stop"() : () -> ()
    %397 = arith.addf %368, %396 : vector<2x8x128xf32>
    %c32_i32_104 = arith.constant 32 : i32
    %398 = vector.broadcast %c32_i32_104 : i32 to vector<1x1x128xi32>
    %399 = arith.cmpi sge, %337, %398 : vector<1x1x128xi32>
    %c48_i32 = arith.constant 48 : i32
    %400 = vector.broadcast %c48_i32 : i32 to vector<1x1x128xi32>
    %401 = arith.cmpi slt, %337, %400 : vector<1x1x128xi32>
    %402 = arith.andi %399, %401 : vector<1x1x128xi1>
    %403 = arith.extui %402 : vector<1x1x128xi1> to vector<1x1x128xi32>
    %404 = arith.sitofp %403 : vector<1x1x128xi32> to vector<1x1x128xf32>
    %405 = arith.truncf %404 : vector<1x1x128xf32> to vector<1x1x128xbf16>
    %406 = vector.broadcast %405 : vector<1x1x128xbf16> to vector<2x8x128xbf16>
    %407 = arith.mulf %330, %406 : vector<2x8x128xbf16>
    %408 = vector.broadcast %405 : vector<1x1x128xbf16> to vector<2x8x128xbf16>
    %409 = arith.mulf %336, %408 : vector<2x8x128xbf16>
    "tpu.trace_start"() <{level = 10 : i32, message = "bqd,bkd->bqk"}> : () -> ()
    %cst_105 = arith.constant dense<0.000000e+00> : vector<2x8x8xf32>
    %410 = tpu.matmul %324, %407, %cst_105 {dimension_numbers = #tpu.dot_dimension_numbers<[2], [2], [1], [1], [0, 0, 0, 1, 1, 1], [0], [0]>} : vector<2x8x128xbf16>, vector<2x8x128xbf16>, vector<2x8x8xf32> -> vector<2x8x8xf32>
    "tpu.trace_stop"() : () -> ()
    %cst_106 = arith.constant 2.500000e-01 : f32
    %411 = vector.broadcast %cst_106 : f32 to vector<2x8x8xf32>
    %412 = arith.mulf %410, %411 : vector<2x8x8xf32>
    %cst_107 = arith.constant dense<0xFF800000> : vector<2x8xf32>
    %413 = vector.multi_reduction <maximumf>, %412, %cst_107 [2] : vector<2x8x8xf32> to vector<2x8xf32>
    %414 = vector.shape_cast %413 : vector<2x8xf32> to vector<2x8x1xf32>
    %415 = vector.broadcast %414 : vector<2x8x1xf32> to vector<2x8x8xf32>
    %416 = arith.subf %412, %415 : vector<2x8x8xf32>
    %417 = math.exp %416 : vector<2x8x8xf32>
    %cst_108 = arith.constant dense<0.000000e+00> : vector<2x8xf32>
    %418 = vector.multi_reduction <add>, %417, %cst_108 [2] : vector<2x8x8xf32> to vector<2x8xf32>
    %419 = vector.shape_cast %418 : vector<2x8xf32> to vector<2x8x1xf32>
    %420 = tpu.reciprocal %419 {approx = true} : vector<2x8x1xf32> -> vector<2x8x1xf32>
    %421 = vector.broadcast %420 : vector<2x8x1xf32> to vector<2x8x8xf32>
    %422 = arith.mulf %417, %421 : vector<2x8x8xf32>
    %423 = arith.addf %394, %422 : vector<2x8x8xf32>
    %424 = arith.truncf %422 : vector<2x8x8xf32> to vector<2x8x8xbf16>
    "tpu.trace_start"() <{level = 10 : i32, message = "bqk,bkd->bqd"}> : () -> ()
    %cst_109 = arith.constant dense<0.000000e+00> : vector<2x8x128xf32>
    %425 = tpu.matmul %424, %409, %cst_109 {dimension_numbers = #tpu.dot_dimension_numbers<[2], [1], [1], [2], [0, 0, 0, 1, 1, 2], [0], [0]>} : vector<2x8x8xbf16>, vector<2x8x128xbf16>, vector<2x8x128xf32> -> vector<2x8x128xf32>
    "tpu.trace_stop"() : () -> ()
    %426 = arith.addf %397, %425 : vector<2x8x128xf32>
    %c48_i32_110 = arith.constant 48 : i32
    %427 = vector.broadcast %c48_i32_110 : i32 to vector<1x1x128xi32>
    %428 = arith.cmpi sge, %337, %427 : vector<1x1x128xi32>
    %c64_i32 = arith.constant 64 : i32
    %429 = vector.broadcast %c64_i32 : i32 to vector<1x1x128xi32>
    %430 = arith.cmpi slt, %337, %429 : vector<1x1x128xi32>
    %431 = arith.andi %428, %430 : vector<1x1x128xi1>
    %432 = arith.extui %431 : vector<1x1x128xi1> to vector<1x1x128xi32>
    %433 = arith.sitofp %432 : vector<1x1x128xi32> to vector<1x1x128xf32>
    %434 = arith.truncf %433 : vector<1x1x128xf32> to vector<1x1x128xbf16>
    %435 = vector.broadcast %434 : vector<1x1x128xbf16> to vector<2x8x128xbf16>
    %436 = arith.mulf %330, %435 : vector<2x8x128xbf16>
    %437 = vector.broadcast %434 : vector<1x1x128xbf16> to vector<2x8x128xbf16>
    %438 = arith.mulf %336, %437 : vector<2x8x128xbf16>
    "tpu.trace_start"() <{level = 10 : i32, message = "bqd,bkd->bqk"}> : () -> ()
    %cst_111 = arith.constant dense<0.000000e+00> : vector<2x8x8xf32>
    %439 = tpu.matmul %324, %436, %cst_111 {dimension_numbers = #tpu.dot_dimension_numbers<[2], [2], [1], [1], [0, 0, 0, 1, 1, 1], [0], [0]>} : vector<2x8x128xbf16>, vector<2x8x128xbf16>, vector<2x8x8xf32> -> vector<2x8x8xf32>
    "tpu.trace_stop"() : () -> ()
    %cst_112 = arith.constant 2.500000e-01 : f32
    %440 = vector.broadcast %cst_112 : f32 to vector<2x8x8xf32>
    %441 = arith.mulf %439, %440 : vector<2x8x8xf32>
    %cst_113 = arith.constant dense<0xFF800000> : vector<2x8xf32>
    %442 = vector.multi_reduction <maximumf>, %441, %cst_113 [2] : vector<2x8x8xf32> to vector<2x8xf32>
    %443 = vector.shape_cast %442 : vector<2x8xf32> to vector<2x8x1xf32>
    %444 = vector.broadcast %443 : vector<2x8x1xf32> to vector<2x8x8xf32>
    %445 = arith.subf %441, %444 : vector<2x8x8xf32>
    %446 = math.exp %445 : vector<2x8x8xf32>
    %cst_114 = arith.constant dense<0.000000e+00> : vector<2x8xf32>
    %447 = vector.multi_reduction <add>, %446, %cst_114 [2] : vector<2x8x8xf32> to vector<2x8xf32>
    %448 = vector.shape_cast %447 : vector<2x8xf32> to vector<2x8x1xf32>
    %449 = tpu.reciprocal %448 {approx = true} : vector<2x8x1xf32> -> vector<2x8x1xf32>
    %450 = vector.broadcast %449 : vector<2x8x1xf32> to vector<2x8x8xf32>
    %451 = arith.mulf %446, %450 : vector<2x8x8xf32>
    %452 = arith.addf %423, %451 : vector<2x8x8xf32>
    %453 = arith.truncf %451 : vector<2x8x8xf32> to vector<2x8x8xbf16>
    "tpu.trace_start"() <{level = 10 : i32, message = "bqk,bkd->bqd"}> : () -> ()
    %cst_115 = arith.constant dense<0.000000e+00> : vector<2x8x128xf32>
    %454 = tpu.matmul %453, %438, %cst_115 {dimension_numbers = #tpu.dot_dimension_numbers<[2], [1], [1], [2], [0, 0, 0, 1, 1, 2], [0], [0]>} : vector<2x8x8xbf16>, vector<2x8x128xbf16>, vector<2x8x128xf32> -> vector<2x8x128xf32>
    "tpu.trace_stop"() : () -> ()
    %455 = arith.addf %426, %454 : vector<2x8x128xf32>
    %c64_i32_116 = arith.constant 64 : i32
    %456 = vector.broadcast %c64_i32_116 : i32 to vector<1x1x128xi32>
    %457 = arith.cmpi sge, %337, %456 : vector<1x1x128xi32>
    %c80_i32 = arith.constant 80 : i32
    %458 = vector.broadcast %c80_i32 : i32 to vector<1x1x128xi32>
    %459 = arith.cmpi slt, %337, %458 : vector<1x1x128xi32>
    %460 = arith.andi %457, %459 : vector<1x1x128xi1>
    %461 = arith.extui %460 : vector<1x1x128xi1> to vector<1x1x128xi32>
    %462 = arith.sitofp %461 : vector<1x1x128xi32> to vector<1x1x128xf32>
    %463 = arith.truncf %462 : vector<1x1x128xf32> to vector<1x1x128xbf16>
    %464 = vector.broadcast %463 : vector<1x1x128xbf16> to vector<2x8x128xbf16>
    %465 = arith.mulf %330, %464 : vector<2x8x128xbf16>
    %466 = vector.broadcast %463 : vector<1x1x128xbf16> to vector<2x8x128xbf16>
    %467 = arith.mulf %336, %466 : vector<2x8x128xbf16>
    "tpu.trace_start"() <{level = 10 : i32, message = "bqd,bkd->bqk"}> : () -> ()
    %cst_117 = arith.constant dense<0.000000e+00> : vector<2x8x8xf32>
    %468 = tpu.matmul %324, %465, %cst_117 {dimension_numbers = #tpu.dot_dimension_numbers<[2], [2], [1], [1], [0, 0, 0, 1, 1, 1], [0], [0]>} : vector<2x8x128xbf16>, vector<2x8x128xbf16>, vector<2x8x8xf32> -> vector<2x8x8xf32>
    "tpu.trace_stop"() : () -> ()
    %cst_118 = arith.constant 2.500000e-01 : f32
    %469 = vector.broadcast %cst_118 : f32 to vector<2x8x8xf32>
    %470 = arith.mulf %468, %469 : vector<2x8x8xf32>
    %cst_119 = arith.constant dense<0xFF800000> : vector<2x8xf32>
    %471 = vector.multi_reduction <maximumf>, %470, %cst_119 [2] : vector<2x8x8xf32> to vector<2x8xf32>
    %472 = vector.shape_cast %471 : vector<2x8xf32> to vector<2x8x1xf32>
    %473 = vector.broadcast %472 : vector<2x8x1xf32> to vector<2x8x8xf32>
    %474 = arith.subf %470, %473 : vector<2x8x8xf32>
    %475 = math.exp %474 : vector<2x8x8xf32>
    %cst_120 = arith.constant dense<0.000000e+00> : vector<2x8xf32>
    %476 = vector.multi_reduction <add>, %475, %cst_120 [2] : vector<2x8x8xf32> to vector<2x8xf32>
    %477 = vector.shape_cast %476 : vector<2x8xf32> to vector<2x8x1xf32>
    %478 = tpu.reciprocal %477 {approx = true} : vector<2x8x1xf32> -> vector<2x8x1xf32>
    %479 = vector.broadcast %478 : vector<2x8x1xf32> to vector<2x8x8xf32>
    %480 = arith.mulf %475, %479 : vector<2x8x8xf32>
    %481 = arith.addf %452, %480 : vector<2x8x8xf32>
    %482 = arith.truncf %480 : vector<2x8x8xf32> to vector<2x8x8xbf16>
    "tpu.trace_start"() <{level = 10 : i32, message = "bqk,bkd->bqd"}> : () -> ()
    %cst_121 = arith.constant dense<0.000000e+00> : vector<2x8x128xf32>
    %483 = tpu.matmul %482, %467, %cst_121 {dimension_numbers = #tpu.dot_dimension_numbers<[2], [1], [1], [2], [0, 0, 0, 1, 1, 2], [0], [0]>} : vector<2x8x8xbf16>, vector<2x8x128xbf16>, vector<2x8x128xf32> -> vector<2x8x128xf32>
    "tpu.trace_stop"() : () -> ()
    %484 = arith.addf %455, %483 : vector<2x8x128xf32>
    %c80_i32_122 = arith.constant 80 : i32
    %485 = vector.broadcast %c80_i32_122 : i32 to vector<1x1x128xi32>
    %486 = arith.cmpi sge, %337, %485 : vector<1x1x128xi32>
    %c96_i32 = arith.constant 96 : i32
    %487 = vector.broadcast %c96_i32 : i32 to vector<1x1x128xi32>
    %488 = arith.cmpi slt, %337, %487 : vector<1x1x128xi32>
    %489 = arith.andi %486, %488 : vector<1x1x128xi1>
    %490 = arith.extui %489 : vector<1x1x128xi1> to vector<1x1x128xi32>
    %491 = arith.sitofp %490 : vector<1x1x128xi32> to vector<1x1x128xf32>
    %492 = arith.truncf %491 : vector<1x1x128xf32> to vector<1x1x128xbf16>
    %493 = vector.broadcast %492 : vector<1x1x128xbf16> to vector<2x8x128xbf16>
    %494 = arith.mulf %330, %493 : vector<2x8x128xbf16>
    %495 = vector.broadcast %492 : vector<1x1x128xbf16> to vector<2x8x128xbf16>
    %496 = arith.mulf %336, %495 : vector<2x8x128xbf16>
    "tpu.trace_start"() <{level = 10 : i32, message = "bqd,bkd->bqk"}> : () -> ()
    %cst_123 = arith.constant dense<0.000000e+00> : vector<2x8x8xf32>
    %497 = tpu.matmul %324, %494, %cst_123 {dimension_numbers = #tpu.dot_dimension_numbers<[2], [2], [1], [1], [0, 0, 0, 1, 1, 1], [0], [0]>} : vector<2x8x128xbf16>, vector<2x8x128xbf16>, vector<2x8x8xf32> -> vector<2x8x8xf32>
    "tpu.trace_stop"() : () -> ()
    %cst_124 = arith.constant 2.500000e-01 : f32
    %498 = vector.broadcast %cst_124 : f32 to vector<2x8x8xf32>
    %499 = arith.mulf %497, %498 : vector<2x8x8xf32>
    %cst_125 = arith.constant dense<0xFF800000> : vector<2x8xf32>
    %500 = vector.multi_reduction <maximumf>, %499, %cst_125 [2] : vector<2x8x8xf32> to vector<2x8xf32>
    %501 = vector.shape_cast %500 : vector<2x8xf32> to vector<2x8x1xf32>
    %502 = vector.broadcast %501 : vector<2x8x1xf32> to vector<2x8x8xf32>
    %503 = arith.subf %499, %502 : vector<2x8x8xf32>
    %504 = math.exp %503 : vector<2x8x8xf32>
    %cst_126 = arith.constant dense<0.000000e+00> : vector<2x8xf32>
    %505 = vector.multi_reduction <add>, %504, %cst_126 [2] : vector<2x8x8xf32> to vector<2x8xf32>
    %506 = vector.shape_cast %505 : vector<2x8xf32> to vector<2x8x1xf32>
    %507 = tpu.reciprocal %506 {approx = true} : vector<2x8x1xf32> -> vector<2x8x1xf32>
    %508 = vector.broadcast %507 : vector<2x8x1xf32> to vector<2x8x8xf32>
    %509 = arith.mulf %504, %508 : vector<2x8x8xf32>
    %510 = arith.addf %481, %509 : vector<2x8x8xf32>
    %511 = arith.truncf %509 : vector<2x8x8xf32> to vector<2x8x8xbf16>
    "tpu.trace_start"() <{level = 10 : i32, message = "bqk,bkd->bqd"}> : () -> ()
    %cst_127 = arith.constant dense<0.000000e+00> : vector<2x8x128xf32>
    %512 = tpu.matmul %511, %496, %cst_127 {dimension_numbers = #tpu.dot_dimension_numbers<[2], [1], [1], [2], [0, 0, 0, 1, 1, 2], [0], [0]>} : vector<2x8x8xbf16>, vector<2x8x128xbf16>, vector<2x8x128xf32> -> vector<2x8x128xf32>
    "tpu.trace_stop"() : () -> ()
    %513 = arith.addf %484, %512 : vector<2x8x128xf32>
    %c96_i32_128 = arith.constant 96 : i32
    %514 = vector.broadcast %c96_i32_128 : i32 to vector<1x1x128xi32>
    %515 = arith.cmpi sge, %337, %514 : vector<1x1x128xi32>
    %c112_i32 = arith.constant 112 : i32
    %516 = vector.broadcast %c112_i32 : i32 to vector<1x1x128xi32>
    %517 = arith.cmpi slt, %337, %516 : vector<1x1x128xi32>
    %518 = arith.andi %515, %517 : vector<1x1x128xi1>
    %519 = arith.extui %518 : vector<1x1x128xi1> to vector<1x1x128xi32>
    %520 = arith.sitofp %519 : vector<1x1x128xi32> to vector<1x1x128xf32>
    %521 = arith.truncf %520 : vector<1x1x128xf32> to vector<1x1x128xbf16>
    %522 = vector.broadcast %521 : vector<1x1x128xbf16> to vector<2x8x128xbf16>
    %523 = arith.mulf %330, %522 : vector<2x8x128xbf16>
    %524 = vector.broadcast %521 : vector<1x1x128xbf16> to vector<2x8x128xbf16>
    %525 = arith.mulf %336, %524 : vector<2x8x128xbf16>
    "tpu.trace_start"() <{level = 10 : i32, message = "bqd,bkd->bqk"}> : () -> ()
    %cst_129 = arith.constant dense<0.000000e+00> : vector<2x8x8xf32>
    %526 = tpu.matmul %324, %523, %cst_129 {dimension_numbers = #tpu.dot_dimension_numbers<[2], [2], [1], [1], [0, 0, 0, 1, 1, 1], [0], [0]>} : vector<2x8x128xbf16>, vector<2x8x128xbf16>, vector<2x8x8xf32> -> vector<2x8x8xf32>
    "tpu.trace_stop"() : () -> ()
    %cst_130 = arith.constant 2.500000e-01 : f32
    %527 = vector.broadcast %cst_130 : f32 to vector<2x8x8xf32>
    %528 = arith.mulf %526, %527 : vector<2x8x8xf32>
    %cst_131 = arith.constant dense<0xFF800000> : vector<2x8xf32>
    %529 = vector.multi_reduction <maximumf>, %528, %cst_131 [2] : vector<2x8x8xf32> to vector<2x8xf32>
    %530 = vector.shape_cast %529 : vector<2x8xf32> to vector<2x8x1xf32>
    %531 = vector.broadcast %530 : vector<2x8x1xf32> to vector<2x8x8xf32>
    %532 = arith.subf %528, %531 : vector<2x8x8xf32>
    %533 = math.exp %532 : vector<2x8x8xf32>
    %cst_132 = arith.constant dense<0.000000e+00> : vector<2x8xf32>
    %534 = vector.multi_reduction <add>, %533, %cst_132 [2] : vector<2x8x8xf32> to vector<2x8xf32>
    %535 = vector.shape_cast %534 : vector<2x8xf32> to vector<2x8x1xf32>
    %536 = tpu.reciprocal %535 {approx = true} : vector<2x8x1xf32> -> vector<2x8x1xf32>
    %537 = vector.broadcast %536 : vector<2x8x1xf32> to vector<2x8x8xf32>
    %538 = arith.mulf %533, %537 : vector<2x8x8xf32>
    %539 = arith.addf %510, %538 : vector<2x8x8xf32>
    %540 = arith.truncf %538 : vector<2x8x8xf32> to vector<2x8x8xbf16>
    "tpu.trace_start"() <{level = 10 : i32, message = "bqk,bkd->bqd"}> : () -> ()
    %cst_133 = arith.constant dense<0.000000e+00> : vector<2x8x128xf32>
    %541 = tpu.matmul %540, %525, %cst_133 {dimension_numbers = #tpu.dot_dimension_numbers<[2], [1], [1], [2], [0, 0, 0, 1, 1, 2], [0], [0]>} : vector<2x8x8xbf16>, vector<2x8x128xbf16>, vector<2x8x128xf32> -> vector<2x8x128xf32>
    "tpu.trace_stop"() : () -> ()
    %542 = arith.addf %513, %541 : vector<2x8x128xf32>
    %c112_i32_134 = arith.constant 112 : i32
    %543 = vector.broadcast %c112_i32_134 : i32 to vector<1x1x128xi32>
    %544 = arith.cmpi sge, %337, %543 : vector<1x1x128xi32>
    %c128_i32 = arith.constant 128 : i32
    %545 = vector.broadcast %c128_i32 : i32 to vector<1x1x128xi32>
    %546 = arith.cmpi slt, %337, %545 : vector<1x1x128xi32>
    %547 = arith.andi %544, %546 : vector<1x1x128xi1>
    %548 = arith.extui %547 : vector<1x1x128xi1> to vector<1x1x128xi32>
    %549 = arith.sitofp %548 : vector<1x1x128xi32> to vector<1x1x128xf32>
    %550 = arith.truncf %549 : vector<1x1x128xf32> to vector<1x1x128xbf16>
    %551 = vector.broadcast %550 : vector<1x1x128xbf16> to vector<2x8x128xbf16>
    %552 = arith.mulf %330, %551 : vector<2x8x128xbf16>
    %553 = vector.broadcast %550 : vector<1x1x128xbf16> to vector<2x8x128xbf16>
    %554 = arith.mulf %336, %553 : vector<2x8x128xbf16>
    "tpu.trace_start"() <{level = 10 : i32, message = "bqd,bkd->bqk"}> : () -> ()
    %cst_135 = arith.constant dense<0.000000e+00> : vector<2x8x8xf32>
    %555 = tpu.matmul %324, %552, %cst_135 {dimension_numbers = #tpu.dot_dimension_numbers<[2], [2], [1], [1], [0, 0, 0, 1, 1, 1], [0], [0]>} : vector<2x8x128xbf16>, vector<2x8x128xbf16>, vector<2x8x8xf32> -> vector<2x8x8xf32>
    "tpu.trace_stop"() : () -> ()
    %cst_136 = arith.constant 2.500000e-01 : f32
    %556 = vector.broadcast %cst_136 : f32 to vector<2x8x8xf32>
    %557 = arith.mulf %555, %556 : vector<2x8x8xf32>
    %cst_137 = arith.constant dense<0xFF800000> : vector<2x8xf32>
    %558 = vector.multi_reduction <maximumf>, %557, %cst_137 [2] : vector<2x8x8xf32> to vector<2x8xf32>
    %559 = vector.shape_cast %558 : vector<2x8xf32> to vector<2x8x1xf32>
    %560 = vector.broadcast %559 : vector<2x8x1xf32> to vector<2x8x8xf32>
    %561 = arith.subf %557, %560 : vector<2x8x8xf32>
    %562 = math.exp %561 : vector<2x8x8xf32>
    %cst_138 = arith.constant dense<0.000000e+00> : vector<2x8xf32>
    %563 = vector.multi_reduction <add>, %562, %cst_138 [2] : vector<2x8x8xf32> to vector<2x8xf32>
    %564 = vector.shape_cast %563 : vector<2x8xf32> to vector<2x8x1xf32>
    %565 = tpu.reciprocal %564 {approx = true} : vector<2x8x1xf32> -> vector<2x8x1xf32>
    %566 = vector.broadcast %565 : vector<2x8x1xf32> to vector<2x8x8xf32>
    %567 = arith.mulf %562, %566 : vector<2x8x8xf32>
    %568 = arith.addf %539, %567 : vector<2x8x8xf32>
    %569 = arith.truncf %567 : vector<2x8x8xf32> to vector<2x8x8xbf16>
    "tpu.trace_start"() <{level = 10 : i32, message = "bqk,bkd->bqd"}> : () -> ()
    %cst_139 = arith.constant dense<0.000000e+00> : vector<2x8x128xf32>
    %570 = tpu.matmul %569, %554, %cst_139 {dimension_numbers = #tpu.dot_dimension_numbers<[2], [1], [1], [2], [0, 0, 0, 1, 1, 2], [0], [0]>} : vector<2x8x8xbf16>, vector<2x8x128xbf16>, vector<2x8x128xf32> -> vector<2x8x128xf32>
    "tpu.trace_stop"() : () -> ()
    %571 = arith.addf %542, %570 : vector<2x8x128xf32>
    %cst_140 = arith.constant 1.250000e-01 : f32
    %572 = vector.broadcast %cst_140 : f32 to vector<2x8x8xf32>
    %573 = arith.mulf %568, %572 : vector<2x8x8xf32>
    %574 = vector.shape_cast %571 : vector<2x8x128xf32> to vector<16x128xf32>
    %c0_141 = arith.constant 0 : index
    %c1792 = arith.constant 1792 : index
    %575 = vector.load %arg2[%c0_141, %c1792] : memref<128x2304xbf16, #tpu.memory_space<vmem>>, vector<128x128xbf16>
    %c14 = arith.constant 14 : index
    %c0_142 = arith.constant 0 : index
    %576 = vector.load %arg3[%c14, %c0_142] : memref<22x128xf32, #tpu.memory_space<vmem>>, vector<1x128xf32>
    %577 = arith.truncf %574 : vector<16x128xf32> to vector<16x128xbf16>
    %cst_143 = arith.constant dense<0.000000e+00> : vector<16x128xf32>
    %578 = tpu.matmul %577, %575, %cst_143 {dimension_numbers = #tpu.dot_dimension_numbers<[1], [0], [0], [1], [0, 0, 1, 1], [], []>} : vector<16x128xbf16>, vector<128x128xbf16>, vector<16x128xf32> -> vector<16x128xf32>
    %579 = vector.broadcast %576 : vector<1x128xf32> to vector<16x128xf32>
    %580 = arith.addf %578, %579 : vector<16x128xf32>
    %581 = arith.addf %291, %580 : vector<16x128xf32>
    %cst_144 = arith.constant 9.99999993E-9 : f32
    %582 = vector.broadcast %cst_144 : f32 to vector<2x8x8xf32>
    %583 = arith.addf %573, %582 : vector<2x8x8xf32>
    %584 = math.log %583 : vector<2x8x8xf32>
    %585 = arith.mulf %573, %584 : vector<2x8x8xf32>
    %cst_145 = arith.constant dense<0.000000e+00> : vector<2x8xf32>
    %586 = vector.multi_reduction <add>, %585, %cst_145 [2] : vector<2x8x8xf32> to vector<2x8xf32>
    %587 = vector.shape_cast %586 : vector<2x8xf32> to vector<2x8x1xf32>
    %cst_146 = arith.constant 0.000000e+00 : f32
    %588 = vector.broadcast %cst_146 : f32 to vector<2x8x1xf32>
    %589 = arith.subf %588, %587 : vector<2x8x1xf32>
    %590 = vector.shape_cast %589 : vector<2x8x1xf32> to vector<16x1xf32>
    %cst_147 = arith.constant dense<0.000000e+00> : vector<1xf32>
    %591 = vector.multi_reduction <add>, %590, %cst_147 [0] : vector<16x1xf32> to vector<1xf32>
    %592 = vector.shape_cast %591 : vector<1xf32> to vector<1x1xf32>
    %cst_148 = arith.constant 1.600000e+01 : f32
    %593 = vector.broadcast %cst_148 : f32 to vector<1x1xf32>
    %594 = arith.divf %592, %593 : vector<1x1xf32>
    %cst_149 = arith.constant 0.00999999977 : f32
    %595 = vector.broadcast %cst_149 : f32 to vector<1x1xf32>
    %596 = arith.subf %594, %595 : vector<1x1xf32>
    %597 = math.tanh %596 : vector<1x1xf32>
    %cst_150 = arith.constant -5.000000e-02 : f32
    %598 = vector.broadcast %cst_150 : f32 to vector<1x1xf32>
    %599 = arith.mulf %598, %597 : vector<1x1xf32>
    %600 = vector.shape_cast %581 : vector<16x128xf32> to vector<2x8x128xf32>
    %cst_151 = arith.constant dense<0xFF800000> : vector<2x8xf32>
    %601 = vector.multi_reduction <maximumf>, %600, %cst_151 [2] : vector<2x8x128xf32> to vector<2x8xf32>
    %602 = vector.shape_cast %601 : vector<2x8xf32> to vector<2x8x1xf32>
    %603 = vector.broadcast %602 : vector<2x8x1xf32> to vector<2x8x128xf32>
    %604 = arith.subf %600, %603 : vector<2x8x128xf32>
    %605 = math.exp %604 : vector<2x8x128xf32>
    %cst_152 = arith.constant dense<0.000000e+00> : vector<2x8xf32>
    %606 = vector.multi_reduction <add>, %605, %cst_152 [2] : vector<2x8x128xf32> to vector<2x8xf32>
    %607 = vector.shape_cast %606 : vector<2x8xf32> to vector<2x8x1xf32>
    %608 = tpu.reciprocal %607 {approx = true} : vector<2x8x1xf32> -> vector<2x8x1xf32>
    %609 = math.log %607 : vector<2x8x1xf32>
    %610 = arith.addf %602, %609 : vector<2x8x1xf32>
    %611 = arith.mulf %605, %600 : vector<2x8x128xf32>
    %cst_153 = arith.constant dense<0.000000e+00> : vector<2x8xf32>
    %612 = vector.multi_reduction <add>, %611, %cst_153 [2] : vector<2x8x128xf32> to vector<2x8xf32>
    %613 = vector.shape_cast %612 : vector<2x8xf32> to vector<2x8x1xf32>
    %614 = arith.mulf %608, %613 : vector<2x8x1xf32>
    %615 = arith.subf %610, %614 : vector<2x8x1xf32>
    %cst_154 = arith.constant 0.000000e+00 : f32
    %616 = vector.broadcast %cst_154 : f32 to vector<2x8x1xf32>
    %617 = arith.subf %616, %615 : vector<2x8x1xf32>
    %cst_155 = arith.constant dense<0xFF800000> : vector<2x1xf32>
    %618 = vector.multi_reduction <maximumf>, %617, %cst_155 [1] : vector<2x8x1xf32> to vector<2x1xf32>
    %619 = vector.shape_cast %618 : vector<2x1xf32> to vector<2x1x1xf32>
    %620 = vector.broadcast %619 : vector<2x1x1xf32> to vector<2x8x1xf32>
    %621 = arith.subf %617, %620 : vector<2x8x1xf32>
    %622 = math.exp %621 : vector<2x8x1xf32>
    %cst_156 = arith.constant dense<0.000000e+00> : vector<2x1xf32>
    %623 = vector.multi_reduction <add>, %622, %cst_156 [1] : vector<2x8x1xf32> to vector<2x1xf32>
    %624 = vector.shape_cast %623 : vector<2x1xf32> to vector<2x1x1xf32>
    %625 = tpu.reciprocal %624 {approx = true} : vector<2x1x1xf32> -> vector<2x1x1xf32>
    %626 = vector.broadcast %625 : vector<2x1x1xf32> to vector<2x8x1xf32>
    %627 = arith.mulf %622, %626 : vector<2x8x1xf32>
    %cst_157 = arith.constant 8.000000e+00 : f32
    %628 = vector.broadcast %cst_157 : f32 to vector<2x8x1xf32>
    %629 = arith.mulf %628, %627 : vector<2x8x1xf32>
    %630 = vector.broadcast %629 : vector<2x8x1xf32> to vector<2x8x128xf32>
    %631 = arith.mulf %600, %630 : vector<2x8x128xf32>
    %632 = vector.shape_cast %631 : vector<2x8x128xf32> to vector<16x128xf32>
    %c20 = arith.constant 20 : index
    %c0_158 = arith.constant 0 : index
    %633 = vector.load %arg3[%c20, %c0_158] : memref<22x128xf32, #tpu.memory_space<vmem>>, vector<1x128xf32>
    %c21 = arith.constant 21 : index
    %c0_159 = arith.constant 0 : index
    %634 = vector.load %arg3[%c21, %c0_159] : memref<22x128xf32, #tpu.memory_space<vmem>>, vector<1x128xf32>
    %cst_160 = arith.constant dense<0.000000e+00> : vector<16xf32>
    %635 = vector.multi_reduction <add>, %632, %cst_160 [1] : vector<16x128xf32> to vector<16xf32>
    %636 = vector.shape_cast %635 : vector<16xf32> to vector<16x1xf32>
    %cst_161 = arith.constant 1.280000e+02 : f32
    %637 = vector.broadcast %cst_161 : f32 to vector<16x1xf32>
    %638 = arith.divf %636, %637 : vector<16x1xf32>
    %639 = vector.broadcast %638 : vector<16x1xf32> to vector<16x128xf32>
    %640 = arith.subf %632, %639 : vector<16x128xf32>
    %641 = arith.mulf %640, %640 : vector<16x128xf32>
    %cst_162 = arith.constant dense<0.000000e+00> : vector<16xf32>
    %642 = vector.multi_reduction <add>, %641, %cst_162 [1] : vector<16x128xf32> to vector<16xf32>
    %643 = vector.shape_cast %642 : vector<16xf32> to vector<16x1xf32>
    %cst_163 = arith.constant 1.280000e+02 : f32
    %644 = vector.broadcast %cst_163 : f32 to vector<16x1xf32>
    %645 = arith.divf %643, %644 : vector<16x1xf32>
    %646 = vector.broadcast %638 : vector<16x1xf32> to vector<16x128xf32>
    %647 = arith.subf %632, %646 : vector<16x128xf32>
    %cst_164 = arith.constant 9.99999974E-6 : f32
    %648 = vector.broadcast %cst_164 : f32 to vector<16x1xf32>
    %649 = arith.addf %645, %648 : vector<16x1xf32>
    %650 = math.rsqrt %649 : vector<16x1xf32>
    %651 = vector.broadcast %650 : vector<16x1xf32> to vector<16x128xf32>
    %652 = arith.mulf %647, %651 : vector<16x128xf32>
    %653 = vector.broadcast %633 : vector<1x128xf32> to vector<16x128xf32>
    %654 = arith.mulf %652, %653 : vector<16x128xf32>
    %655 = vector.broadcast %634 : vector<1x128xf32> to vector<16x128xf32>
    %656 = arith.addf %654, %655 : vector<16x128xf32>
    %c0_165 = arith.constant 0 : index
    %c1920 = arith.constant 1920 : index
    %657 = vector.load %arg2[%c0_165, %c1920] : memref<128x2304xbf16, #tpu.memory_space<vmem>>, vector<128x128xbf16>
    %c15 = arith.constant 15 : index
    %c0_166 = arith.constant 0 : index
    %658 = vector.load %arg3[%c15, %c0_166] : memref<22x128xf32, #tpu.memory_space<vmem>>, vector<1x128xf32>
    %659 = arith.truncf %656 : vector<16x128xf32> to vector<16x128xbf16>
    %cst_167 = arith.constant dense<0.000000e+00> : vector<16x128xf32>
    %660 = tpu.matmul %659, %657, %cst_167 {dimension_numbers = #tpu.dot_dimension_numbers<[1], [0], [0], [1], [0, 0, 1, 1], [], []>} : vector<16x128xbf16>, vector<128x128xbf16>, vector<16x128xf32> -> vector<16x128xf32>
    %661 = vector.broadcast %658 : vector<1x128xf32> to vector<16x128xf32>
    %662 = arith.addf %660, %661 : vector<16x128xf32>
    %663 = math.tanh %662 : vector<16x128xf32>
    %664 = arith.addf %632, %663 : vector<16x128xf32>
    %c0_168 = arith.constant 0 : index
    %c2048 = arith.constant 2048 : index
    %665 = vector.load %arg2[%c0_168, %c2048] : memref<128x2304xbf16, #tpu.memory_space<vmem>>, vector<128x128xbf16>
    %c16 = arith.constant 16 : index
    %c0_169 = arith.constant 0 : index
    %666 = vector.load %arg3[%c16, %c0_169] : memref<22x128xf32, #tpu.memory_space<vmem>>, vector<1x128xf32>
    %667 = arith.truncf %664 : vector<16x128xf32> to vector<16x128xbf16>
    %cst_170 = arith.constant dense<0.000000e+00> : vector<16x128xf32>
    %668 = tpu.matmul %667, %665, %cst_170 {dimension_numbers = #tpu.dot_dimension_numbers<[1], [0], [0], [1], [0, 0, 1, 1], [], []>} : vector<16x128xbf16>, vector<128x128xbf16>, vector<16x128xf32> -> vector<16x128xf32>
    %669 = vector.broadcast %666 : vector<1x128xf32> to vector<16x128xf32>
    %670 = arith.addf %668, %669 : vector<16x128xf32>
    %671 = arith.mulf %670, %670 : vector<16x128xf32>
    %672 = arith.mulf %670, %671 : vector<16x128xf32>
    %cst_171 = arith.constant 4.471500e-02 : f32
    %673 = vector.broadcast %cst_171 : f32 to vector<16x128xf32>
    %674 = arith.mulf %673, %672 : vector<16x128xf32>
    %675 = arith.addf %670, %674 : vector<16x128xf32>
    %cst_172 = arith.constant 0.797884583 : f32
    %676 = vector.broadcast %cst_172 : f32 to vector<16x128xf32>
    %677 = arith.mulf %676, %675 : vector<16x128xf32>
    %678 = math.tanh %677 : vector<16x128xf32>
    %cst_173 = arith.constant 1.000000e+00 : f32
    %679 = vector.broadcast %cst_173 : f32 to vector<16x128xf32>
    %680 = arith.addf %679, %678 : vector<16x128xf32>
    %cst_174 = arith.constant 5.000000e-01 : f32
    %681 = vector.broadcast %cst_174 : f32 to vector<16x128xf32>
    %682 = arith.mulf %681, %680 : vector<16x128xf32>
    %683 = arith.mulf %670, %682 : vector<16x128xf32>
    %684 = arith.addf %664, %683 : vector<16x128xf32>
    %685 = vector.shape_cast %684 : vector<16x128xf32> to vector<2x8x128xf32>
    %cst_175 = arith.constant dense<0.000000e+00> : vector<2x128xf32>
    %686 = vector.multi_reduction <add>, %685, %cst_175 [1] : vector<2x8x128xf32> to vector<2x128xf32>
    %cst_176 = arith.constant 8.000000e+00 : f32
    %687 = vector.broadcast %cst_176 : f32 to vector<2x128xf32>
    %688 = arith.divf %686, %687 : vector<2x128xf32>
    %c0_177 = arith.constant 0 : index
    %c2176 = arith.constant 2176 : index
    %689 = vector.load %arg2[%c0_177, %c2176] : memref<128x2304xbf16, #tpu.memory_space<vmem>>, vector<128x128xbf16>
    %c17 = arith.constant 17 : index
    %c0_178 = arith.constant 0 : index
    %690 = vector.load %arg3[%c17, %c0_178] : memref<22x128xf32, #tpu.memory_space<vmem>>, vector<1x128xf32>
    %691 = arith.truncf %688 : vector<2x128xf32> to vector<2x128xbf16>
    %cst_179 = arith.constant dense<0.000000e+00> : vector<2x128xf32>
    %692 = tpu.matmul %691, %689, %cst_179 {dimension_numbers = #tpu.dot_dimension_numbers<[1], [0], [0], [1], [0, 0, 1, 1], [], []>} : vector<2x128xbf16>, vector<128x128xbf16>, vector<2x128xf32> -> vector<2x128xf32>
    %693 = vector.broadcast %690 : vector<1x128xf32> to vector<2x128xf32>
    %694 = arith.addf %692, %693 : vector<2x128xf32>
    %c0_180 = arith.constant 0 : index
    %c0_181 = arith.constant 0 : index
    %695 = vector.load %arg4[%c0_180, %c0_181] : memref<66x128xf32, #tpu.memory_space<vmem>>, vector<16x128xf32>
    tpu.vector_store %arg4[%c0_180, %c0_181], %139 {strides = array<i32>} : memref<66x128xf32, #tpu.memory_space<vmem>>, vector<16x128xf32>,
    %c16_182 = arith.constant 16 : index
    %c0_183 = arith.constant 0 : index
    %696 = vector.load %arg4[%c16_182, %c0_183] : memref<66x128xf32, #tpu.memory_space<vmem>>, vector<16x128xf32>
    tpu.vector_store %arg4[%c16_182, %c0_183], %228 {strides = array<i32>} : memref<66x128xf32, #tpu.memory_space<vmem>>, vector<16x128xf32>,
    %c32 = arith.constant 32 : index
    %c0_184 = arith.constant 0 : index
    %697 = vector.load %arg4[%c32, %c0_184] : memref<66x128xf32, #tpu.memory_space<vmem>>, vector<16x128xf32>
    tpu.vector_store %arg4[%c32, %c0_184], %291 {strides = array<i32>} : memref<66x128xf32, #tpu.memory_space<vmem>>, vector<16x128xf32>,
    %c48 = arith.constant 48 : index
    %c0_185 = arith.constant 0 : index
    %698 = vector.load %arg4[%c48, %c0_185] : memref<66x128xf32, #tpu.memory_space<vmem>>, vector<16x128xf32>
    tpu.vector_store %arg4[%c48, %c0_185], %684 {strides = array<i32>} : memref<66x128xf32, #tpu.memory_space<vmem>>, vector<16x128xf32>,
    %c64 = arith.constant 64 : index
    %c0_186 = arith.constant 0 : index
    %699 = vector.load %arg4[%c64, %c0_186] : memref<66x128xf32, #tpu.memory_space<vmem>>, vector<2x128xf32>
    tpu.vector_store %arg4[%c64, %c0_186], %694 {strides = array<i32>} : memref<66x128xf32, #tpu.memory_space<vmem>>, vector<2x128xf32>,
    %cst_187 = arith.constant 0.000000e+00 : f32
    %700 = vector.broadcast %cst_187 : f32 to vector<49x128xf32>
    %c0_188 = arith.constant 0 : index
    %c0_189 = arith.constant 0 : index
    %701 = vector.load %arg5[%c0_188, %c0_189] : memref<49x128xf32, #tpu.memory_space<vmem>>, vector<49x128xf32>
    tpu.vector_store %arg5[%c0_188, %c0_189], %700 {strides = array<i32>} : memref<49x128xf32, #tpu.memory_space<vmem>>, vector<49x128xf32>,
    %702 = vector.shape_cast %245 : vector<2x8x8xf32> to vector<16x8xf32>
    %c0_190 = arith.constant 0 : index
    %c0_191 = arith.constant 0 : index
    %703 = vector.load %arg5[%c0_190, %c0_191] : memref<49x128xf32, #tpu.memory_space<vmem>>, vector<16x8xf32>
    tpu.vector_store %arg5[%c0_190, %c0_191], %702 {strides = array<i32>} : memref<49x128xf32, #tpu.memory_space<vmem>>, vector<16x8xf32>,
    %704 = vector.shape_cast %573 : vector<2x8x8xf32> to vector<16x8xf32>
    %c16_192 = arith.constant 16 : index
    %c0_193 = arith.constant 0 : index
    %705 = vector.load %arg5[%c16_192, %c0_193] : memref<49x128xf32, #tpu.memory_space<vmem>>, vector<16x8xf32>
    tpu.vector_store %arg5[%c16_192, %c0_193], %704 {strides = array<i32>} : memref<49x128xf32, #tpu.memory_space<vmem>>, vector<16x8xf32>,
    %706 = vector.shape_cast %627 : vector<2x8x1xf32> to vector<16x1xf32>
    %c32_194 = arith.constant 32 : index
    %c0_195 = arith.constant 0 : index
    %707 = vector.load %arg5[%c32_194, %c0_195] : memref<49x128xf32, #tpu.memory_space<vmem>>, vector<16x1xf32>
    tpu.vector_store %arg5[%c32_194, %c0_195], %706 {strides = array<i32>} : memref<49x128xf32, #tpu.memory_space<vmem>>, vector<16x1xf32>,
    %cst_196 = arith.constant 0.000000e+00 : f32
    %708 = vector.broadcast %cst_196 : f32 to vector<1x128xf32>
    %709 = vector.broadcast %599 : vector<1x1xf32> to vector<1x128xf32>
    %710 = arith.addf %708, %709 : vector<1x128xf32>
    %c48_197 = arith.constant 48 : index
    %c0_198 = arith.constant 0 : index
    %711 = vector.load %arg5[%c48_197, %c0_198] : memref<49x128xf32, #tpu.memory_space<vmem>>, vector<1x128xf32>
    tpu.vector_store %arg5[%c48_197, %c0_198], %710 {strides = array<i32>} : memref<49x128xf32, #tpu.memory_space<vmem>>, vector<1x128xf32>,
    return
  }
}

</mosaic_0001>

<llo_original>
// kernel: squeeze.2
$region0: #{squeeze.2}
  %s0 = inlined_call_operand.vmem [shape: f32[16], index: 0, kind: input, shape index: {}]
  %s1 = inlined_call_operand.vmem [shape: f32[2,8], index: 1, kind: output, shape index: {}]
  $region1: #{squeeze.2} parent=0
    #allocation0 [shape = 'u8[4096]{0}', space=vmem, size = 0x1000, scoped, tag = 'scoped mem for output reshape']
    #allocation1 [shape = 'u8[4096]{0}', space=vmem, size = 0x1000, scoped, tag = 'scoped mem for input reshape']
    %s3 = sshll.u32 1, 1
    %s4 = ssub.s32 %s3, 1
    %v5 = vld [vmem:[%s0] sm:%s4]
    %6 = vst [vmem:[#allocation1] sm:%s4] %v5
    %v7 = vld [vmem:[#allocation1] sm:$0x1]
    %vm8 = vcmask 64512
    %9 = vst.msk [vmem:[#allocation0] sm:$0x1] %vm8, %v7
    %v10 = vld [vmem:[#allocation1] sm:$0x1]
    %11 = vrot.lane.b32.xlu0 %v10, 120
    %v12 = vpop.permute.xlu0 %11
    %vm13 = vcmask 64512
    %s14 = scalar_lea.vmem [#allocation0], 1
    %15 = vst.msk [vmem:[%s14] sm:$0x1] %vm13, %v12
    %s17 = sshll.u32 1, 2
    %s18 = ssub.s32 %s17, 1
    %v20 = vld [vmem:[#allocation0] sm:%s18]
    %s21 = sshll.u32 1, 2
    %s22 = ssub.s32 %s21, 1
    %23 = vst [vmem:[%s1] sm:%s22] %v20

// kernel: sden_forward.1
$region0: #{sden_forward.1}
  #allocation0 [shape = 'u32[]', space=smem, size = 0x4, offset = 0x4, fixed_abs, tag = 'smem constant byte address 0x4 - core index']
  #allocation1 [shape = 'u32[144,128]{1,0:T(1,128)}', space=vmem, size = 0x12000, scoped, tag = 'internal scratch']
  %s0 = inlined_call_operand.vmem [shape: bf16[16,128], index: 0, kind: input, shape index: {}]
  %s1 = inlined_call_operand.vmem [shape: bf16[16,128], index: 1, kind: input, shape index: {}]
  %s2 = inlined_call_operand.vmem [shape: bf16[128,2304], index: 2, kind: input, shape index: {}]
  %s3 = inlined_call_operand.vmem [shape: f32[22,128], index: 3, kind: input, shape index: {}]
  %s4 = inlined_call_operand.vmem [shape: f32[66,128], index: 4, kind: output, shape index: {0}]
  %s5 = inlined_call_operand.vmem [shape: f32[49,128], index: 5, kind: output, shape index: {1}]
  %6 = xla_tuple %s4, %s5
  %s7 = sld [smem:[#allocation0]]
  $region34: #{sden_forward.1} parent=0
    _
  %s9 = ssub.s32 1, %s7
  %s10 = scalar_select 0, %s9, %s7
  // Predicated region
  $region2: #{sden_forward.1} parent=0 // pred_check
    _
  $region3: #{sden_forward.1} parent=0 // pred_check_branch
    %12 = sbr.rel (0) target = $region5
  $region4: #{sden_forward.1} parent=0 // pred_region
    _
  $region5: #{sden_forward.1} parent=0 // pred_fallthru
    _
  // Predicated region
  $region6: #{sden_forward.1} parent=0 // pred_check
    _
  $region7: #{sden_forward.1} parent=0 // pred_check_branch
    %14 = sbr.rel (0) target = $region9
  $region8: #{sden_forward.1} parent=0 // pred_region
    _
  $region9: #{sden_forward.1} parent=0 // pred_fallthru
    _
  // Predicated region
  $region10: #{sden_forward.1} parent=0 // pred_check
    _
  $region11: #{sden_forward.1} parent=0 // pred_check_branch
    %16 = sbr.rel (0) target = $region13
  $region12: #{sden_forward.1} parent=0 // pred_region
    _
  $region13: #{sden_forward.1} parent=0 // pred_fallthru
    _
  // Predicated region
  $region14: #{sden_forward.1} parent=0 // pred_check
    _
  $region15: #{sden_forward.1} parent=0 // pred_check_branch
    %18 = sbr.rel (0) target = $region17
  $region16: #{sden_forward.1} parent=0 // pred_region
    _
  $region17: #{sden_forward.1} parent=0 // pred_fallthru
    _
  %v20 = vld [vmem:[%s0] sm:$0xf]
  %v21 = vld [vmem:[%s0 + $0x4] sm:$0xf]
  %v22 = vld [vmem:[%s1] sm:$0xf]
  %v23 = vld [vmem:[%s1 + $0x4] sm:$0xf]
  %v24 = vld [vmem:[%s2] sm:$0xf]
  %v25 = vld [vmem:[%s2 + $0x48] sm:$0xf]
  %v26 = vld [vmem:[%s2 + $0x90] sm:$0xf]
  %v27 = vld [vmem:[%s2 + $0xd8] sm:$0xf]
  %v28 = vld [vmem:[%s2 + $0x120] sm:$0xf]
  %v29 = vld [vmem:[%s2 + $0x168] sm:$0xf]
  %v30 = vld [vmem:[%s2 + $0x1b0] sm:$0xf]
  %v31 = vld [vmem:[%s2 + $0x1f8] sm:$0xf]
  %v32 = vld [vmem:[%s2 + $0x240] sm:$0xf]
  %v33 = vld [vmem:[%s2 + $0x288] sm:$0xf]
  %v34 = vld [vmem:[%s2 + $0x2d0] sm:$0xf]
  %v35 = vld [vmem:[%s2 + $0x318] sm:$0xf]
  %v36 = vld [vmem:[%s2 + $0x360] sm:$0xf]
  %v37 = vld [vmem:[%s2 + $0x3a8] sm:$0xf]
  %v38 = vld [vmem:[%s2 + $0x3f0] sm:$0xf]
  %v39 = vld [vmem:[%s2 + $0x438] sm:$0xf]
  %v40 = vld [vmem:[%s3] sm:$0x1]
  %v41 = vlaneseq
  %v42 = vshrl.u32 %v41, 7
  %v43 = vsub.s32 0, %v42
  %v44 = vrot.slane %v40, %v43
  %v47 = vunpack.c.l.b16 %v20
  %v48 = vunpack.c.l.b16 %v21
  %v49 = vpack.c.b16 %v48, %v47
  %v67 = vunpack.c.l.b16 %v24
  %v68 = vunpack.c.l.b16 %v25
  %v69 = vunpack.c.l.b16 %v26
  %v70 = vunpack.c.l.b16 %v27
  %v71 = vunpack.c.l.b16 %v28
  %v72 = vunpack.c.l.b16 %v29
  %v73 = vunpack.c.l.b16 %v30
  %v74 = vunpack.c.l.b16 %v31
  %v75 = vunpack.c.l.b16 %v32
  %v76 = vunpack.c.l.b16 %v33
  %v77 = vunpack.c.l.b16 %v34
  %v78 = vunpack.c.l.b16 %v35
  %v79 = vunpack.c.l.b16 %v36
  %v80 = vunpack.c.l.b16 %v37
  %v81 = vunpack.c.l.b16 %v38
  %v82 = vunpack.c.l.b16 %v39
  %v83 = vpack.c.b16 %v68, %v67
  %v84 = vpack.c.b16 %v70, %v69
  %v85 = vpack.c.b16 %v72, %v71
  %v86 = vpack.c.b16 %v74, %v73
  %v87 = vpack.c.b16 %v76, %v75
  %v88 = vpack.c.b16 %v78, %v77
  %v89 = vpack.c.b16 %v80, %v79
  %v90 = vpack.c.b16 %v82, %v81
  %99 = vmatprep.subr.bf16.mxu0 0
  %100 = vmatpush1.bf16.msra.mxu0 %v90
  %101 = vmatprep.subr.bf16.mxu0 0
  %102 = vmatpush1.bf16.msra.mxu0 %v89
  %103 = vmatprep.subr.bf16.mxu0 0
  %104 = vmatpush1.bf16.msra.mxu0 %v88
  %105 = vmatprep.subr.bf16.mxu0 0
  %106 = vmatpush1.bf16.msra.mxu0 %v87
  %107 = vmatprep.subr.bf16.mxu0 0
  %108 = vmatpush1.bf16.msra.mxu0 %v86
  %109 = vmatprep.subr.bf16.mxu0 0
  %110 = vmatpush1.bf16.msra.mxu0 %v85
  %111 = vmatprep.subr.bf16.mxu0 0
  %112 = vmatpush1.bf16.msra.mxu0 %v84
  %113 = vmatprep.subr.bf16.mxu0 0
  %114 = vmatpush1.bf16.msra.mxu0 %v83
  %115 = vmatprep.subr.bf16.mxu0 0
  %116 = vmatpush2.bf16.msra.mxu0 0
  %117 = vmatprep.subr.bf16.mxu0 0
  %118 = vmatpush2.bf16.msra.mxu0 0
  %119 = vmatprep.subr.bf16.mxu0 0
  %120 = vmatpush2.bf16.msra.mxu0 0
  %121 = vmatprep.subr.bf16.mxu0 0
  %122 = vmatpush2.bf16.msra.mxu0 0
  %123 = vmatprep.subr.bf16.mxu0 0
  %124 = vmatpush2.bf16.msra.mxu0 0
  %125 = vmatprep.subr.bf16.mxu0 0
  %126 = vmatpush2.bf16.msra.mxu0 0
  %127 = vmatprep.subr.bf16.mxu0 0
  %128 = vmatpush2.bf16.msra.mxu0 0
  %129 = vmatprep.subr.bf16.mxu0 0
  %130 = vmatpush2.bf16.msra.mxu0 0
  %131 = vmatprep.mubr.bf16.mxu0 0
  %132 = vmatmul.mubr.bf16.gmra.mxu0 %v49
  %v133 = vpop.f32.mrf.mxu0
  %v134 = vadd.f32 %v44, %v133
  %v135 = vpop.f32.mrf.mxu0
  %v136 = vpop.f32.mrf.mxu0
  %v137 = vadd.f32 %v44, %v136
  %v138 = vpop.f32.mrf.mxu0
  %139 = vdwg.mxu0
  %v140 = vmul.f32 %v134, %v134
  %v141 = vmul.f32 %v137, %v137
  %v142 = vmul.f32 %v134, %v140
  %v143 = vmul.f32 %v137, %v141
  %v144 = vmul.f32 %v142, 0.044715
  %v145 = vmul.f32 %v143, 0.044715
  %v146 = vadd.f32 %v134, %v144
  %v147 = vadd.f32 %v137, %v145
  %v148 = vmul.f32 %v146, 0.7978846
  %v149 = vmul.f32 %v147, 0.7978846
  %v150 = vtanh.pop %v148
  %v151 = vtanh.pop %v149
  %v152 = vadd.f32 %v150, 1.0
  %v153 = vadd.f32 %v151, 1.0
  %v154 = vmul.f32 %v152, 0.5
  %v155 = vmul.f32 %v153, 0.5
  %v156 = vmul.f32 %v134, %v154
  %v157 = vmul.f32 %v137, %v155
  %v158 = vld [vmem:[%s2 + $0x4] sm:$0xf]
  %v159 = vld [vmem:[%s2 + $0x4c] sm:$0xf]
  %v160 = vld [vmem:[%s2 + $0x94] sm:$0xf]
  %v161 = vld [vmem:[%s2 + $0xdc] sm:$0xf]
  %v162 = vld [vmem:[%s2 + $0x124] sm:$0xf]
  %v163 = vld [vmem:[%s2 + $0x16c] sm:$0xf]
  %v164 = vld [vmem:[%s2 + $0x1b4] sm:$0xf]
  %v165 = vld [vmem:[%s2 + $0x1fc] sm:$0xf]
  %v166 = vld [vmem:[%s2 + $0x244] sm:$0xf]
  %v167 = vld [vmem:[%s2 + $0x28c] sm:$0xf]
  %v168 = vld [vmem:[%s2 + $0x2d4] sm:$0xf]
  %v169 = vld [vmem:[%s2 + $0x31c] sm:$0xf]
  %v170 = vld [vmem:[%s2 + $0x364] sm:$0xf]
  %v171 = vld [vmem:[%s2 + $0x3ac] sm:$0xf]
  %v172 = vld [vmem:[%s2 + $0x3f4] sm:$0xf]
  %v173 = vld [vmem:[%s2 + $0x43c] sm:$0xf]
  %v174 = vld [vmem:[%s3 + $0x1] sm:$0x1]
  %v175 = vpack.c.bf16 %v157, %v156
  %v176 = vlaneseq
  %v177 = vshrl.u32 %v176, 7
  %v178 = vsub.s32 0, %v177
  %v179 = vrot.slane %v174, %v178
  %v196 = vunpack.c.l.b16 %v158
  %v197 = vunpack.c.l.b16 %v159
  %v198 = vunpack.c.l.b16 %v160
  %v199 = vunpack.c.l.b16 %v161
  %v200 = vunpack.c.l.b16 %v162
  %v201 = vunpack.c.l.b16 %v163
  %v202 = vunpack.c.l.b16 %v164
  %v203 = vunpack.c.l.b16 %v165
  %v204 = vunpack.c.l.b16 %v166
  %v205 = vunpack.c.l.b16 %v167
  %v206 = vunpack.c.l.b16 %v168
  %v207 = vunpack.c.l.b16 %v169
  %v208 = vunpack.c.l.b16 %v170
  %v209 = vunpack.c.l.b16 %v171
  %v210 = vunpack.c.l.b16 %v172
  %v211 = vunpack.c.l.b16 %v173
  %v212 = vpack.c.b16 %v197, %v196
  %v213 = vpack.c.b16 %v199, %v198
  %v214 = vpack.c.b16 %v201, %v200
  %v215 = vpack.c.b16 %v203, %v202
  %v216 = vpack.c.b16 %v205, %v204
  %v217 = vpack.c.b16 %v207, %v206
  %v218 = vpack.c.b16 %v209, %v208
  %v219 = vpack.c.b16 %v211, %v210
  %228 = vmatprep.subr.bf16.mxu0 0
  %229 = vmatpush1.bf16.msra.mxu0 %v219
  %230 = vmatprep.subr.bf16.mxu0 0
  %231 = vmatpush1.bf16.msra.mxu0 %v218
  %232 = vmatprep.subr.bf16.mxu0 0
  %233 = vmatpush1.bf16.msra.mxu0 %v217
  %234 = vmatprep.subr.bf16.mxu0 0
  %235 = vmatpush1.bf16.msra.mxu0 %v216
  %236 = vmatprep.subr.bf16.mxu0 0
  %237 = vmatpush1.bf16.msra.mxu0 %v215
  %238 = vmatprep.subr.bf16.mxu0 0
  %239 = vmatpush1.bf16.msra.mxu0 %v214
  %240 = vmatprep.subr.bf16.mxu0 0
  %241 = vmatpush1.bf16.msra.mxu0 %v213
  %242 = vmatprep.subr.bf16.mxu0 0
  %243 = vmatpush1.bf16.msra.mxu0 %v212
  %244 = vmatprep.subr.bf16.mxu0 0
  %245 = vmatpush2.bf16.msra.mxu0 0
  %246 = vmatprep.subr.bf16.mxu0 0
  %247 = vmatpush2.bf16.msra.mxu0 0
  %248 = vmatprep.subr.bf16.mxu0 0
  %249 = vmatpush2.bf16.msra.mxu0 0
  %250 = vmatprep.subr.bf16.mxu0 0
  %251 = vmatpush2.bf16.msra.mxu0 0
  %252 = vmatprep.subr.bf16.mxu0 0
  %253 = vmatpush2.bf16.msra.mxu0 0
  %254 = vmatprep.subr.bf16.mxu0 0
  %255 = vmatpush2.bf16.msra.mxu0 0
  %256 = vmatprep.subr.bf16.mxu0 0
  %257 = vmatpush2.bf16.msra.mxu0 0
  %258 = vmatprep.subr.bf16.mxu0 0
  %259 = vmatpush2.bf16.msra.mxu0 0
  %260 = vmatprep.mubr.bf16.mxu0 0
  %261 = vmatmul.mubr.bf16.gmra.mxu0 %v175
  %v262 = vpop.f32.mrf.mxu0
  %v263 = vadd.f32 %v179, %v262
  %v264 = vpop.f32.mrf.mxu0
  %v265 = vpop.f32.mrf.mxu0
  %v266 = vadd.f32 %v179, %v265
  %v267 = vpop.f32.mrf.mxu0
  %268 = vdwg.mxu0
  %v269 = vld [vmem:[%s2 + $0x8] sm:$0xf]
  %v270 = vld [vmem:[%s2 + $0x50] sm:$0xf]
  %v271 = vld [vmem:[%s2 + $0x98] sm:$0xf]
  %v272 = vld [vmem:[%s2 + $0xe0] sm:$0xf]
  %v273 = vld [vmem:[%s2 + $0x128] sm:$0xf]
  %v274 = vld [vmem:[%s2 + $0x170] sm:$0xf]
  %v275 = vld [vmem:[%s2 + $0x1b8] sm:$0xf]
  %v276 = vld [vmem:[%s2 + $0x200] sm:$0xf]
  %v277 = vld [vmem:[%s2 + $0x248] sm:$0xf]
  %v278 = vld [vmem:[%s2 + $0x290] sm:$0xf]
  %v279 = vld [vmem:[%s2 + $0x2d8] sm:$0xf]
  %v280 = vld [vmem:[%s2 + $0x320] sm:$0xf]
  %v281 = vld [vmem:[%s2 + $0x368] sm:$0xf]
  %v282 = vld [vmem:[%s2 + $0x3b0] sm:$0xf]
  %v283 = vld [vmem:[%s2 + $0x3f8] sm:$0xf]
  %v284 = vld [vmem:[%s2 + $0x440] sm:$0xf]
  %v285 = vld [vmem:[%s3 + $0x2] sm:$0x1]
  %v286 = vlaneseq
  %v287 = vshrl.u32 %v286, 7
  %v288 = vsub.s32 0, %v287
  %v289 = vrot.slane %v285, %v288
  %v292 = vunpack.c.l.b16 %v22
  %v293 = vunpack.c.l.b16 %v23
  %v294 = vpack.c.b16 %v293, %v292
  %v312 = vunpack.c.l.b16 %v269
  %v313 = vunpack.c.l.b16 %v270
  %v314 = vunpack.c.l.b16 %v271
  %v315 = vunpack.c.l.b16 %v272
  %v316 = vunpack.c.l.b16 %v273
  %v317 = vunpack.c.l.b16 %v274
  %v318 = vunpack.c.l.b16 %v275
  %v319 = vunpack.c.l.b16 %v276
  %v320 = vunpack.c.l.b16 %v277
  %v321 = vunpack.c.l.b16 %v278
  %v322 = vunpack.c.l.b16 %v279
  %v323 = vunpack.c.l.b16 %v280
  %v324 = vunpack.c.l.b16 %v281
  %v325 = vunpack.c.l.b16 %v282
  %v326 = vunpack.c.l.b16 %v283
  %v327 = vunpack.c.l.b16 %v284
  %v328 = vpack.c.b16 %v313, %v312
  %v329 = vpack.c.b16 %v315, %v314
  %v330 = vpack.c.b16 %v317, %v316
  %v331 = vpack.c.b16 %v319, %v318
  %v332 = vpack.c.b16 %v321, %v320
  %v333 = vpack.c.b16 %v323, %v322
  %v334 = vpack.c.b16 %v325, %v324
  %v335 = vpack.c.b16 %v327, %v326
  %344 = vmatprep.subr.bf16.mxu0 0
  %345 = vmatpush1.bf16.msra.mxu0 %v335
  %346 = vmatprep.subr.bf16.mxu0 0
  %347 = vmatpush1.bf16.msra.mxu0 %v334
  %348 = vmatprep.subr.bf16.mxu0 0
  %349 = vmatpush1.bf16.msra.mxu0 %v333
  %350 = vmatprep.subr.bf16.mxu0 0
  %351 = vmatpush1.bf16.msra.mxu0 %v332
  %352 = vmatprep.subr.bf16.mxu0 0
  %353 = vmatpush1.bf16.msra.mxu0 %v331
  %354 = vmatprep.subr.bf16.mxu0 0
  %355 = vmatpush1.bf16.msra.mxu0 %v330
  %356 = vmatprep.subr.bf16.mxu0 0
  %357 = vmatpush1.bf16.msra.mxu0 %v329
  %358 = vmatprep.subr.bf16.mxu0 0
  %359 = vmatpush1.bf16.msra.mxu0 %v328
  %360 = vmatprep.subr.bf16.mxu0 0
  %361 = vmatpush2.bf16.msra.mxu0 0
  %362 = vmatprep.subr.bf16.mxu0 0
  %363 = vmatpush2.bf16.msra.mxu0 0
  %364 = vmatprep.subr.bf16.mxu0 0
  %365 = vmatpush2.bf16.msra.mxu0 0
  %366 = vmatprep.subr.bf16.mxu0 0
  %367 = vmatpush2.bf16.msra.mxu0 0
  %368 = vmatprep.subr.bf16.mxu0 0
  %369 = vmatpush2.bf16.msra.mxu0 0
  %370 = vmatprep.subr.bf16.mxu0 0
  %371 = vmatpush2.bf16.msra.mxu0 0
  %372 = vmatprep.subr.bf16.mxu0 0
  %373 = vmatpush2.bf16.msra.mxu0 0
  %374 = vmatprep.subr.bf16.mxu0 0
  %375 = vmatpush2.bf16.msra.mxu0 0
  %376 = vmatprep.mubr.bf16.mxu0 0
  %377 = vmatmul.mubr.bf16.gmra.mxu0 %v294
  %v378 = vpop.f32.mrf.mxu0
  %v379 = vadd.f32 %v289, %v378
  %v380 = vpop.f32.mrf.mxu0
  %v381 = vpop.f32.mrf.mxu0
  %v382 = vadd.f32 %v289, %v381
  %v383 = vpop.f32.mrf.mxu0
  %384 = vdwg.mxu0
  %v385 = vmul.f32 %v379, %v379
  %v386 = vmul.f32 %v382, %v382
  %v387 = vmul.f32 %v379, %v385
  %v388 = vmul.f32 %v382, %v386
  %v389 = vmul.f32 %v387, 0.044715
  %v390 = vmul.f32 %v388, 0.044715
  %v391 = vadd.f32 %v379, %v389
  %v392 = vadd.f32 %v382, %v390
  %v393 = vmul.f32 %v391, 0.7978846
  %v394 = vmul.f32 %v392, 0.7978846
  %v395 = vtanh.pop %v393
  %v396 = vtanh.pop %v394
  %v397 = vadd.f32 %v395, 1.0
  %v398 = vadd.f32 %v396, 1.0
  %v399 = vmul.f32 %v397, 0.5
  %v400 = vmul.f32 %v398, 0.5
  %v401 = vmul.f32 %v379, %v399
  %v402 = vmul.f32 %v382, %v400
  %v403 = vld [vmem:[%s2 + $0xc] sm:$0xf]
  %v404 = vld [vmem:[%s2 + $0x54] sm:$0xf]
  %v405 = vld [vmem:[%s2 + $0x9c] sm:$0xf]
  %v406 = vld [vmem:[%s2 + $0xe4] sm:$0xf]
  %v407 = vld [vmem:[%s2 + $0x12c] sm:$0xf]
  %v408 = vld [vmem:[%s2 + $0x174] sm:$0xf]
  %v409 = vld [vmem:[%s2 + $0x1bc] sm:$0xf]
  %v410 = vld [vmem:[%s2 + $0x204] sm:$0xf]
  %v411 = vld [vmem:[%s2 + $0x24c] sm:$0xf]
  %v412 = vld [vmem:[%s2 + $0x294] sm:$0xf]
  %v413 = vld [vmem:[%s2 + $0x2dc] sm:$0xf]
  %v414 = vld [vmem:[%s2 + $0x324] sm:$0xf]
  %v415 = vld [vmem:[%s2 + $0x36c] sm:$0xf]
  %v416 = vld [vmem:[%s2 + $0x3b4] sm:$0xf]
  %v417 = vld [vmem:[%s2 + $0x3fc] sm:$0xf]
  %v418 = vld [vmem:[%s2 + $0x444] sm:$0xf]
  %v419 = vld [vmem:[%s3 + $0x3] sm:$0x1]
  %v420 = vpack.c.bf16 %v402, %v401
  %v421 = vlaneseq
  %v422 = vshrl.u32 %v421, 7
  %v423 = vsub.s32 0, %v422
  %v424 = vrot.slane %v419, %v423
  %v441 = vunpack.c.l.b16 %v403
  %v442 = vunpack.c.l.b16 %v404
  %v443 = vunpack.c.l.b16 %v405
  %v444 = vunpack.c.l.b16 %v406
  %v445 = vunpack.c.l.b16 %v407
  %v446 = vunpack.c.l.b16 %v408
  %v447 = vunpack.c.l.b16 %v409
  %v448 = vunpack.c.l.b16 %v410
  %v449 = vunpack.c.l.b16 %v411
  %v450 = vunpack.c.l.b16 %v412
  %v451 = vunpack.c.l.b16 %v413
  %v452 = vunpack.c.l.b16 %v414
  %v453 = vunpack.c.l.b16 %v415
  %v454 = vunpack.c.l.b16 %v416
  %v455 = vunpack.c.l.b16 %v417
  %v456 = vunpack.c.l.b16 %v418
  %v457 = vpack.c.b16 %v442, %v441
  %v458 = vpack.c.b16 %v444, %v443
  %v459 = vpack.c.b16 %v446, %v445
  %v460 = vpack.c.b16 %v448, %v447
  %v461 = vpack.c.b16 %v450, %v449
  %v462 = vpack.c.b16 %v452, %v451
  %v463 = vpack.c.b16 %v454, %v453
  %v464 = vpack.c.b16 %v456, %v455
  %473 = vmatprep.subr.bf16.mxu0 0
  %474 = vmatpush1.bf16.msra.mxu0 %v464
  %475 = vmatprep.subr.bf16.mxu0 0
  %476 = vmatpush1.bf16.msra.mxu0 %v463
  %477 = vmatprep.subr.bf16.mxu0 0
  %478 = vmatpush1.bf16.msra.mxu0 %v462
  %479 = vmatprep.subr.bf16.mxu0 0
  %480 = vmatpush1.bf16.msra.mxu0 %v461
  %481 = vmatprep.subr.bf16.mxu0 0
  %482 = vmatpush1.bf16.msra.mxu0 %v460
  %483 = vmatprep.subr.bf16.mxu0 0
  %484 = vmatpush1.bf16.msra.mxu0 %v459
  %485 = vmatprep.subr.bf16.mxu0 0
  %486 = vmatpush1.bf16.msra.mxu0 %v458
  %487 = vmatprep.subr.bf16.mxu0 0
  %488 = vmatpush1.bf16.msra.mxu0 %v457
  %489 = vmatprep.subr.bf16.mxu0 0
  %490 = vmatpush2.bf16.msra.mxu0 0
  %491 = vmatprep.subr.bf16.mxu0 0
  %492 = vmatpush2.bf16.msra.mxu0 0
  %493 = vmatprep.subr.bf16.mxu0 0
  %494 = vmatpush2.bf16.msra.mxu0 0
  %495 = vmatprep.subr.bf16.mxu0 0
  %496 = vmatpush2.bf16.msra.mxu0 0
  %497 = vmatprep.subr.bf16.mxu0 0
  %498 = vmatpush2.bf16.msra.mxu0 0
  %499 = vmatprep.subr.bf16.mxu0 0
  %500 = vmatpush2.bf16.msra.mxu0 0
  %501 = vmatprep.subr.bf16.mxu0 0
  %502 = vmatpush2.bf16.msra.mxu0 0
  %503 = vmatprep.subr.bf16.mxu0 0
  %504 = vmatpush2.bf16.msra.mxu0 0
  %505 = vmatprep.mubr.bf16.mxu0 0
  %506 = vmatmul.mubr.bf16.gmra.mxu0 %v420
  %v507 = vpop.f32.mrf.mxu0
  %v508 = vadd.f32 %v424, %v507
  %v509 = vpop.f32.mrf.mxu0
  %v510 = vpop.f32.mrf.mxu0
  %v511 = vadd.f32 %v424, %v510
  %v512 = vpop.f32.mrf.mxu0
  %513 = vdwg.mxu0
  %v514 = vld [vmem:[%s2 + $0x10] sm:$0xff]
  %v515 = vld [vmem:[%s2 + $0x18] sm:$0xf]
  %v516 = vld [vmem:[%s2 + $0x58] sm:$0xff]
  %v517 = vld [vmem:[%s2 + $0x60] sm:$0xf]
  %v518 = vld [vmem:[%s2 + $0xa0] sm:$0xff]
  %v519 = vld [vmem:[%s2 + $0xa8] sm:$0xf]
  %v520 = vld [vmem:[%s2 + $0xe8] sm:$0xff]
  %v521 = vld [vmem:[%s2 + $0xf0] sm:$0xf]
  %v522 = vld [vmem:[%s2 + $0x130] sm:$0xff]
  %v523 = vld [vmem:[%s2 + $0x138] sm:$0xf]
  %v524 = vld [vmem:[%s2 + $0x178] sm:$0xff]
  %v525 = vld [vmem:[%s2 + $0x180] sm:$0xf]
  %v526 = vld [vmem:[%s2 + $0x1c0] sm:$0xff]
  %v527 = vld [vmem:[%s2 + $0x1c8] sm:$0xf]
  %v528 = vld [vmem:[%s2 + $0x208] sm:$0xff]
  %v529 = vld [vmem:[%s2 + $0x210] sm:$0xf]
  %v530 = vld [vmem:[%s2 + $0x250] sm:$0xff]
  %v531 = vld [vmem:[%s2 + $0x258] sm:$0xf]
  %v532 = vld [vmem:[%s2 + $0x298] sm:$0xff]
  %v533 = vld [vmem:[%s2 + $0x2a0] sm:$0xf]
  %v534 = vld [vmem:[%s2 + $0x2e0] sm:$0xff]
  %v535 = vld [vmem:[%s2 + $0x2e8] sm:$0xf]
  %v536 = vld [vmem:[%s2 + $0x328] sm:$0xff]
  %v537 = vld [vmem:[%s2 + $0x330] sm:$0xf]
  %v538 = vld [vmem:[%s2 + $0x370] sm:$0xff]
  %v539 = vld [vmem:[%s2 + $0x378] sm:$0xf]
  %v540 = vld [vmem:[%s2 + $0x3b8] sm:$0xff]
  %v541 = vld [vmem:[%s2 + $0x3c0] sm:$0xf]
  %v542 = vld [vmem:[%s2 + $0x400] sm:$0xff]
  %v543 = vld [vmem:[%s2 + $0x408] sm:$0xf]
  %v544 = vld [vmem:[%s2 + $0x448] sm:$0xff]
  %v545 = vld [vmem:[%s2 + $0x450] sm:$0xf]
  %v546 = vpack.c.bf16 %v266, %v263
  %v579 = vunpack.c.l.b16 %v514
  %v580 = vunpack.c.h.b16 %v514
  %v581 = vunpack.c.l.b16 %v515
  %v582 = vunpack.c.l.b16 %v516
  %v583 = vunpack.c.h.b16 %v516
  %v584 = vunpack.c.l.b16 %v517
  %v585 = vunpack.c.l.b16 %v518
  %v586 = vunpack.c.h.b16 %v518
  %v587 = vunpack.c.l.b16 %v519
  %v588 = vunpack.c.l.b16 %v520
  %v589 = vunpack.c.h.b16 %v520
  %v590 = vunpack.c.l.b16 %v521
  %v591 = vunpack.c.l.b16 %v522
  %v592 = vunpack.c.h.b16 %v522
  %v593 = vunpack.c.l.b16 %v523
  %v594 = vunpack.c.l.b16 %v524
  %v595 = vunpack.c.h.b16 %v524
  %v596 = vunpack.c.l.b16 %v525
  %v597 = vunpack.c.l.b16 %v526
  %v598 = vunpack.c.h.b16 %v526
  %v599 = vunpack.c.l.b16 %v527
  %v600 = vunpack.c.l.b16 %v528
  %v601 = vunpack.c.h.b16 %v528
  %v602 = vunpack.c.l.b16 %v529
  %v603 = vunpack.c.l.b16 %v530
  %v604 = vunpack.c.h.b16 %v530
  %v605 = vunpack.c.l.b16 %v531
  %v606 = vunpack.c.l.b16 %v532
  %v607 = vunpack.c.h.b16 %v532
  %v608 = vunpack.c.l.b16 %v533
  %v609 = vunpack.c.l.b16 %v534
  %v610 = vunpack.c.h.b16 %v534
  %v611 = vunpack.c.l.b16 %v535
  %v612 = vunpack.c.l.b16 %v536
  %v613 = vunpack.c.h.b16 %v536
  %v614 = vunpack.c.l.b16 %v537
  %v615 = vunpack.c.l.b16 %v538
  %v616 = vunpack.c.h.b16 %v538
  %v617 = vunpack.c.l.b16 %v539
  %v618 = vunpack.c.l.b16 %v540
  %v619 = vunpack.c.h.b16 %v540
  %v620 = vunpack.c.l.b16 %v541
  %v621 = vunpack.c.l.b16 %v542
  %v622 = vunpack.c.h.b16 %v542
  %v623 = vunpack.c.l.b16 %v543
  %v624 = vunpack.c.l.b16 %v544
  %v625 = vunpack.c.h.b16 %v544
  %v626 = vunpack.c.l.b16 %v545
  %v627 = vpack.c.b16 %v582, %v579
  %v628 = vpack.c.b16 %v583, %v580
  %v629 = vpack.c.b16 %v584, %v581
  %v630 = vpack.c.b16 %v588, %v585
  %v631 = vpack.c.b16 %v589, %v586
  %v632 = vpack.c.b16 %v590, %v587
  %v633 = vpack.c.b16 %v594, %v591
  %v634 = vpack.c.b16 %v595, %v592
  %v635 = vpack.c.b16 %v596, %v593
  %v636 = vpack.c.b16 %v600, %v597
  %v637 = vpack.c.b16 %v601, %v598
  %v638 = vpack.c.b16 %v602, %v599
  %v639 = vpack.c.b16 %v606, %v603
  %v640 = vpack.c.b16 %v607, %v604
  %v641 = vpack.c.b16 %v608, %v605
  %v642 = vpack.c.b16 %v612, %v609
  %v643 = vpack.c.b16 %v613, %v610
  %v644 = vpack.c.b16 %v614, %v611
  %v645 = vpack.c.b16 %v618, %v615
  %v646 = vpack.c.b16 %v619, %v616
  %v647 = vpack.c.b16 %v620, %v617
  %v648 = vpack.c.b16 %v624, %v621
  %v649 = vpack.c.b16 %v625, %v622
  %v650 = vpack.c.b16 %v626, %v623
  %675 = vmatprep.subr.bf16.mxu0 %v649
  %676 = vmatpush1.bf16.msra.mxu0 %v648
  %677 = vmatprep.subr.bf16.mxu0 %v646
  %678 = vmatpush1.bf16.msra.mxu0 %v645
  %679 = vmatprep.subr.bf16.mxu0 %v643
  %680 = vmatpush1.bf16.msra.mxu0 %v642
  %681 = vmatprep.subr.bf16.mxu0 %v640
  %682 = vmatpush1.bf16.msra.mxu0 %v639
  %683 = vmatprep.subr.bf16.mxu0 %v637
  %684 = vmatpush1.bf16.msra.mxu0 %v636
  %685 = vmatprep.subr.bf16.mxu0 %v634
  %686 = vmatpush1.bf16.msra.mxu0 %v633
  %687 = vmatprep.subr.bf16.mxu0 %v631
  %688 = vmatpush1.bf16.msra.mxu0 %v630
  %689 = vmatprep.subr.bf16.mxu0 %v628
  %690 = vmatpush1.bf16.msra.mxu0 %v627
  %691 = vmatprep.subr.bf16.mxu0 0
  %692 = vmatpush2.bf16.msra.mxu0 0
  %693 = vmatprep.subr.bf16.mxu0 0
  %694 = vmatpush2.bf16.msra.mxu0 0
  %695 = vmatprep.subr.bf16.mxu0 0
  %696 = vmatpush2.bf16.msra.mxu0 0
  %697 = vmatprep.subr.bf16.mxu0 0
  %698 = vmatpush2.bf16.msra.mxu0 0
  %699 = vmatprep.subr.bf16.mxu0 0
  %700 = vmatpush2.bf16.msra.mxu0 0
  %701 = vmatprep.subr.bf16.mxu0 0
  %702 = vmatpush2.bf16.msra.mxu0 0
  %703 = vmatprep.subr.bf16.mxu0 0
  %704 = vmatpush2.bf16.msra.mxu0 0
  %705 = vmatprep.subr.bf16.mxu0 0
  %706 = vmatpush2.bf16.msra.mxu0 0
  %707 = vmatprep.mubr.bf16.mxu0 0
  %708 = vmatmul.mubr.bf16.gmra.mxu0 %v546
  %v709 = vpop.f32.mrf.mxu0
  %v710 = vadd.f32 0.0, %v709
  %v711 = vpop.f32.mrf.mxu0
  %v712 = vadd.f32 0.0, %v711
  %v713 = vpop.f32.mrf.mxu0
  %v714 = vadd.f32 0.0, %v713
  %v715 = vpop.f32.mrf.mxu0
  %v716 = vadd.f32 0.0, %v715
  %717 = vdwg.mxu0
  %718 = vmatprep.subr.bf16.mxu0 0
  %719 = vmatpush1.bf16.msra.mxu0 %v650
  %720 = vmatprep.subr.bf16.mxu0 0
  %721 = vmatpush1.bf16.msra.mxu0 %v647
  %722 = vmatprep.subr.bf16.mxu0 0
  %723 = vmatpush1.bf16.msra.mxu0 %v644
  %724 = vmatprep.subr.bf16.mxu0 0
  %725 = vmatpush1.bf16.msra.mxu0 %v641
  %726 = vmatprep.subr.bf16.mxu0 0
  %727 = vmatpush1.bf16.msra.mxu0 %v638
  %728 = vmatprep.subr.bf16.mxu0 0
  %729 = vmatpush1.bf16.msra.mxu0 %v635
  %730 = vmatprep.subr.bf16.mxu0 0
  %731 = vmatpush1.bf16.msra.mxu0 %v632
  %732 = vmatprep.subr.bf16.mxu0 0
  %733 = vmatpush1.bf16.msra.mxu0 %v629
  %734 = vmatprep.subr.bf16.mxu0 0
  %735 = vmatpush2.bf16.msra.mxu0 0
  %736 = vmatprep.subr.bf16.mxu0 0
  %737 = vmatpush2.bf16.msra.mxu0 0
  %738 = vmatprep.subr.bf16.mxu0 0
  %739 = vmatpush2.bf16.msra.mxu0 0
  %740 = vmatprep.subr.bf16.mxu0 0
  %741 = vmatpush2.bf16.msra.mxu0 0
  %742 = vmatprep.subr.bf16.mxu0 0
  %743 = vmatpush2.bf16.msra.mxu0 0
  %744 = vmatprep.subr.bf16.mxu0 0
  %745 = vmatpush2.bf16.msra.mxu0 0
  %746 = vmatprep.subr.bf16.mxu0 0
  %747 = vmatpush2.bf16.msra.mxu0 0
  %748 = vmatprep.subr.bf16.mxu0 0
  %749 = vmatpush2.bf16.msra.mxu0 0
  %750 = vmatprep.mubr.bf16.mxu0 0
  %751 = vmatmul.mubr.bf16.gmra.mxu0 %v546
  %v752 = vpop.f32.mrf.mxu0
  %v753 = vadd.f32 0.0, %v752
  %v754 = vpop.f32.mrf.mxu0
  %v755 = vpop.f32.mrf.mxu0
  %v756 = vadd.f32 0.0, %v755
  %v757 = vpop.f32.mrf.mxu0
  %758 = vdwg.mxu0
  %v759 = vld [vmem:[%s3 + $0x4] sm:$0x1]
  %v760 = vlaneseq
  %v761 = vshrl.u32 %v760, 7
  %v762 = vsub.s32 0, %v761
  %v763 = vrot.slane %v759, %v762
  %v764 = vadd.f32 %v710, %v763
  %v765 = vadd.f32 %v714, %v763
  %v766 = vtanh.pop %v764
  %v767 = vtanh.pop %v765
  %768 = vmax.xlane.f32.xlu0 %v766
  %v769 = vpop.xlane.xlu0 %768
  %770 = vmax.xlane.f32.xlu0 %v767
  %v771 = vpop.xlane.xlu0 %770
  %v772 = vsub.f32 %v766, %v769
  %v773 = vsub.f32 %v767, %v771
  %v774 = vmul.f32 %v772, 1.442695
  %v775 = vpow.pop %v774
  %v776 = vmul.f32 %v773, 1.442695
  %v777 = vpow.pop %v776
  %778 = vadd.xlane.f32.xlu0 %v775
  %v779 = vpop.xlane.xlu0 %778
  %780 = vadd.xlane.f32.xlu0 %v777
  %v781 = vpop.xlane.xlu0 %780
  %v782 = vrcp.pop %v779
  %v783 = vrcp.pop %v781
  %v784 = vlog2.pop %v779
  %v785 = vmul.f32 %v784, 0.6931472
  %v786 = vlog2.pop %v781
  %v787 = vmul.f32 %v786, 0.6931472
  %v788 = vadd.f32 %v769, %v785
  %v789 = vadd.f32 %v771, %v787
  %v790 = vmul.f32 %v775, %v766
  %v791 = vmul.f32 %v777, %v767
  %792 = vadd.xlane.f32.xlu0 %v790
  %v793 = vpop.xlane.xlu0 %792
  %794 = vadd.xlane.f32.xlu0 %v791
  %v795 = vpop.xlane.xlu0 %794
  %v796 = vmul.f32 %v782, %v793
  %v797 = vmul.f32 %v783, %v795
  %v798 = vsub.f32 %v788, %v796
  %v799 = vsub.f32 %v789, %v797
  %v800 = vsub.f32 0.0, %v798
  %v801 = vsub.f32 0.0, %v799
  %v802 = vld [vmem:[%s3 + $0x5] sm:$0x1]
  %v803 = vlaneseq
  %v804 = vshrl.u32 %v803, 7
  %v805 = vsub.s32 0, %v804
  %v806 = vrot.slane %v802, %v805
  %v807 = vadd.f32 %v712, %v806
  %v808 = vadd.f32 %v716, %v806
  %v809 = vtanh.pop %v807
  %v810 = vtanh.pop %v808
  %811 = vmax.xlane.f32.xlu0 %v809
  %v812 = vpop.xlane.xlu0 %811
  %813 = vmax.xlane.f32.xlu0 %v810
  %v814 = vpop.xlane.xlu0 %813
  %v815 = vsub.f32 %v809, %v812
  %v816 = vsub.f32 %v810, %v814
  %v817 = vmul.f32 %v815, 1.442695
  %v818 = vpow.pop %v817
  %v819 = vmul.f32 %v816, 1.442695
  %v820 = vpow.pop %v819
  %821 = vadd.xlane.f32.xlu0 %v818
  %v822 = vpop.xlane.xlu0 %821
  %823 = vadd.xlane.f32.xlu0 %v820
  %v824 = vpop.xlane.xlu0 %823
  %v825 = vrcp.pop %v822
  %v826 = vrcp.pop %v824
  %v827 = vlog2.pop %v822
  %v828 = vmul.f32 %v827, 0.6931472
  %v829 = vlog2.pop %v824
  %v830 = vmul.f32 %v829, 0.6931472
  %v831 = vadd.f32 %v812, %v828
  %v832 = vadd.f32 %v814, %v830
  %v833 = vmul.f32 %v818, %v809
  %v834 = vmul.f32 %v820, %v810
  %835 = vadd.xlane.f32.xlu0 %v833
  %v836 = vpop.xlane.xlu0 %835
  %837 = vadd.xlane.f32.xlu0 %v834
  %v838 = vpop.xlane.xlu0 %837
  %v839 = vmul.f32 %v825, %v836
  %v840 = vmul.f32 %v826, %v838
  %v841 = vsub.f32 %v831, %v839
  %v842 = vsub.f32 %v832, %v840
  %v843 = vsub.f32 0.0, %v841
  %v844 = vsub.f32 0.0, %v842
  %v845 = vld [vmem:[%s3 + $0x6] sm:$0x1]
  %v846 = vlaneseq
  %v847 = vshrl.u32 %v846, 7
  %v848 = vsub.s32 0, %v847
  %v849 = vrot.slane %v845, %v848
  %v850 = vadd.f32 %v753, %v849
  %v851 = vadd.f32 %v756, %v849
  %v852 = vtanh.pop %v850
  %v853 = vtanh.pop %v851
  %854 = vmax.xlane.f32.xlu0 %v852
  %v855 = vpop.xlane.xlu0 %854
  %856 = vmax.xlane.f32.xlu0 %v853
  %v857 = vpop.xlane.xlu0 %856
  %v858 = vsub.f32 %v852, %v855
  %v859 = vsub.f32 %v853, %v857
  %v860 = vmul.f32 %v858, 1.442695
  %v861 = vpow.pop %v860
  %v862 = vmul.f32 %v859, 1.442695
  %v863 = vpow.pop %v862
  %864 = vadd.xlane.f32.xlu0 %v861
  %v865 = vpop.xlane.xlu0 %864
  %866 = vadd.xlane.f32.xlu0 %v863
  %v867 = vpop.xlane.xlu0 %866
  %v868 = vrcp.pop %v865
  %v869 = vrcp.pop %v867
  %v870 = vlog2.pop %v865
  %v871 = vmul.f32 %v870, 0.6931472
  %v872 = vlog2.pop %v867
  %v873 = vmul.f32 %v872, 0.6931472
  %v874 = vadd.f32 %v855, %v871
  %v875 = vadd.f32 %v857, %v873
  %v876 = vmul.f32 %v861, %v852
  %v877 = vmul.f32 %v863, %v853
  %878 = vadd.xlane.f32.xlu0 %v876
  %v879 = vpop.xlane.xlu0 %878
  %880 = vadd.xlane.f32.xlu0 %v877
  %v881 = vpop.xlane.xlu0 %880
  %v882 = vmul.f32 %v868, %v879
  %v883 = vmul.f32 %v869, %v881
  %v884 = vsub.f32 %v874, %v882
  %v885 = vsub.f32 %v875, %v883
  %v886 = vsub.f32 0.0, %v884
  %v887 = vsub.f32 0.0, %v885
  %v888 = vmax.f32 %v800, %v843
  %v889 = vmax.f32 %v801, %v844
  %v890 = vmax.f32 %v888, %v886
  %v891 = vmax.f32 %v889, %v887
  %v892 = vsub.f32 %v800, %v890
  %v893 = vsub.f32 %v801, %v891
  %v894 = vmul.f32 %v892, 1.442695
  %v895 = vpow.pop %v894
  %v896 = vmul.f32 %v893, 1.442695
  %v897 = vpow.pop %v896
  %v898 = vsub.f32 %v843, %v890
  %v899 = vsub.f32 %v844, %v891
  %v900 = vmul.f32 %v898, 1.442695
  %v901 = vpow.pop %v900
  %v902 = vmul.f32 %v899, 1.442695
  %v903 = vpow.pop %v902
  %v904 = vsub.f32 %v886, %v890
  %v905 = vsub.f32 %v887, %v891
  %v906 = vmul.f32 %v904, 1.442695
  %v907 = vpow.pop %v906
  %v908 = vmul.f32 %v905, 1.442695
  %v909 = vpow.pop %v908
  %v910 = vadd.f32 %v895, %v901
  %v911 = vadd.f32 %v897, %v903
  %v912 = vadd.f32 %v910, %v907
  %v913 = vadd.f32 %v911, %v909
  %v914 = vrcp.pop %v912
  %v915 = vrcp.pop %v913
  %v916 = vmul.f32 %v895, %v766
  %v917 = vmul.f32 %v897, %v767
  %v918 = vmul.f32 %v901, %v809
  %v919 = vmul.f32 %v903, %v810
  %v920 = vadd.f32 %v916, %v918
  %v921 = vadd.f32 %v917, %v919
  %v922 = vmul.f32 %v907, %v852
  %v923 = vmul.f32 %v909, %v853
  %v924 = vadd.f32 %v920, %v922
  %v925 = vadd.f32 %v921, %v923
  %v926 = vmul.f32 %v924, %v914
  %v927 = vmul.f32 %v925, %v915
  %v928 = vpack.c.bf16 %v511, %v508
  %929 = vmatprep.subr.bf16.mxu0 %v649
  %930 = vmatpush1.bf16.msra.mxu0 %v648
  %931 = vmatprep.subr.bf16.mxu0 %v646
  %932 = vmatpush1.bf16.msra.mxu0 %v645
  %933 = vmatprep.subr.bf16.mxu0 %v643
  %934 = vmatpush1.bf16.msra.mxu0 %v642
  %935 = vmatprep.subr.bf16.mxu0 %v640
  %936 = vmatpush1.bf16.msra.mxu0 %v639
  %937 = vmatprep.subr.bf16.mxu0 %v637
  %938 = vmatpush1.bf16.msra.mxu0 %v636
  %939 = vmatprep.subr.bf16.mxu0 %v634
  %940 = vmatpush1.bf16.msra.mxu0 %v633
  %941 = vmatprep.subr.bf16.mxu0 %v631
  %942 = vmatpush1.bf16.msra.mxu0 %v630
  %943 = vmatprep.subr.bf16.mxu0 %v628
  %944 = vmatpush1.bf16.msra.mxu0 %v627
  %945 = vmatprep.subr.bf16.mxu0 0
  %946 = vmatpush2.bf16.msra.mxu0 0
  %947 = vmatprep.subr.bf16.mxu0 0
  %948 = vmatpush2.bf16.msra.mxu0 0
  %949 = vmatprep.subr.bf16.mxu0 0
  %950 = vmatpush2.bf16.msra.mxu0 0
  %951 = vmatprep.subr.bf16.mxu0 0
  %952 = vmatpush2.bf16.msra.mxu0 0
  %953 = vmatprep.subr.bf16.mxu0 0
  %954 = vmatpush2.bf16.msra.mxu0 0
  %955 = vmatprep.subr.bf16.mxu0 0
  %956 = vmatpush2.bf16.msra.mxu0 0
  %957 = vmatprep.subr.bf16.mxu0 0
  %958 = vmatpush2.bf16.msra.mxu0 0
  %959 = vmatprep.subr.bf16.mxu0 0
  %960 = vmatpush2.bf16.msra.mxu0 0
  %961 = vmatprep.mubr.bf16.mxu0 0
  %962 = vmatmul.mubr.bf16.gmra.mxu0 %v928
  %v963 = vpop.f32.mrf.mxu0
  %v964 = vadd.f32 0.0, %v963
  %v965 = vpop.f32.mrf.mxu0
  %v966 = vadd.f32 0.0, %v965
  %v967 = vpop.f32.mrf.mxu0
  %v968 = vadd.f32 0.0, %v967
  %v969 = vpop.f32.mrf.mxu0
  %v970 = vadd.f32 0.0, %v969
  %971 = vdwg.mxu0
  %972 = vmatprep.subr.bf16.mxu0 0
  %973 = vmatpush1.bf16.msra.mxu0 %v650
  %974 = vmatprep.subr.bf16.mxu0 0
  %975 = vmatpush1.bf16.msra.mxu0 %v647
  %976 = vmatprep.subr.bf16.mxu0 0
  %977 = vmatpush1.bf16.msra.mxu0 %v644
  %978 = vmatprep.subr.bf16.mxu0 0
  %979 = vmatpush1.bf16.msra.mxu0 %v641
  %980 = vmatprep.subr.bf16.mxu0 0
  %981 = vmatpush1.bf16.msra.mxu0 %v638
  %982 = vmatprep.subr.bf16.mxu0 0
  %983 = vmatpush1.bf16.msra.mxu0 %v635
  %984 = vmatprep.subr.bf16.mxu0 0
  %985 = vmatpush1.bf16.msra.mxu0 %v632
  %986 = vmatprep.subr.bf16.mxu0 0
  %987 = vmatpush1.bf16.msra.mxu0 %v629
  %988 = vmatprep.subr.bf16.mxu0 0
  %989 = vmatpush2.bf16.msra.mxu0 0
  %990 = vmatprep.subr.bf16.mxu0 0
  %991 = vmatpush2.bf16.msra.mxu0 0
  %992 = vmatprep.subr.bf16.mxu0 0
  %993 = vmatpush2.bf16.msra.mxu0 0
  %994 = vmatprep.subr.bf16.mxu0 0
  %995 = vmatpush2.bf16.msra.mxu0 0
  %996 = vmatprep.subr.bf16.mxu0 0
  %997 = vmatpush2.bf16.msra.mxu0 0
  %998 = vmatprep.subr.bf16.mxu0 0
  %999 = vmatpush2.bf16.msra.mxu0 0
  %1000 = vmatprep.subr.bf16.mxu0 0
  %1001 = vmatpush2.bf16.msra.mxu0 0
  %1002 = vmatprep.subr.bf16.mxu0 0
  %1003 = vmatpush2.bf16.msra.mxu0 0
  %1004 = vmatprep.mubr.bf16.mxu0 0
  %1005 = vmatmul.mubr.bf16.gmra.mxu0 %v928
  %v1006 = vpop.f32.mrf.mxu0
  %v1007 = vadd.f32 0.0, %v1006
  %v1008 = vpop.f32.mrf.mxu0
  %v1009 = vpop.f32.mrf.mxu0
  %v1010 = vadd.f32 0.0, %v1009
  %v1011 = vpop.f32.mrf.mxu0
  %1012 = vdwg.mxu0
  %v1013 = vadd.f32 %v964, %v763
  %v1014 = vadd.f32 %v968, %v763
  %v1015 = vtanh.pop %v1013
  %v1016 = vtanh.pop %v1014
  %1017 = vmax.xlane.f32.xlu0 %v1015
  %v1018 = vpop.xlane.xlu0 %1017
  %1019 = vmax.xlane.f32.xlu0 %v1016
  %v1020 = vpop.xlane.xlu0 %1019
  %v1021 = vsub.f32 %v1015, %v1018
  %v1022 = vsub.f32 %v1016, %v1020
  %v1023 = vmul.f32 %v1021, 1.442695
  %v1024 = vpow.pop %v1023
  %v1025 = vmul.f32 %v1022, 1.442695
  %v1026 = vpow.pop %v1025
  %1027 = vadd.xlane.f32.xlu0 %v1024
  %v1028 = vpop.xlane.xlu0 %1027
  %1029 = vadd.xlane.f32.xlu0 %v1026
  %v1030 = vpop.xlane.xlu0 %1029
  %v1031 = vrcp.pop %v1028
  %v1032 = vrcp.pop %v1030
  %v1033 = vlog2.pop %v1028
  %v1034 = vmul.f32 %v1033, 0.6931472
  %v1035 = vlog2.pop %v1030
  %v1036 = vmul.f32 %v1035, 0.6931472
  %v1037 = vadd.f32 %v1018, %v1034
  %v1038 = vadd.f32 %v1020, %v1036
  %v1039 = vmul.f32 %v1024, %v1015
  %v1040 = vmul.f32 %v1026, %v1016
  %1041 = vadd.xlane.f32.xlu0 %v1039
  %v1042 = vpop.xlane.xlu0 %1041
  %1043 = vadd.xlane.f32.xlu0 %v1040
  %v1044 = vpop.xlane.xlu0 %1043
  %v1045 = vmul.f32 %v1031, %v1042
  %v1046 = vmul.f32 %v1032, %v1044
  %v1047 = vsub.f32 %v1037, %v1045
  %v1048 = vsub.f32 %v1038, %v1046
  %v1049 = vsub.f32 0.0, %v1047
  %v1050 = vsub.f32 0.0, %v1048
  %v1051 = vadd.f32 %v966, %v806
  %v1052 = vadd.f32 %v970, %v806
  %v1053 = vtanh.pop %v1051
  %v1054 = vtanh.pop %v1052
  %1055 = vmax.xlane.f32.xlu0 %v1053
  %v1056 = vpop.xlane.xlu0 %1055
  %1057 = vmax.xlane.f32.xlu0 %v1054
  %v1058 = vpop.xlane.xlu0 %1057
  %v1059 = vsub.f32 %v1053, %v1056
  %v1060 = vsub.f32 %v1054, %v1058
  %v1061 = vmul.f32 %v1059, 1.442695
  %v1062 = vpow.pop %v1061
  %v1063 = vmul.f32 %v1060, 1.442695
  %v1064 = vpow.pop %v1063
  %1065 = vadd.xlane.f32.xlu0 %v1062
  %v1066 = vpop.xlane.xlu0 %1065
  %1067 = vadd.xlane.f32.xlu0 %v1064
  %v1068 = vpop.xlane.xlu0 %1067
  %v1069 = vrcp.pop %v1066
  %v1070 = vrcp.pop %v1068
  %v1071 = vlog2.pop %v1066
  %v1072 = vmul.f32 %v1071, 0.6931472
  %v1073 = vlog2.pop %v1068
  %v1074 = vmul.f32 %v1073, 0.6931472
  %v1075 = vadd.f32 %v1056, %v1072
  %v1076 = vadd.f32 %v1058, %v1074
  %v1077 = vmul.f32 %v1062, %v1053
  %v1078 = vmul.f32 %v1064, %v1054
  %1079 = vadd.xlane.f32.xlu0 %v1077
  %v1080 = vpop.xlane.xlu0 %1079
  %1081 = vadd.xlane.f32.xlu0 %v1078
  %v1082 = vpop.xlane.xlu0 %1081
  %v1083 = vmul.f32 %v1069, %v1080
  %v1084 = vmul.f32 %v1070, %v1082
  %v1085 = vsub.f32 %v1075, %v1083
  %v1086 = vsub.f32 %v1076, %v1084
  %v1087 = vsub.f32 0.0, %v1085
  %v1088 = vsub.f32 0.0, %v1086
  %v1089 = vadd.f32 %v1007, %v849
  %v1090 = vadd.f32 %v1010, %v849
  %v1091 = vtanh.pop %v1089
  %v1092 = vtanh.pop %v1090
  %1093 = vmax.xlane.f32.xlu0 %v1091
  %v1094 = vpop.xlane.xlu0 %1093
  %1095 = vmax.xlane.f32.xlu0 %v1092
  %v1096 = vpop.xlane.xlu0 %1095
  %v1097 = vsub.f32 %v1091, %v1094
  %v1098 = vsub.f32 %v1092, %v1096
  %v1099 = vmul.f32 %v1097, 1.442695
  %v1100 = vpow.pop %v1099
  %v1101 = vmul.f32 %v1098, 1.442695
  %v1102 = vpow.pop %v1101
  %1103 = vadd.xlane.f32.xlu0 %v1100
  %v1104 = vpop.xlane.xlu0 %1103
  %1105 = vadd.xlane.f32.xlu0 %v1102
  %v1106 = vpop.xlane.xlu0 %1105
  %v1107 = vrcp.pop %v1104
  %v1108 = vrcp.pop %v1106
  %v1109 = vlog2.pop %v1104
  %v1110 = vmul.f32 %v1109, 0.6931472
  %v1111 = vlog2.pop %v1106
  %v1112 = vmul.f32 %v1111, 0.6931472
  %v1113 = vadd.f32 %v1094, %v1110
  %v1114 = vadd.f32 %v1096, %v1112
  %v1115 = vmul.f32 %v1100, %v1091
  %v1116 = vmul.f32 %v1102, %v1092
  %1117 = vadd.xlane.f32.xlu0 %v1115
  %v1118 = vpop.xlane.xlu0 %1117
  %1119 = vadd.xlane.f32.xlu0 %v1116
  %v1120 = vpop.xlane.xlu0 %1119
  %v1121 = vmul.f32 %v1107, %v1118
  %v1122 = vmul.f32 %v1108, %v1120
  %v1123 = vsub.f32 %v1113, %v1121
  %v1124 = vsub.f32 %v1114, %v1122
  %v1125 = vsub.f32 0.0, %v1123
  %v1126 = vsub.f32 0.0, %v1124
  %v1127 = vmax.f32 %v1049, %v1087
  %v1128 = vmax.f32 %v1050, %v1088
  %v1129 = vmax.f32 %v1127, %v1125
  %v1130 = vmax.f32 %v1128, %v1126
  %v1131 = vsub.f32 %v1049, %v1129
  %v1132 = vsub.f32 %v1050, %v1130
  %v1133 = vmul.f32 %v1131, 1.442695
  %v1134 = vpow.pop %v1133
  %v1135 = vmul.f32 %v1132, 1.442695
  %v1136 = vpow.pop %v1135
  %v1137 = vsub.f32 %v1087, %v1129
  %v1138 = vsub.f32 %v1088, %v1130
  %v1139 = vmul.f32 %v1137, 1.442695
  %v1140 = vpow.pop %v1139
  %v1141 = vmul.f32 %v1138, 1.442695
  %v1142 = vpow.pop %v1141
  %v1143 = vsub.f32 %v1125, %v1129
  %v1144 = vsub.f32 %v1126, %v1130
  %v1145 = vmul.f32 %v1143, 1.442695
  %v1146 = vpow.pop %v1145
  %v1147 = vmul.f32 %v1144, 1.442695
  %v1148 = vpow.pop %v1147
  %v1149 = vadd.f32 %v1134, %v1140
  %v1150 = vadd.f32 %v1136, %v1142
  %v1151 = vadd.f32 %v1149, %v1146
  %v1152 = vadd.f32 %v1150, %v1148
  %v1153 = vrcp.pop %v1151
  %v1154 = vrcp.pop %v1152
  %v1155 = vmul.f32 %v1134, %v1015
  %v1156 = vmul.f32 %v1136, %v1016
  %v1157 = vmul.f32 %v1140, %v1053
  %v1158 = vmul.f32 %v1142, %v1054
  %v1159 = vadd.f32 %v1155, %v1157
  %v1160 = vadd.f32 %v1156, %v1158
  %v1161 = vmul.f32 %v1146, %v1091
  %v1162 = vmul.f32 %v1148, %v1092
  %v1163 = vadd.f32 %v1159, %v1161
  %v1164 = vadd.f32 %v1160, %v1162
  %v1165 = vmul.f32 %v1163, %v1153
  %v1166 = vmul.f32 %v1164, %v1154
  %v1167 = vpack.c.bf16 %v926, %v926
  %v1168 = vpack.c.bf16 %v927, %v927
  %v1169 = vpack.c.bf16 %v1165, %v1165
  %v1170 = vpack.c.bf16 %v1166, %v1166
  %1171 = vmatprep.subr.bf16.mxu0 0
  %1172 = vmatpush1.bf16.xpose.msra.mxu0 0
  %1173 = vmatprep.subr.bf16.mxu0 0
  %1174 = vmatpush1.bf16.xpose.msra.mxu0 0
  %1175 = vmatprep.subr.bf16.mxu0 0
  %1176 = vmatpush1.bf16.xpose.msra.mxu0 0
  %1177 = vmatprep.subr.bf16.mxu0 0
  %1178 = vmatpush1.bf16.xpose.msra.mxu0 0
  %1179 = vmatprep.subr.bf16.mxu0 0
  %1180 = vmatpush1.bf16.xpose.msra.mxu0 0
  %1181 = vmatprep.subr.bf16.mxu0 0
  %1182 = vmatpush1.bf16.xpose.msra.mxu0 0
  %1183 = vmatprep.subr.bf16.mxu0 0
  %1184 = vmatpush1.bf16.xpose.msra.mxu0 0
  %1185 = vmatprep.subr.bf16.mxu0 0
  %1186 = vmatpush1.bf16.xpose.msra.mxu0 %v1169
  %1187 = vmatprep.subr.bf16.mxu0 0
  %1188 = vmatpush2.bf16.xpose.msra.mxu0 0
  %1189 = vmatprep.subr.bf16.mxu0 0
  %1190 = vmatpush2.bf16.xpose.msra.mxu0 0
  %1191 = vmatprep.subr.bf16.mxu0 0
  %1192 = vmatpush2.bf16.xpose.msra.mxu0 0
  %1193 = vmatprep.subr.bf16.mxu0 0
  %1194 = vmatpush2.bf16.xpose.msra.mxu0 0
  %1195 = vmatprep.subr.bf16.mxu0 0
  %1196 = vmatpush2.bf16.xpose.msra.mxu0 0
  %1197 = vmatprep.subr.bf16.mxu0 0
  %1198 = vmatpush2.bf16.xpose.msra.mxu0 0
  %1199 = vmatprep.subr.bf16.mxu0 0
  %1200 = vmatpush2.bf16.xpose.msra.mxu0 0
  %1201 = vmatprep.subr.bf16.mxu0 0
  %1202 = vmatpush2.bf16.xpose.msra.mxu0 0
  %1203 = vmatprep.mubr.bf16.mxu0 0
  %1204 = vmatmul.mubr.bf16.gmra.mxu0 %v1167
  %v1205 = vpop.f32.mrf.mxu0
  %v1206 = vadd.f32 0.0, %v1205
  %v1207 = vpop.f32.mrf.mxu0
  %v1208 = vpop.f32.mrf.mxu0
  %v1209 = vpop.f32.mrf.mxu0
  %1210 = vdwg.mxu0
  %1211 = vmatprep.subr.bf16.mxu0 0
  %1212 = vmatpush1.bf16.xpose.msra.mxu0 0
  %1213 = vmatprep.subr.bf16.mxu0 0
  %1214 = vmatpush1.bf16.xpose.msra.mxu0 0
  %1215 = vmatprep.subr.bf16.mxu0 0
  %1216 = vmatpush1.bf16.xpose.msra.mxu0 0
  %1217 = vmatprep.subr.bf16.mxu0 0
  %1218 = vmatpush1.bf16.xpose.msra.mxu0 0
  %1219 = vmatprep.subr.bf16.mxu0 0
  %1220 = vmatpush1.bf16.xpose.msra.mxu0 0
  %1221 = vmatprep.subr.bf16.mxu0 0
  %1222 = vmatpush1.bf16.xpose.msra.mxu0 0
  %1223 = vmatprep.subr.bf16.mxu0 0
  %1224 = vmatpush1.bf16.xpose.msra.mxu0 0
  %1225 = vmatprep.subr.bf16.mxu0 0
  %1226 = vmatpush1.bf16.xpose.msra.mxu0 %v1170
  %1227 = vmatprep.subr.bf16.mxu0 0
  %1228 = vmatpush2.bf16.xpose.msra.mxu0 0
  %1229 = vmatprep.subr.bf16.mxu0 0
  %1230 = vmatpush2.bf16.xpose.msra.mxu0 0
  %1231 = vmatprep.subr.bf16.mxu0 0
  %1232 = vmatpush2.bf16.xpose.msra.mxu0 0
  %1233 = vmatprep.subr.bf16.mxu0 0
  %1234 = vmatpush2.bf16.xpose.msra.mxu0 0
  %1235 = vmatprep.subr.bf16.mxu0 0
  %1236 = vmatpush2.bf16.xpose.msra.mxu0 0
  %1237 = vmatprep.subr.bf16.mxu0 0
  %1238 = vmatpush2.bf16.xpose.msra.mxu0 0
  %1239 = vmatprep.subr.bf16.mxu0 0
  %1240 = vmatpush2.bf16.xpose.msra.mxu0 0
  %1241 = vmatprep.subr.bf16.mxu0 0
  %1242 = vmatpush2.bf16.xpose.msra.mxu0 0
  %1243 = vmatprep.mubr.bf16.mxu0 0
  %1244 = vmatmul.mubr.bf16.gmra.mxu0 %v1168
  %v1245 = vpop.f32.mrf.mxu0
  %v1246 = vadd.f32 0.0, %v1245
  %v1247 = vpop.f32.mrf.mxu0
  %v1248 = vpop.f32.mrf.mxu0
  %v1249 = vpop.f32.mrf.mxu0
  %1250 = vdwg.mxu0
  %v1251 = vmul.f32 %v1206, 0.088388346
  %v1252 = vmul.f32 %v1246, 0.088388346
  %vm1253 = vcmask 64512
  %v1254 = vsel %vm1253, %v1251, -inf
  %1255 = vmax.xlane.f32.xlu0 %v1254
  %v1256 = vpop.xlane.xlu0 %1255
  %v1257 = vsel %vm1253, %v1252, -inf
  %1258 = vmax.xlane.f32.xlu0 %v1257
  %v1259 = vpop.xlane.xlu0 %1258
  %v1260 = vsub.f32 %v1251, %v1256
  %v1261 = vsub.f32 %v1252, %v1259
  %v1262 = vmul.f32 %v1260, 1.442695
  %v1263 = vpow.pop %v1262
  %v1264 = vmul.f32 %v1261, 1.442695
  %v1265 = vpow.pop %v1264
  %v1266 = vsel %vm1253, %v1263, 0.0
  %1267 = vadd.xlane.f32.xlu0 %v1266
  %v1268 = vpop.xlane.xlu0 %1267
  %v1269 = vsel %vm1253, %v1265, 0.0
  %1270 = vadd.xlane.f32.xlu0 %v1269
  %v1271 = vpop.xlane.xlu0 %1270
  %v1272 = vrcp.pop %v1268
  %v1273 = vrcp.pop %v1271
  %v1274 = vmul.f32 %v1263, %v1272
  %v1275 = vmul.f32 %v1265, %v1273
  %v1276 = vld [vmem:[%s2 + $0x1c] sm:$0xf]
  %v1277 = vld [vmem:[%s2 + $0x64] sm:$0xf]
  %v1278 = vld [vmem:[%s2 + $0xac] sm:$0xf]
  %v1279 = vld [vmem:[%s2 + $0xf4] sm:$0xf]
  %v1280 = vld [vmem:[%s2 + $0x13c] sm:$0xf]
  %v1281 = vld [vmem:[%s2 + $0x184] sm:$0xf]
  %v1282 = vld [vmem:[%s2 + $0x1cc] sm:$0xf]
  %v1283 = vld [vmem:[%s2 + $0x214] sm:$0xf]
  %v1284 = vld [vmem:[%s2 + $0x25c] sm:$0xf]
  %v1285 = vld [vmem:[%s2 + $0x2a4] sm:$0xf]
  %v1286 = vld [vmem:[%s2 + $0x2ec] sm:$0xf]
  %v1287 = vld [vmem:[%s2 + $0x334] sm:$0xf]
  %v1288 = vld [vmem:[%s2 + $0x37c] sm:$0xf]
  %v1289 = vld [vmem:[%s2 + $0x3c4] sm:$0xf]
  %v1290 = vld [vmem:[%s2 + $0x40c] sm:$0xf]
  %v1291 = vld [vmem:[%s2 + $0x454] sm:$0xf]
  %v1292 = vld [vmem:[%s3 + $0x7] sm:$0x1]
  %v1293 = vpack.c.bf16 %v927, %v926
  %v1294 = vlaneseq
  %v1295 = vshrl.u32 %v1294, 7
  %v1296 = vsub.s32 0, %v1295
  %v1297 = vrot.slane %v1292, %v1296
  %v1314 = vunpack.c.l.b16 %v1276
  %v1315 = vunpack.c.l.b16 %v1277
  %v1316 = vunpack.c.l.b16 %v1278
  %v1317 = vunpack.c.l.b16 %v1279
  %v1318 = vunpack.c.l.b16 %v1280
  %v1319 = vunpack.c.l.b16 %v1281
  %v1320 = vunpack.c.l.b16 %v1282
  %v1321 = vunpack.c.l.b16 %v1283
  %v1322 = vunpack.c.l.b16 %v1284
  %v1323 = vunpack.c.l.b16 %v1285
  %v1324 = vunpack.c.l.b16 %v1286
  %v1325 = vunpack.c.l.b16 %v1287
  %v1326 = vunpack.c.l.b16 %v1288
  %v1327 = vunpack.c.l.b16 %v1289
  %v1328 = vunpack.c.l.b16 %v1290
  %v1329 = vunpack.c.l.b16 %v1291
  %v1330 = vpack.c.b16 %v1315, %v1314
  %v1331 = vpack.c.b16 %v1317, %v1316
  %v1332 = vpack.c.b16 %v1319, %v1318
  %v1333 = vpack.c.b16 %v1321, %v1320
  %v1334 = vpack.c.b16 %v1323, %v1322
  %v1335 = vpack.c.b16 %v1325, %v1324
  %v1336 = vpack.c.b16 %v1327, %v1326
  %v1337 = vpack.c.b16 %v1329, %v1328
  %1346 = vmatprep.subr.bf16.mxu0 0
  %1347 = vmatpush1.bf16.msra.mxu0 %v1337
  %1348 = vmatprep.subr.bf16.mxu0 0
  %1349 = vmatpush1.bf16.msra.mxu0 %v1336
  %1350 = vmatprep.subr.bf16.mxu0 0
  %1351 = vmatpush1.bf16.msra.mxu0 %v1335
  %1352 = vmatprep.subr.bf16.mxu0 0
  %1353 = vmatpush1.bf16.msra.mxu0 %v1334
  %1354 = vmatprep.subr.bf16.mxu0 0
  %1355 = vmatpush1.bf16.msra.mxu0 %v1333
  %1356 = vmatprep.subr.bf16.mxu0 0
  %1357 = vmatpush1.bf16.msra.mxu0 %v1332
  %1358 = vmatprep.subr.bf16.mxu0 0
  %1359 = vmatpush1.bf16.msra.mxu0 %v1331
  %1360 = vmatprep.subr.bf16.mxu0 0
  %1361 = vmatpush1.bf16.msra.mxu0 %v1330
  %1362 = vmatprep.subr.bf16.mxu0 0
  %1363 = vmatpush2.bf16.msra.mxu0 0
  %1364 = vmatprep.subr.bf16.mxu0 0
  %1365 = vmatpush2.bf16.msra.mxu0 0
  %1366 = vmatprep.subr.bf16.mxu0 0
  %1367 = vmatpush2.bf16.msra.mxu0 0
  %1368 = vmatprep.subr.bf16.mxu0 0
  %1369 = vmatpush2.bf16.msra.mxu0 0
  %1370 = vmatprep.subr.bf16.mxu0 0
  %1371 = vmatpush2.bf16.msra.mxu0 0
  %1372 = vmatprep.subr.bf16.mxu0 0
  %1373 = vmatpush2.bf16.msra.mxu0 0
  %1374 = vmatprep.subr.bf16.mxu0 0
  %1375 = vmatpush2.bf16.msra.mxu0 0
  %1376 = vmatprep.subr.bf16.mxu0 0
  %1377 = vmatpush2.bf16.msra.mxu0 0
  %1378 = vmatprep.mubr.bf16.mxu0 0
  %1379 = vmatmul.mubr.bf16.gmra.mxu0 %v1293
  %v1380 = vpop.f32.mrf.mxu0
  %v1381 = vadd.f32 %v1297, %v1380
  %v1382 = vpop.f32.mrf.mxu0
  %v1383 = vpop.f32.mrf.mxu0
  %v1384 = vadd.f32 %v1297, %v1383
  %v1385 = vpop.f32.mrf.mxu0
  %1386 = vdwg.mxu0
  %v1387 = vld [vmem:[%s2 + $0x20] sm:$0xff]
  %v1388 = vld [vmem:[%s2 + $0x68] sm:$0xff]
  %v1389 = vld [vmem:[%s2 + $0xb0] sm:$0xff]
  %v1390 = vld [vmem:[%s2 + $0xf8] sm:$0xff]
  %v1391 = vld [vmem:[%s2 + $0x140] sm:$0xff]
  %v1392 = vld [vmem:[%s2 + $0x188] sm:$0xff]
  %v1393 = vld [vmem:[%s2 + $0x1d0] sm:$0xff]
  %v1394 = vld [vmem:[%s2 + $0x218] sm:$0xff]
  %v1395 = vld [vmem:[%s2 + $0x260] sm:$0xff]
  %v1396 = vld [vmem:[%s2 + $0x2a8] sm:$0xff]
  %v1397 = vld [vmem:[%s2 + $0x2f0] sm:$0xff]
  %v1398 = vld [vmem:[%s2 + $0x338] sm:$0xff]
  %v1399 = vld [vmem:[%s2 + $0x380] sm:$0xff]
  %v1400 = vld [vmem:[%s2 + $0x3c8] sm:$0xff]
  %v1401 = vld [vmem:[%s2 + $0x410] sm:$0xff]
  %v1402 = vld [vmem:[%s2 + $0x458] sm:$0xff]
  %v1403 = vpack.c.bf16 %v1166, %v1165
  %v1420 = vunpack.c.l.b16 %v1387
  %v1421 = vunpack.c.h.b16 %v1387
  %v1422 = vunpack.c.l.b16 %v1388
  %v1423 = vunpack.c.h.b16 %v1388
  %v1424 = vunpack.c.l.b16 %v1389
  %v1425 = vunpack.c.h.b16 %v1389
  %v1426 = vunpack.c.l.b16 %v1390
  %v1427 = vunpack.c.h.b16 %v1390
  %v1428 = vunpack.c.l.b16 %v1391
  %v1429 = vunpack.c.h.b16 %v1391
  %v1430 = vunpack.c.l.b16 %v1392
  %v1431 = vunpack.c.h.b16 %v1392
  %v1432 = vunpack.c.l.b16 %v1393
  %v1433 = vunpack.c.h.b16 %v1393
  %v1434 = vunpack.c.l.b16 %v1394
  %v1435 = vunpack.c.h.b16 %v1394
  %v1436 = vunpack.c.l.b16 %v1395
  %v1437 = vunpack.c.h.b16 %v1395
  %v1438 = vunpack.c.l.b16 %v1396
  %v1439 = vunpack.c.h.b16 %v1396
  %v1440 = vunpack.c.l.b16 %v1397
  %v1441 = vunpack.c.h.b16 %v1397
  %v1442 = vunpack.c.l.b16 %v1398
  %v1443 = vunpack.c.h.b16 %v1398
  %v1444 = vunpack.c.l.b16 %v1399
  %v1445 = vunpack.c.h.b16 %v1399
  %v1446 = vunpack.c.l.b16 %v1400
  %v1447 = vunpack.c.h.b16 %v1400
  %v1448 = vunpack.c.l.b16 %v1401
  %v1449 = vunpack.c.h.b16 %v1401
  %v1450 = vunpack.c.l.b16 %v1402
  %v1451 = vunpack.c.h.b16 %v1402
  %v1452 = vpack.c.b16 %v1422, %v1420
  %v1453 = vpack.c.b16 %v1423, %v1421
  %v1454 = vpack.c.b16 %v1426, %v1424
  %v1455 = vpack.c.b16 %v1427, %v1425
  %v1456 = vpack.c.b16 %v1430, %v1428
  %v1457 = vpack.c.b16 %v1431, %v1429
  %v1458 = vpack.c.b16 %v1434, %v1432
  %v1459 = vpack.c.b16 %v1435, %v1433
  %v1460 = vpack.c.b16 %v1438, %v1436
  %v1461 = vpack.c.b16 %v1439, %v1437
  %v1462 = vpack.c.b16 %v1442, %v1440
  %v1463 = vpack.c.b16 %v1443, %v1441
  %v1464 = vpack.c.b16 %v1446, %v1444
  %v1465 = vpack.c.b16 %v1447, %v1445
  %v1466 = vpack.c.b16 %v1450, %v1448
  %v1467 = vpack.c.b16 %v1451, %v1449
  %1484 = vmatprep.subr.bf16.mxu0 %v1467
  %1485 = vmatpush1.bf16.msra.mxu0 %v1466
  %1486 = vmatprep.subr.bf16.mxu0 %v1465
  %1487 = vmatpush1.bf16.msra.mxu0 %v1464
  %1488 = vmatprep.subr.bf16.mxu0 %v1463
  %1489 = vmatpush1.bf16.msra.mxu0 %v1462
  %1490 = vmatprep.subr.bf16.mxu0 %v1461
  %1491 = vmatpush1.bf16.msra.mxu0 %v1460
  %1492 = vmatprep.subr.bf16.mxu0 %v1459
  %1493 = vmatpush1.bf16.msra.mxu0 %v1458
  %1494 = vmatprep.subr.bf16.mxu0 %v1457
  %1495 = vmatpush1.bf16.msra.mxu0 %v1456
  %1496 = vmatprep.subr.bf16.mxu0 %v1455
  %1497 = vmatpush1.bf16.msra.mxu0 %v1454
  %1498 = vmatprep.subr.bf16.mxu0 %v1453
  %1499 = vmatpush1.bf16.msra.mxu0 %v1452
  %1500 = vmatprep.subr.bf16.mxu0 0
  %1501 = vmatpush2.bf16.msra.mxu0 0
  %1502 = vmatprep.subr.bf16.mxu0 0
  %1503 = vmatpush2.bf16.msra.mxu0 0
  %1504 = vmatprep.subr.bf16.mxu0 0
  %1505 = vmatpush2.bf16.msra.mxu0 0
  %1506 = vmatprep.subr.bf16.mxu0 0
  %1507 = vmatpush2.bf16.msra.mxu0 0
  %1508 = vmatprep.subr.bf16.mxu0 0
  %1509 = vmatpush2.bf16.msra.mxu0 0
  %1510 = vmatprep.subr.bf16.mxu0 0
  %1511 = vmatpush2.bf16.msra.mxu0 0
  %1512 = vmatprep.subr.bf16.mxu0 0
  %1513 = vmatpush2.bf16.msra.mxu0 0
  %1514 = vmatprep.subr.bf16.mxu0 0
  %1515 = vmatpush2.bf16.msra.mxu0 0
  %1516 = vmatprep.mubr.bf16.mxu0 0
  %1517 = vmatmul.mubr.bf16.gmra.mxu0 %v1403
  %v1518 = vpop.f32.mrf.mxu0
  %v1519 = vadd.f32 0.0, %v1518
  %v1520 = vpop.f32.mrf.mxu0
  %v1521 = vadd.f32 0.0, %v1520
  %v1522 = vpop.f32.mrf.mxu0
  %v1523 = vadd.f32 0.0, %v1522
  %v1524 = vpop.f32.mrf.mxu0
  %v1525 = vadd.f32 0.0, %v1524
  %1526 = vdwg.mxu0
  %v1527 = vld [vmem:[%s3 + $0x8] sm:$0x1]
  %v1528 = vlaneseq
  %v1529 = vshrl.u32 %v1528, 7
  %v1530 = vsub.s32 0, %v1529
  %v1531 = vrot.slane %v1527, %v1530
  %v1532 = vadd.f32 %v1519, %v1531
  %v1533 = vadd.f32 %v1523, %v1531
  %v1534 = vld [vmem:[%s3 + $0x9] sm:$0x1]
  %v1535 = vlaneseq
  %v1536 = vshrl.u32 %v1535, 7
  %v1537 = vsub.s32 0, %v1536
  %v1538 = vrot.slane %v1534, %v1537
  %v1539 = vadd.f32 %v1521, %v1538
  %v1540 = vadd.f32 %v1525, %v1538
  %v1541 = vpack.c.bf16 %v1381, %v1381
  %v1542 = vpack.c.bf16 %v1384, %v1384
  %v1543 = vpack.c.bf16 %v1532, %v1532
  %v1544 = vpack.c.bf16 %v1533, %v1533
  %1545 = vmatprep.subr.bf16.mxu0 0
  %1546 = vmatpush1.bf16.xpose.msra.mxu0 0
  %1547 = vmatprep.subr.bf16.mxu0 0
  %1548 = vmatpush1.bf16.xpose.msra.mxu0 0
  %1549 = vmatprep.subr.bf16.mxu0 0
  %1550 = vmatpush1.bf16.xpose.msra.mxu0 0
  %1551 = vmatprep.subr.bf16.mxu0 0
  %1552 = vmatpush1.bf16.xpose.msra.mxu0 0
  %1553 = vmatprep.subr.bf16.mxu0 0
  %1554 = vmatpush1.bf16.xpose.msra.mxu0 0
  %1555 = vmatprep.subr.bf16.mxu0 0
  %1556 = vmatpush1.bf16.xpose.msra.mxu0 0
  %1557 = vmatprep.subr.bf16.mxu0 0
  %1558 = vmatpush1.bf16.xpose.msra.mxu0 0
  %1559 = vmatprep.subr.bf16.mxu0 0
  %1560 = vmatpush1.bf16.xpose.msra.mxu0 %v1543
  %1561 = vmatprep.subr.bf16.mxu0 0
  %1562 = vmatpush2.bf16.xpose.msra.mxu0 0
  %1563 = vmatprep.subr.bf16.mxu0 0
  %1564 = vmatpush2.bf16.xpose.msra.mxu0 0
  %1565 = vmatprep.subr.bf16.mxu0 0
  %1566 = vmatpush2.bf16.xpose.msra.mxu0 0
  %1567 = vmatprep.subr.bf16.mxu0 0
  %1568 = vmatpush2.bf16.xpose.msra.mxu0 0
  %1569 = vmatprep.subr.bf16.mxu0 0
  %1570 = vmatpush2.bf16.xpose.msra.mxu0 0
  %1571 = vmatprep.subr.bf16.mxu0 0
  %1572 = vmatpush2.bf16.xpose.msra.mxu0 0
  %1573 = vmatprep.subr.bf16.mxu0 0
  %1574 = vmatpush2.bf16.xpose.msra.mxu0 0
  %1575 = vmatprep.subr.bf16.mxu0 0
  %1576 = vmatpush2.bf16.xpose.msra.mxu0 0
  %1577 = vmatprep.mubr.bf16.mxu0 0
  %1578 = vmatmul.mubr.bf16.gmra.mxu0 %v1541
  %v1579 = vpop.f32.mrf.mxu0
  %v1580 = vadd.f32 0.0, %v1579
  %v1581 = vpop.f32.mrf.mxu0
  %v1582 = vpop.f32.mrf.mxu0
  %v1583 = vpop.f32.mrf.mxu0
  %1584 = vdwg.mxu0
  %1585 = vmatprep.subr.bf16.mxu0 0
  %1586 = vmatpush1.bf16.xpose.msra.mxu0 0
  %1587 = vmatprep.subr.bf16.mxu0 0
  %1588 = vmatpush1.bf16.xpose.msra.mxu0 0
  %1589 = vmatprep.subr.bf16.mxu0 0
  %1590 = vmatpush1.bf16.xpose.msra.mxu0 0
  %1591 = vmatprep.subr.bf16.mxu0 0
  %1592 = vmatpush1.bf16.xpose.msra.mxu0 0
  %1593 = vmatprep.subr.bf16.mxu0 0
  %1594 = vmatpush1.bf16.xpose.msra.mxu0 0
  %1595 = vmatprep.subr.bf16.mxu0 0
  %1596 = vmatpush1.bf16.xpose.msra.mxu0 0
  %1597 = vmatprep.subr.bf16.mxu0 0
  %1598 = vmatpush1.bf16.xpose.msra.mxu0 0
  %1599 = vmatprep.subr.bf16.mxu0 0
  %1600 = vmatpush1.bf16.xpose.msra.mxu0 %v1544
  %1601 = vmatprep.subr.bf16.mxu0 0
  %1602 = vmatpush2.bf16.xpose.msra.mxu0 0
  %1603 = vmatprep.subr.bf16.mxu0 0
  %1604 = vmatpush2.bf16.xpose.msra.mxu0 0
  %1605 = vmatprep.subr.bf16.mxu0 0
  %1606 = vmatpush2.bf16.xpose.msra.mxu0 0
  %1607 = vmatprep.subr.bf16.mxu0 0
  %1608 = vmatpush2.bf16.xpose.msra.mxu0 0
  %1609 = vmatprep.subr.bf16.mxu0 0
  %1610 = vmatpush2.bf16.xpose.msra.mxu0 0
  %1611 = vmatprep.subr.bf16.mxu0 0
  %1612 = vmatpush2.bf16.xpose.msra.mxu0 0
  %1613 = vmatprep.subr.bf16.mxu0 0
  %1614 = vmatpush2.bf16.xpose.msra.mxu0 0
  %1615 = vmatprep.subr.bf16.mxu0 0
  %1616 = vmatpush2.bf16.xpose.msra.mxu0 0
  %1617 = vmatprep.mubr.bf16.mxu0 0
  %1618 = vmatmul.mubr.bf16.gmra.mxu0 %v1542
  %v1619 = vpop.f32.mrf.mxu0
  %v1620 = vadd.f32 0.0, %v1619
  %v1621 = vpop.f32.mrf.mxu0
  %v1622 = vpop.f32.mrf.mxu0
  %v1623 = vpop.f32.mrf.mxu0
  %1624 = vdwg.mxu0
  %v1625 = vmul.f32 %v1580, 0.088388346
  %v1626 = vmul.f32 %v1620, 0.088388346
  %v1627 = vsel %vm1253, %v1625, -inf
  %1628 = vmax.xlane.f32.xlu0 %v1627
  %v1629 = vpop.xlane.xlu0 %1628
  %v1630 = vsel %vm1253, %v1626, -inf
  %1631 = vmax.xlane.f32.xlu0 %v1630
  %v1632 = vpop.xlane.xlu0 %1631
  %v1633 = vsub.f32 %v1625, %v1629
  %v1634 = vsub.f32 %v1626, %v1632
  %v1635 = vmul.f32 %v1633, 1.442695
  %v1636 = vpow.pop %v1635
  %v1637 = vmul.f32 %v1634, 1.442695
  %v1638 = vpow.pop %v1637
  %v1639 = vsel %vm1253, %v1636, 0.0
  %1640 = vadd.xlane.f32.xlu0 %v1639
  %v1641 = vpop.xlane.xlu0 %1640
  %v1642 = vsel %vm1253, %v1638, 0.0
  %1643 = vadd.xlane.f32.xlu0 %v1642
  %v1644 = vpop.xlane.xlu0 %1643
  %v1645 = vrcp.pop %v1641
  %v1646 = vrcp.pop %v1644
  %v1647 = vmul.f32 %v1636, %v1645
  %v1648 = vmul.f32 %v1638, %v1646
  %v1649 = vpack.c.bf16 %v1647, %v1647
  %v1650 = vpack.c.bf16 %v1648, %v1648
  %v1651 = vpack.c.bf16 %v1539, %v1539
  %v1652 = vpack.c.bf16 %v1540, %v1540
  %v1654 = vsel %vm1253, %v1649, 0
  %vm1656 = vcmask 1043456
  %v1658 = vsel %vm1656, %v1651, 0
  %1660 = vmatprep.subr.bf16.mxu0 0
  %1661 = vmatpush1.bf16.msra.mxu0 0
  %1662 = vmatprep.subr.bf16.mxu0 0
  %1663 = vmatpush1.bf16.msra.mxu0 0
  %1664 = vmatprep.subr.bf16.mxu0 0
  %1665 = vmatpush1.bf16.msra.mxu0 0
  %1666 = vmatprep.subr.bf16.mxu0 0
  %1667 = vmatpush1.bf16.msra.mxu0 0
  %1668 = vmatprep.subr.bf16.mxu0 0
  %1669 = vmatpush1.bf16.msra.mxu0 0
  %1670 = vmatprep.subr.bf16.mxu0 0
  %1671 = vmatpush1.bf16.msra.mxu0 0
  %1672 = vmatprep.subr.bf16.mxu0 0
  %1673 = vmatpush1.bf16.msra.mxu0 0
  %1674 = vmatprep.subr.bf16.mxu0 0
  %1675 = vmatpush1.bf16.msra.mxu0 %v1658
  %1676 = vmatprep.subr.bf16.mxu0 0
  %1677 = vmatpush2.bf16.msra.mxu0 0
  %1678 = vmatprep.subr.bf16.mxu0 0
  %1679 = vmatpush2.bf16.msra.mxu0 0
  %1680 = vmatprep.subr.bf16.mxu0 0
  %1681 = vmatpush2.bf16.msra.mxu0 0
  %1682 = vmatprep.subr.bf16.mxu0 0
  %1683 = vmatpush2.bf16.msra.mxu0 0
  %1684 = vmatprep.subr.bf16.mxu0 0
  %1685 = vmatpush2.bf16.msra.mxu0 0
  %1686 = vmatprep.subr.bf16.mxu0 0
  %1687 = vmatpush2.bf16.msra.mxu0 0
  %1688 = vmatprep.subr.bf16.mxu0 0
  %1689 = vmatpush2.bf16.msra.mxu0 0
  %1690 = vmatprep.subr.bf16.mxu0 0
  %1691 = vmatpush2.bf16.msra.mxu0 0
  %1692 = vmatprep.mubr.bf16.mxu0 0
  %1693 = vmatmul.mubr.bf16.gmra.mxu0 %v1654
  %v1694 = vpop.f32.mrf.mxu0
  %v1695 = vadd.f32 0.0, %v1694
  %v1696 = vpop.f32.mrf.mxu0
  %v1697 = vpop.f32.mrf.mxu0
  %v1698 = vpop.f32.mrf.mxu0
  %1699 = vdwg.mxu0
  %v1701 = vsel %vm1253, %v1650, 0
  %v1704 = vsel %vm1656, %v1652, 0
  %1706 = vmatprep.subr.bf16.mxu0 0
  %1707 = vmatpush1.bf16.msra.mxu0 0
  %1708 = vmatprep.subr.bf16.mxu0 0
  %1709 = vmatpush1.bf16.msra.mxu0 0
  %1710 = vmatprep.subr.bf16.mxu0 0
  %1711 = vmatpush1.bf16.msra.mxu0 0
  %1712 = vmatprep.subr.bf16.mxu0 0
  %1713 = vmatpush1.bf16.msra.mxu0 0
  %1714 = vmatprep.subr.bf16.mxu0 0
  %1715 = vmatpush1.bf16.msra.mxu0 0
  %1716 = vmatprep.subr.bf16.mxu0 0
  %1717 = vmatpush1.bf16.msra.mxu0 0
  %1718 = vmatprep.subr.bf16.mxu0 0
  %1719 = vmatpush1.bf16.msra.mxu0 0
  %1720 = vmatprep.subr.bf16.mxu0 0
  %1721 = vmatpush1.bf16.msra.mxu0 %v1704
  %1722 = vmatprep.subr.bf16.mxu0 0
  %1723 = vmatpush2.bf16.msra.mxu0 0
  %1724 = vmatprep.subr.bf16.mxu0 0
  %1725 = vmatpush2.bf16.msra.mxu0 0
  %1726 = vmatprep.subr.bf16.mxu0 0
  %1727 = vmatpush2.bf16.msra.mxu0 0
  %1728 = vmatprep.subr.bf16.mxu0 0
  %1729 = vmatpush2.bf16.msra.mxu0 0
  %1730 = vmatprep.subr.bf16.mxu0 0
  %1731 = vmatpush2.bf16.msra.mxu0 0
  %1732 = vmatprep.subr.bf16.mxu0 0
  %1733 = vmatpush2.bf16.msra.mxu0 0
  %1734 = vmatprep.subr.bf16.mxu0 0
  %1735 = vmatpush2.bf16.msra.mxu0 0
  %1736 = vmatprep.subr.bf16.mxu0 0
  %1737 = vmatpush2.bf16.msra.mxu0 0
  %1738 = vmatprep.mubr.bf16.mxu0 0
  %1739 = vmatmul.mubr.bf16.gmra.mxu0 %v1701
  %v1740 = vpop.f32.mrf.mxu0
  %v1741 = vadd.f32 0.0, %v1740
  %v1742 = vpop.f32.mrf.mxu0
  %v1743 = vpop.f32.mrf.mxu0
  %v1744 = vpop.f32.mrf.mxu0
  %1745 = vdwg.mxu0
  %v1746 = vld [vmem:[%s2 + $0x28] sm:$0xf]
  %v1747 = vld [vmem:[%s2 + $0x70] sm:$0xf]
  %v1748 = vld [vmem:[%s2 + $0xb8] sm:$0xf]
  %v1749 = vld [vmem:[%s2 + $0x100] sm:$0xf]
  %v1750 = vld [vmem:[%s2 + $0x148] sm:$0xf]
  %v1751 = vld [vmem:[%s2 + $0x190] sm:$0xf]
  %v1752 = vld [vmem:[%s2 + $0x1d8] sm:$0xf]
  %v1753 = vld [vmem:[%s2 + $0x220] sm:$0xf]
  %v1754 = vld [vmem:[%s2 + $0x268] sm:$0xf]
  %v1755 = vld [vmem:[%s2 + $0x2b0] sm:$0xf]
  %v1756 = vld [vmem:[%s2 + $0x2f8] sm:$0xf]
  %v1757 = vld [vmem:[%s2 + $0x340] sm:$0xf]
  %v1758 = vld [vmem:[%s2 + $0x388] sm:$0xf]
  %v1759 = vld [vmem:[%s2 + $0x3d0] sm:$0xf]
  %v1760 = vld [vmem:[%s2 + $0x418] sm:$0xf]
  %v1761 = vld [vmem:[%s2 + $0x460] sm:$0xf]
  %v1762 = vld [vmem:[%s3 + $0xa] sm:$0x1]
  %v1763 = vpack.c.bf16 %v1741, %v1695
  %v1764 = vlaneseq
  %v1765 = vshrl.u32 %v1764, 7
  %v1766 = vsub.s32 0, %v1765
  %v1767 = vrot.slane %v1762, %v1766
  %v1784 = vunpack.c.l.b16 %v1746
  %v1785 = vunpack.c.l.b16 %v1747
  %v1786 = vunpack.c.l.b16 %v1748
  %v1787 = vunpack.c.l.b16 %v1749
  %v1788 = vunpack.c.l.b16 %v1750
  %v1789 = vunpack.c.l.b16 %v1751
  %v1790 = vunpack.c.l.b16 %v1752
  %v1791 = vunpack.c.l.b16 %v1753
  %v1792 = vunpack.c.l.b16 %v1754
  %v1793 = vunpack.c.l.b16 %v1755
  %v1794 = vunpack.c.l.b16 %v1756
  %v1795 = vunpack.c.l.b16 %v1757
  %v1796 = vunpack.c.l.b16 %v1758
  %v1797 = vunpack.c.l.b16 %v1759
  %v1798 = vunpack.c.l.b16 %v1760
  %v1799 = vunpack.c.l.b16 %v1761
  %v1800 = vpack.c.b16 %v1785, %v1784
  %v1801 = vpack.c.b16 %v1787, %v1786
  %v1802 = vpack.c.b16 %v1789, %v1788
  %v1803 = vpack.c.b16 %v1791, %v1790
  %v1804 = vpack.c.b16 %v1793, %v1792
  %v1805 = vpack.c.b16 %v1795, %v1794
  %v1806 = vpack.c.b16 %v1797, %v1796
  %v1807 = vpack.c.b16 %v1799, %v1798
  %1816 = vmatprep.subr.bf16.mxu0 0
  %1817 = vmatpush1.bf16.msra.mxu0 %v1807
  %1818 = vmatprep.subr.bf16.mxu0 0
  %1819 = vmatpush1.bf16.msra.mxu0 %v1806
  %1820 = vmatprep.subr.bf16.mxu0 0
  %1821 = vmatpush1.bf16.msra.mxu0 %v1805
  %1822 = vmatprep.subr.bf16.mxu0 0
  %1823 = vmatpush1.bf16.msra.mxu0 %v1804
  %1824 = vmatprep.subr.bf16.mxu0 0
  %1825 = vmatpush1.bf16.msra.mxu0 %v1803
  %1826 = vmatprep.subr.bf16.mxu0 0
  %1827 = vmatpush1.bf16.msra.mxu0 %v1802
  %1828 = vmatprep.subr.bf16.mxu0 0
  %1829 = vmatpush1.bf16.msra.mxu0 %v1801
  %1830 = vmatprep.subr.bf16.mxu0 0
  %1831 = vmatpush1.bf16.msra.mxu0 %v1800
  %1832 = vmatprep.subr.bf16.mxu0 0
  %1833 = vmatpush2.bf16.msra.mxu0 0
  %1834 = vmatprep.subr.bf16.mxu0 0
  %1835 = vmatpush2.bf16.msra.mxu0 0
  %1836 = vmatprep.subr.bf16.mxu0 0
  %1837 = vmatpush2.bf16.msra.mxu0 0
  %1838 = vmatprep.subr.bf16.mxu0 0
  %1839 = vmatpush2.bf16.msra.mxu0 0
  %1840 = vmatprep.subr.bf16.mxu0 0
  %1841 = vmatpush2.bf16.msra.mxu0 0
  %1842 = vmatprep.subr.bf16.mxu0 0
  %1843 = vmatpush2.bf16.msra.mxu0 0
  %1844 = vmatprep.subr.bf16.mxu0 0
  %1845 = vmatpush2.bf16.msra.mxu0 0
  %1846 = vmatprep.subr.bf16.mxu0 0
  %1847 = vmatpush2.bf16.msra.mxu0 0
  %1848 = vmatprep.mubr.bf16.mxu0 0
  %1849 = vmatmul.mubr.bf16.gmra.mxu0 %v1763
  %v1850 = vpop.f32.mrf.mxu0
  %v1851 = vadd.f32 %v1767, %v1850
  %v1852 = vpop.f32.mrf.mxu0
  %v1853 = vpop.f32.mrf.mxu0
  %v1854 = vadd.f32 %v1767, %v1853
  %v1855 = vpop.f32.mrf.mxu0
  %1856 = vdwg.mxu0
  %v1857 = vadd.f32 %v926, %v1851
  %v1858 = vadd.f32 %v927, %v1854
  %v1859 = vld [vmem:[%s3 + $0x12] sm:$0x1]
  %v1860 = vld [vmem:[%s3 + $0x13] sm:$0x1]
  %1861 = vadd.xlane.f32.xlu0 %v1857
  %v1862 = vpop.xlane.xlu0 %1861
  %1863 = vadd.xlane.f32.xlu0 %v1858
  %v1864 = vpop.xlane.xlu0 %1863
  %v1865 = vrcp.pop 128.0
  %v1866 = vmul.f32 %v1862, %v1865
  %v1867 = vmul.f32 %v1864, %v1865
  %v1868 = vsub.f32 %v1857, %v1866
  %v1869 = vsub.f32 %v1858, %v1867
  %v1870 = vmul.f32 %v1868, %v1868
  %v1871 = vmul.f32 %v1869, %v1869
  %1872 = vadd.xlane.f32.xlu0 %v1870
  %v1873 = vpop.xlane.xlu0 %1872
  %1874 = vadd.xlane.f32.xlu0 %v1871
  %v1875 = vpop.xlane.xlu0 %1874
  %v1876 = vmul.f32 %v1873, %v1865
  %v1877 = vmul.f32 %v1875, %v1865
  %v1878 = vadd.f32 %v1876, 1e-05
  %v1879 = vadd.f32 %v1877, 1e-05
  %v1880 = vrsqrt.pop %v1878
  %v1881 = vrsqrt.pop %v1879
  %v1882 = vmul.f32 %v1868, %v1880
  %v1883 = vmul.f32 %v1869, %v1881
  %v1884 = vlaneseq
  %v1885 = vshrl.u32 %v1884, 7
  %v1886 = vsub.s32 0, %v1885
  %v1887 = vrot.slane %v1859, %v1886
  %v1888 = vmul.f32 %v1882, %v1887
  %v1889 = vmul.f32 %v1883, %v1887
  %v1890 = vlaneseq
  %v1891 = vshrl.u32 %v1890, 7
  %v1892 = vsub.s32 0, %v1891
  %v1893 = vrot.slane %v1860, %v1892
  %v1894 = vadd.f32 %v1888, %v1893
  %v1895 = vadd.f32 %v1889, %v1893
  %v1896 = vld [vmem:[%s2 + $0x2c] sm:$0xff]
  %v1897 = vld [vmem:[%s2 + $0x34] sm:$0xf]
  %v1898 = vld [vmem:[%s2 + $0x74] sm:$0xff]
  %v1899 = vld [vmem:[%s2 + $0x7c] sm:$0xf]
  %v1900 = vld [vmem:[%s2 + $0xbc] sm:$0xff]
  %v1901 = vld [vmem:[%s2 + $0xc4] sm:$0xf]
  %v1902 = vld [vmem:[%s2 + $0x104] sm:$0xff]
  %v1903 = vld [vmem:[%s2 + $0x10c] sm:$0xf]
  %v1904 = vld [vmem:[%s2 + $0x14c] sm:$0xff]
  %v1905 = vld [vmem:[%s2 + $0x154] sm:$0xf]
  %v1906 = vld [vmem:[%s2 + $0x194] sm:$0xff]
  %v1907 = vld [vmem:[%s2 + $0x19c] sm:$0xf]
  %v1908 = vld [vmem:[%s2 + $0x1dc] sm:$0xff]
  %v1909 = vld [vmem:[%s2 + $0x1e4] sm:$0xf]
  %v1910 = vld [vmem:[%s2 + $0x224] sm:$0xff]
  %v1911 = vld [vmem:[%s2 + $0x22c] sm:$0xf]
  %v1912 = vld [vmem:[%s2 + $0x26c] sm:$0xff]
  %v1913 = vld [vmem:[%s2 + $0x274] sm:$0xf]
  %v1914 = vld [vmem:[%s2 + $0x2b4] sm:$0xff]
  %v1915 = vld [vmem:[%s2 + $0x2bc] sm:$0xf]
  %v1916 = vld [vmem:[%s2 + $0x2fc] sm:$0xff]
  %v1917 = vld [vmem:[%s2 + $0x304] sm:$0xf]
  %v1918 = vld [vmem:[%s2 + $0x344] sm:$0xff]
  %v1919 = vld [vmem:[%s2 + $0x34c] sm:$0xf]
  %v1920 = vld [vmem:[%s2 + $0x38c] sm:$0xff]
  %v1921 = vld [vmem:[%s2 + $0x394] sm:$0xf]
  %v1922 = vld [vmem:[%s2 + $0x3d4] sm:$0xff]
  %v1923 = vld [vmem:[%s2 + $0x3dc] sm:$0xf]
  %v1924 = vld [vmem:[%s2 + $0x41c] sm:$0xff]
  %v1925 = vld [vmem:[%s2 + $0x424] sm:$0xf]
  %v1926 = vld [vmem:[%s2 + $0x464] sm:$0xff]
  %v1927 = vld [vmem:[%s2 + $0x46c] sm:$0xf]
  %v1928 = vpack.c.bf16 %v1895, %v1894
  %v1961 = vunpack.c.l.b16 %v1896
  %v1962 = vunpack.c.h.b16 %v1896
  %v1963 = vunpack.c.l.b16 %v1897
  %v1964 = vunpack.c.l.b16 %v1898
  %v1965 = vunpack.c.h.b16 %v1898
  %v1966 = vunpack.c.l.b16 %v1899
  %v1967 = vunpack.c.l.b16 %v1900
  %v1968 = vunpack.c.h.b16 %v1900
  %v1969 = vunpack.c.l.b16 %v1901
  %v1970 = vunpack.c.l.b16 %v1902
  %v1971 = vunpack.c.h.b16 %v1902
  %v1972 = vunpack.c.l.b16 %v1903
  %v1973 = vunpack.c.l.b16 %v1904
  %v1974 = vunpack.c.h.b16 %v1904
  %v1975 = vunpack.c.l.b16 %v1905
  %v1976 = vunpack.c.l.b16 %v1906
  %v1977 = vunpack.c.h.b16 %v1906
  %v1978 = vunpack.c.l.b16 %v1907
  %v1979 = vunpack.c.l.b16 %v1908
  %v1980 = vunpack.c.h.b16 %v1908
  %v1981 = vunpack.c.l.b16 %v1909
  %v1982 = vunpack.c.l.b16 %v1910
  %v1983 = vunpack.c.h.b16 %v1910
  %v1984 = vunpack.c.l.b16 %v1911
  %v1985 = vunpack.c.l.b16 %v1912
  %v1986 = vunpack.c.h.b16 %v1912
  %v1987 = vunpack.c.l.b16 %v1913
  %v1988 = vunpack.c.l.b16 %v1914
  %v1989 = vunpack.c.h.b16 %v1914
  %v1990 = vunpack.c.l.b16 %v1915
  %v1991 = vunpack.c.l.b16 %v1916
  %v1992 = vunpack.c.h.b16 %v1916
  %v1993 = vunpack.c.l.b16 %v1917
  %v1994 = vunpack.c.l.b16 %v1918
  %v1995 = vunpack.c.h.b16 %v1918
  %v1996 = vunpack.c.l.b16 %v1919
  %v1997 = vunpack.c.l.b16 %v1920
  %v1998 = vunpack.c.h.b16 %v1920
  %v1999 = vunpack.c.l.b16 %v1921
  %v2000 = vunpack.c.l.b16 %v1922
  %v2001 = vunpack.c.h.b16 %v1922
  %v2002 = vunpack.c.l.b16 %v1923
  %v2003 = vunpack.c.l.b16 %v1924
  %v2004 = vunpack.c.h.b16 %v1924
  %v2005 = vunpack.c.l.b16 %v1925
  %v2006 = vunpack.c.l.b16 %v1926
  %v2007 = vunpack.c.h.b16 %v1926
  %v2008 = vunpack.c.l.b16 %v1927
  %v2009 = vpack.c.b16 %v1964, %v1961
  %v2010 = vpack.c.b16 %v1965, %v1962
  %v2011 = vpack.c.b16 %v1966, %v1963
  %v2012 = vpack.c.b16 %v1970, %v1967
  %v2013 = vpack.c.b16 %v1971, %v1968
  %v2014 = vpack.c.b16 %v1972, %v1969
  %v2015 = vpack.c.b16 %v1976, %v1973
  %v2016 = vpack.c.b16 %v1977, %v1974
  %v2017 = vpack.c.b16 %v1978, %v1975
  %v2018 = vpack.c.b16 %v1982, %v1979
  %v2019 = vpack.c.b16 %v1983, %v1980
  %v2020 = vpack.c.b16 %v1984, %v1981
  %v2021 = vpack.c.b16 %v1988, %v1985
  %v2022 = vpack.c.b16 %v1989, %v1986
  %v2023 = vpack.c.b16 %v1990, %v1987
  %v2024 = vpack.c.b16 %v1994, %v1991
  %v2025 = vpack.c.b16 %v1995, %v1992
  %v2026 = vpack.c.b16 %v1996, %v1993
  %v2027 = vpack.c.b16 %v2000, %v1997
  %v2028 = vpack.c.b16 %v2001, %v1998
  %v2029 = vpack.c.b16 %v2002, %v1999
  %v2030 = vpack.c.b16 %v2006, %v2003
  %v2031 = vpack.c.b16 %v2007, %v2004
  %v2032 = vpack.c.b16 %v2008, %v2005
  %2057 = vmatprep.subr.bf16.mxu0 %v2031
  %2058 = vmatpush1.bf16.msra.mxu0 %v2030
  %2059 = vmatprep.subr.bf16.mxu0 %v2028
  %2060 = vmatpush1.bf16.msra.mxu0 %v2027
  %2061 = vmatprep.subr.bf16.mxu0 %v2025
  %2062 = vmatpush1.bf16.msra.mxu0 %v2024
  %2063 = vmatprep.subr.bf16.mxu0 %v2022
  %2064 = vmatpush1.bf16.msra.mxu0 %v2021
  %2065 = vmatprep.subr.bf16.mxu0 %v2019
  %2066 = vmatpush1.bf16.msra.mxu0 %v2018
  %2067 = vmatprep.subr.bf16.mxu0 %v2016
  %2068 = vmatpush1.bf16.msra.mxu0 %v2015
  %2069 = vmatprep.subr.bf16.mxu0 %v2013
  %2070 = vmatpush1.bf16.msra.mxu0 %v2012
  %2071 = vmatprep.subr.bf16.mxu0 %v2010
  %2072 = vmatpush1.bf16.msra.mxu0 %v2009
  %2073 = vmatprep.subr.bf16.mxu0 0
  %2074 = vmatpush2.bf16.msra.mxu0 0
  %2075 = vmatprep.subr.bf16.mxu0 0
  %2076 = vmatpush2.bf16.msra.mxu0 0
  %2077 = vmatprep.subr.bf16.mxu0 0
  %2078 = vmatpush2.bf16.msra.mxu0 0
  %2079 = vmatprep.subr.bf16.mxu0 0
  %2080 = vmatpush2.bf16.msra.mxu0 0
  %2081 = vmatprep.subr.bf16.mxu0 0
  %2082 = vmatpush2.bf16.msra.mxu0 0
  %2083 = vmatprep.subr.bf16.mxu0 0
  %2084 = vmatpush2.bf16.msra.mxu0 0
  %2085 = vmatprep.subr.bf16.mxu0 0
  %2086 = vmatpush2.bf16.msra.mxu0 0
  %2087 = vmatprep.subr.bf16.mxu0 0
  %2088 = vmatpush2.bf16.msra.mxu0 0
  %2089 = vmatprep.mubr.bf16.mxu0 0
  %2090 = vmatmul.mubr.bf16.gmra.mxu0 %v1928
  %v2091 = vpop.f32.mrf.mxu0
  %v2092 = vadd.f32 0.0, %v2091
  %v2093 = vpop.f32.mrf.mxu0
  %v2094 = vadd.f32 0.0, %v2093
  %v2095 = vpop.f32.mrf.mxu0
  %v2096 = vadd.f32 0.0, %v2095
  %v2097 = vpop.f32.mrf.mxu0
  %v2098 = vadd.f32 0.0, %v2097
  %2099 = vdwg.mxu0
  %2100 = vmatprep.subr.bf16.mxu0 0
  %2101 = vmatpush1.bf16.msra.mxu0 %v2032
  %2102 = vmatprep.subr.bf16.mxu0 0
  %2103 = vmatpush1.bf16.msra.mxu0 %v2029
  %2104 = vmatprep.subr.bf16.mxu0 0
  %2105 = vmatpush1.bf16.msra.mxu0 %v2026
  %2106 = vmatprep.subr.bf16.mxu0 0
  %2107 = vmatpush1.bf16.msra.mxu0 %v2023
  %2108 = vmatprep.subr.bf16.mxu0 0
  %2109 = vmatpush1.bf16.msra.mxu0 %v2020
  %2110 = vmatprep.subr.bf16.mxu0 0
  %2111 = vmatpush1.bf16.msra.mxu0 %v2017
  %2112 = vmatprep.subr.bf16.mxu0 0
  %2113 = vmatpush1.bf16.msra.mxu0 %v2014
  %2114 = vmatprep.subr.bf16.mxu0 0
  %2115 = vmatpush1.bf16.msra.mxu0 %v2011
  %2116 = vmatprep.subr.bf16.mxu0 0
  %2117 = vmatpush2.bf16.msra.mxu0 0
  %2118 = vmatprep.subr.bf16.mxu0 0
  %2119 = vmatpush2.bf16.msra.mxu0 0
  %2120 = vmatprep.subr.bf16.mxu0 0
  %2121 = vmatpush2.bf16.msra.mxu0 0
  %2122 = vmatprep.subr.bf16.mxu0 0
  %2123 = vmatpush2.bf16.msra.mxu0 0
  %2124 = vmatprep.subr.bf16.mxu0 0
  %2125 = vmatpush2.bf16.msra.mxu0 0
  %2126 = vmatprep.subr.bf16.mxu0 0
  %2127 = vmatpush2.bf16.msra.mxu0 0
  %2128 = vmatprep.subr.bf16.mxu0 0
  %2129 = vmatpush2.bf16.msra.mxu0 0
  %2130 = vmatprep.subr.bf16.mxu0 0
  %2131 = vmatpush2.bf16.msra.mxu0 0
  %2132 = vmatprep.mubr.bf16.mxu0 0
  %2133 = vmatmul.mubr.bf16.gmra.mxu0 %v1928
  %v2134 = vpop.f32.mrf.mxu0
  %v2135 = vadd.f32 0.0, %v2134
  %v2136 = vpop.f32.mrf.mxu0
  %v2137 = vpop.f32.mrf.mxu0
  %v2138 = vadd.f32 0.0, %v2137
  %v2139 = vpop.f32.mrf.mxu0
  %2140 = vdwg.mxu0
  %v2141 = vld [vmem:[%s3 + $0xb] sm:$0x1]
  %v2142 = vlaneseq
  %v2143 = vshrl.u32 %v2142, 7
  %v2144 = vsub.s32 0, %v2143
  %v2145 = vrot.slane %v2141, %v2144
  %v2146 = vadd.f32 %v2092, %v2145
  %v2147 = vadd.f32 %v2096, %v2145
  %v2148 = vpack.c.bf16 %v2146, %v2146
  %v2149 = vpack.c.bf16 %v2147, %v2147
  %v2150 = vld [vmem:[%s3 + $0xc] sm:$0x1]
  %v2151 = vlaneseq
  %v2152 = vshrl.u32 %v2151, 7
  %v2153 = vsub.s32 0, %v2152
  %v2154 = vrot.slane %v2150, %v2153
  %v2155 = vadd.f32 %v2094, %v2154
  %v2156 = vadd.f32 %v2098, %v2154
  %v2157 = vpack.c.bf16 %v2155, %v2155
  %v2158 = vpack.c.bf16 %v2156, %v2156
  %v2159 = vld [vmem:[%s3 + $0xd] sm:$0x1]
  %v2160 = vlaneseq
  %v2161 = vshrl.u32 %v2160, 7
  %v2162 = vsub.s32 0, %v2161
  %v2163 = vrot.slane %v2159, %v2162
  %v2164 = vadd.f32 %v2135, %v2163
  %v2165 = vadd.f32 %v2138, %v2163
  %v2166 = vpack.c.bf16 %v2164, %v2164
  %v2167 = vpack.c.bf16 %v2165, %v2165
  %v2168 = vlaneseq
  %v2169 = vand.u32 %v2168, 127
  %vm2170 = vcmp.ge.s32.totalorder %v2169, 0
  %vm2171 = vcmp.lt.s32.totalorder %v2169, 16
  %vm2172 = vmand %vm2170, %vm2171
  %v2173 = vsel %vm2172, 1, 0
  %v2174 = vcvt.s32.f32 %v2173
  %v2175 = vpack.c.bf16 %v2174, %v2174
  %v2176 = vmul.bf16 %v2157, %v2175
  %v2177 = vmul.bf16 %v2158, %v2175
  %v2178 = vmul.bf16 %v2166, %v2175
  %v2179 = vmul.bf16 %v2167, %v2175
  %2180 = vmatprep.subr.bf16.mxu0 0
  %2181 = vmatpush1.bf16.xpose.msra.mxu0 0
  %2182 = vmatprep.subr.bf16.mxu0 0
  %2183 = vmatpush1.bf16.xpose.msra.mxu0 0
  %2184 = vmatprep.subr.bf16.mxu0 0
  %2185 = vmatpush1.bf16.xpose.msra.mxu0 0
  %2186 = vmatprep.subr.bf16.mxu0 0
  %2187 = vmatpush1.bf16.xpose.msra.mxu0 0
  %2188 = vmatprep.subr.bf16.mxu0 0
  %2189 = vmatpush1.bf16.xpose.msra.mxu0 0
  %2190 = vmatprep.subr.bf16.mxu0 0
  %2191 = vmatpush1.bf16.xpose.msra.mxu0 0
  %2192 = vmatprep.subr.bf16.mxu0 0
  %2193 = vmatpush1.bf16.xpose.msra.mxu0 0
  %2194 = vmatprep.subr.bf16.mxu0 0
  %2195 = vmatpush1.bf16.xpose.msra.mxu0 %v2176
  %2196 = vmatprep.subr.bf16.mxu0 0
  %2197 = vmatpush2.bf16.xpose.msra.mxu0 0
  %2198 = vmatprep.subr.bf16.mxu0 0
  %2199 = vmatpush2.bf16.xpose.msra.mxu0 0
  %2200 = vmatprep.subr.bf16.mxu0 0
  %2201 = vmatpush2.bf16.xpose.msra.mxu0 0
  %2202 = vmatprep.subr.bf16.mxu0 0
  %2203 = vmatpush2.bf16.xpose.msra.mxu0 0
  %2204 = vmatprep.subr.bf16.mxu0 0
  %2205 = vmatpush2.bf16.xpose.msra.mxu0 0
  %2206 = vmatprep.subr.bf16.mxu0 0
  %2207 = vmatpush2.bf16.xpose.msra.mxu0 0
  %2208 = vmatprep.subr.bf16.mxu0 0
  %2209 = vmatpush2.bf16.xpose.msra.mxu0 0
  %2210 = vmatprep.subr.bf16.mxu0 0
  %2211 = vmatpush2.bf16.xpose.msra.mxu0 0
  %2212 = vmatprep.mubr.bf16.mxu0 0
  %2213 = vmatmul.mubr.bf16.gmra.mxu0 %v2148
  %v2214 = vpop.f32.mrf.mxu0
  %v2215 = vadd.f32 0.0, %v2214
  %v2216 = vpop.f32.mrf.mxu0
  %v2217 = vpop.f32.mrf.mxu0
  %v2218 = vpop.f32.mrf.mxu0
  %2219 = vdwg.mxu0
  %2220 = vmatprep.subr.bf16.mxu0 0
  %2221 = vmatpush1.bf16.xpose.msra.mxu0 0
  %2222 = vmatprep.subr.bf16.mxu0 0
  %2223 = vmatpush1.bf16.xpose.msra.mxu0 0
  %2224 = vmatprep.subr.bf16.mxu0 0
  %2225 = vmatpush1.bf16.xpose.msra.mxu0 0
  %2226 = vmatprep.subr.bf16.mxu0 0
  %2227 = vmatpush1.bf16.xpose.msra.mxu0 0
  %2228 = vmatprep.subr.bf16.mxu0 0
  %2229 = vmatpush1.bf16.xpose.msra.mxu0 0
  %2230 = vmatprep.subr.bf16.mxu0 0
  %2231 = vmatpush1.bf16.xpose.msra.mxu0 0
  %2232 = vmatprep.subr.bf16.mxu0 0
  %2233 = vmatpush1.bf16.xpose.msra.mxu0 0
  %2234 = vmatprep.subr.bf16.mxu0 0
  %2235 = vmatpush1.bf16.xpose.msra.mxu0 %v2177
  %2236 = vmatprep.subr.bf16.mxu0 0
  %2237 = vmatpush2.bf16.xpose.msra.mxu0 0
  %2238 = vmatprep.subr.bf16.mxu0 0
  %2239 = vmatpush2.bf16.xpose.msra.mxu0 0
  %2240 = vmatprep.subr.bf16.mxu0 0
  %2241 = vmatpush2.bf16.xpose.msra.mxu0 0
  %2242 = vmatprep.subr.bf16.mxu0 0
  %2243 = vmatpush2.bf16.xpose.msra.mxu0 0
  %2244 = vmatprep.subr.bf16.mxu0 0
  %2245 = vmatpush2.bf16.xpose.msra.mxu0 0
  %2246 = vmatprep.subr.bf16.mxu0 0
  %2247 = vmatpush2.bf16.xpose.msra.mxu0 0
  %2248 = vmatprep.subr.bf16.mxu0 0
  %2249 = vmatpush2.bf16.xpose.msra.mxu0 0
  %2250 = vmatprep.subr.bf16.mxu0 0
  %2251 = vmatpush2.bf16.xpose.msra.mxu0 0
  %2252 = vmatprep.mubr.bf16.mxu0 0
  %2253 = vmatmul.mubr.bf16.gmra.mxu0 %v2149
  %v2254 = vpop.f32.mrf.mxu0
  %v2255 = vadd.f32 0.0, %v2254
  %v2256 = vpop.f32.mrf.mxu0
  %v2257 = vpop.f32.mrf.mxu0
  %v2258 = vpop.f32.mrf.mxu0
  %2259 = vdwg.mxu0
  %v2260 = vmul.f32 %v2215, 0.25
  %v2261 = vmul.f32 %v2255, 0.25
  %v2262 = vsel %vm1253, %v2260, -inf
  %2263 = vmax.xlane.f32.xlu0 %v2262
  %v2264 = vpop.xlane.xlu0 %2263
  %v2265 = vsel %vm1253, %v2261, -inf
  %2266 = vmax.xlane.f32.xlu0 %v2265
  %v2267 = vpop.xlane.xlu0 %2266
  %v2268 = vsub.f32 %v2260, %v2264
  %v2269 = vsub.f32 %v2261, %v2267
  %v2270 = vmul.f32 %v2268, 1.442695
  %v2271 = vpow.pop %v2270
  %v2272 = vmul.f32 %v2269, 1.442695
  %v2273 = vpow.pop %v2272
  %v2274 = vsel %vm1253, %v2271, 0.0
  %2275 = vadd.xlane.f32.xlu0 %v2274
  %v2276 = vpop.xlane.xlu0 %2275
  %v2277 = vsel %vm1253, %v2273, 0.0
  %2278 = vadd.xlane.f32.xlu0 %v2277
  %v2279 = vpop.xlane.xlu0 %2278
  %v2280 = vrcp.pop %v2276
  %v2281 = vrcp.pop %v2279
  %v2282 = vmul.f32 %v2271, %v2280
  %v2283 = vmul.f32 %v2273, %v2281
  %v2284 = vadd.f32 %v2282, 0.0
  %v2285 = vadd.f32 %v2283, 0.0
  %v2286 = vpack.c.bf16 %v2282, %v2282
  %v2287 = vpack.c.bf16 %v2283, %v2283
  %vm2288 = vcmp.ge.s32.totalorder %v2169, 16
  %vm2289 = vcmp.lt.s32.totalorder %v2169, 32
  %vm2290 = vmand %vm2288, %vm2289
  %v2291 = vsel %vm2290, 1, 0
  %v2292 = vcvt.s32.f32 %v2291
  %v2293 = vpack.c.bf16 %v2292, %v2292
  %v2294 = vmul.bf16 %v2157, %v2293
  %v2295 = vmul.bf16 %v2158, %v2293
  %v2296 = vmul.bf16 %v2166, %v2293
  %v2297 = vmul.bf16 %v2167, %v2293
  %2298 = vmatprep.subr.bf16.mxu0 0
  %2299 = vmatpush1.bf16.xpose.msra.mxu0 0
  %2300 = vmatprep.subr.bf16.mxu0 0
  %2301 = vmatpush1.bf16.xpose.msra.mxu0 0
  %2302 = vmatprep.subr.bf16.mxu0 0
  %2303 = vmatpush1.bf16.xpose.msra.mxu0 0
  %2304 = vmatprep.subr.bf16.mxu0 0
  %2305 = vmatpush1.bf16.xpose.msra.mxu0 0
  %2306 = vmatprep.subr.bf16.mxu0 0
  %2307 = vmatpush1.bf16.xpose.msra.mxu0 0
  %2308 = vmatprep.subr.bf16.mxu0 0
  %2309 = vmatpush1.bf16.xpose.msra.mxu0 0
  %2310 = vmatprep.subr.bf16.mxu0 0
  %2311 = vmatpush1.bf16.xpose.msra.mxu0 0
  %2312 = vmatprep.subr.bf16.mxu0 0
  %2313 = vmatpush1.bf16.xpose.msra.mxu0 %v2294
  %2314 = vmatprep.subr.bf16.mxu0 0
  %2315 = vmatpush2.bf16.xpose.msra.mxu0 0
  %2316 = vmatprep.subr.bf16.mxu0 0
  %2317 = vmatpush2.bf16.xpose.msra.mxu0 0
  %2318 = vmatprep.subr.bf16.mxu0 0
  %2319 = vmatpush2.bf16.xpose.msra.mxu0 0
  %2320 = vmatprep.subr.bf16.mxu0 0
  %2321 = vmatpush2.bf16.xpose.msra.mxu0 0
  %2322 = vmatprep.subr.bf16.mxu0 0
  %2323 = vmatpush2.bf16.xpose.msra.mxu0 0
  %2324 = vmatprep.subr.bf16.mxu0 0
  %2325 = vmatpush2.bf16.xpose.msra.mxu0 0
  %2326 = vmatprep.subr.bf16.mxu0 0
  %2327 = vmatpush2.bf16.xpose.msra.mxu0 0
  %2328 = vmatprep.subr.bf16.mxu0 0
  %2329 = vmatpush2.bf16.xpose.msra.mxu0 0
  %2330 = vmatprep.mubr.bf16.mxu0 0
  %2331 = vmatmul.mubr.bf16.gmra.mxu0 %v2148
  %v2332 = vpop.f32.mrf.mxu0
  %v2333 = vadd.f32 0.0, %v2332
  %v2334 = vpop.f32.mrf.mxu0
  %v2335 = vpop.f32.mrf.mxu0
  %v2336 = vpop.f32.mrf.mxu0
  %2337 = vdwg.mxu0
  %2338 = vmatprep.subr.bf16.mxu0 0
  %2339 = vmatpush1.bf16.xpose.msra.mxu0 0
  %2340 = vmatprep.subr.bf16.mxu0 0
  %2341 = vmatpush1.bf16.xpose.msra.mxu0 0
  %2342 = vmatprep.subr.bf16.mxu0 0
  %2343 = vmatpush1.bf16.xpose.msra.mxu0 0
  %2344 = vmatprep.subr.bf16.mxu0 0
  %2345 = vmatpush1.bf16.xpose.msra.mxu0 0
  %2346 = vmatprep.subr.bf16.mxu0 0
  %2347 = vmatpush1.bf16.xpose.msra.mxu0 0
  %2348 = vmatprep.subr.bf16.mxu0 0
  %2349 = vmatpush1.bf16.xpose.msra.mxu0 0
  %2350 = vmatprep.subr.bf16.mxu0 0
  %2351 = vmatpush1.bf16.xpose.msra.mxu0 0
  %2352 = vmatprep.subr.bf16.mxu0 0
  %2353 = vmatpush1.bf16.xpose.msra.mxu0 %v2295
  %2354 = vmatprep.subr.bf16.mxu0 0
  %2355 = vmatpush2.bf16.xpose.msra.mxu0 0
  %2356 = vmatprep.subr.bf16.mxu0 0
  %2357 = vmatpush2.bf16.xpose.msra.mxu0 0
  %2358 = vmatprep.subr.bf16.mxu0 0
  %2359 = vmatpush2.bf16.xpose.msra.mxu0 0
  %2360 = vmatprep.subr.bf16.mxu0 0
  %2361 = vmatpush2.bf16.xpose.msra.mxu0 0
  %2362 = vmatprep.subr.bf16.mxu0 0
  %2363 = vmatpush2.bf16.xpose.msra.mxu0 0
  %2364 = vmatprep.subr.bf16.mxu0 0
  %2365 = vmatpush2.bf16.xpose.msra.mxu0 0
  %2366 = vmatprep.subr.bf16.mxu0 0
  %2367 = vmatpush2.bf16.xpose.msra.mxu0 0
  %2368 = vmatprep.subr.bf16.mxu0 0
  %2369 = vmatpush2.bf16.xpose.msra.mxu0 0
  %2370 = vmatprep.mubr.bf16.mxu0 0
  %2371 = vmatmul.mubr.bf16.gmra.mxu0 %v2149
  %v2372 = vpop.f32.mrf.mxu0
  %v2373 = vadd.f32 0.0, %v2372
  %v2374 = vpop.f32.mrf.mxu0
  %v2375 = vpop.f32.mrf.mxu0
  %v2376 = vpop.f32.mrf.mxu0
  %2377 = vdwg.mxu0
  %v2378 = vmul.f32 %v2333, 0.25
  %v2379 = vmul.f32 %v2373, 0.25
  %v2380 = vsel %vm1253, %v2378, -inf
  %2381 = vmax.xlane.f32.xlu0 %v2380
  %v2382 = vpop.xlane.xlu0 %2381
  %v2383 = vsel %vm1253, %v2379, -inf
  %2384 = vmax.xlane.f32.xlu0 %v2383
  %v2385 = vpop.xlane.xlu0 %2384
  %v2386 = vsub.f32 %v2378, %v2382
  %v2387 = vsub.f32 %v2379, %v2385
  %v2388 = vmul.f32 %v2386, 1.442695
  %v2389 = vpow.pop %v2388
  %v2390 = vmul.f32 %v2387, 1.442695
  %v2391 = vpow.pop %v2390
  %v2392 = vsel %vm1253, %v2389, 0.0
  %2393 = vadd.xlane.f32.xlu0 %v2392
  %v2394 = vpop.xlane.xlu0 %2393
  %v2395 = vsel %vm1253, %v2391, 0.0
  %2396 = vadd.xlane.f32.xlu0 %v2395
  %v2397 = vpop.xlane.xlu0 %2396
  %v2398 = vrcp.pop %v2394
  %v2399 = vrcp.pop %v2397
  %v2400 = vmul.f32 %v2389, %v2398
  %v2401 = vmul.f32 %v2391, %v2399
  %v2402 = vadd.f32 %v2284, %v2400
  %v2403 = vadd.f32 %v2285, %v2401
  %v2404 = vpack.c.bf16 %v2400, %v2400
  %v2405 = vpack.c.bf16 %v2401, %v2401
  %v2407 = vsel %vm1253, %v2404, 0
  %v2410 = vsel %vm1656, %v2296, 0
  %2412 = vmatprep.subr.bf16.mxu0 0
  %2413 = vmatpush1.bf16.msra.mxu0 0
  %2414 = vmatprep.subr.bf16.mxu0 0
  %2415 = vmatpush1.bf16.msra.mxu0 0
  %2416 = vmatprep.subr.bf16.mxu0 0
  %2417 = vmatpush1.bf16.msra.mxu0 0
  %2418 = vmatprep.subr.bf16.mxu0 0
  %2419 = vmatpush1.bf16.msra.mxu0 0
  %2420 = vmatprep.subr.bf16.mxu0 0
  %2421 = vmatpush1.bf16.msra.mxu0 0
  %2422 = vmatprep.subr.bf16.mxu0 0
  %2423 = vmatpush1.bf16.msra.mxu0 0
  %2424 = vmatprep.subr.bf16.mxu0 0
  %2425 = vmatpush1.bf16.msra.mxu0 0
  %2426 = vmatprep.subr.bf16.mxu0 0
  %2427 = vmatpush1.bf16.msra.mxu0 %v2410
  %2428 = vmatprep.subr.bf16.mxu0 0
  %2429 = vmatpush2.bf16.msra.mxu0 0
  %2430 = vmatprep.subr.bf16.mxu0 0
  %2431 = vmatpush2.bf16.msra.mxu0 0
  %2432 = vmatprep.subr.bf16.mxu0 0
  %2433 = vmatpush2.bf16.msra.mxu0 0
  %2434 = vmatprep.subr.bf16.mxu0 0
  %2435 = vmatpush2.bf16.msra.mxu0 0
  %2436 = vmatprep.subr.bf16.mxu0 0
  %2437 = vmatpush2.bf16.msra.mxu0 0
  %2438 = vmatprep.subr.bf16.mxu0 0
  %2439 = vmatpush2.bf16.msra.mxu0 0
  %2440 = vmatprep.subr.bf16.mxu0 0
  %2441 = vmatpush2.bf16.msra.mxu0 0
  %2442 = vmatprep.subr.bf16.mxu0 0
  %2443 = vmatpush2.bf16.msra.mxu0 0
  %2444 = vmatprep.mubr.bf16.mxu0 0
  %2445 = vmatmul.mubr.bf16.gmra.mxu0 %v2407
  %v2446 = vpop.f32.mrf.mxu0
  %v2447 = vadd.f32 0.0, %v2446
  %v2448 = vpop.f32.mrf.mxu0
  %v2449 = vpop.f32.mrf.mxu0
  %v2450 = vpop.f32.mrf.mxu0
  %2451 = vdwg.mxu0
  %v2453 = vsel %vm1253, %v2405, 0
  %v2456 = vsel %vm1656, %v2297, 0
  %2458 = vmatprep.subr.bf16.mxu0 0
  %2459 = vmatpush1.bf16.msra.mxu0 0
  %2460 = vmatprep.subr.bf16.mxu0 0
  %2461 = vmatpush1.bf16.msra.mxu0 0
  %2462 = vmatprep.subr.bf16.mxu0 0
  %2463 = vmatpush1.bf16.msra.mxu0 0
  %2464 = vmatprep.subr.bf16.mxu0 0
  %2465 = vmatpush1.bf16.msra.mxu0 0
  %2466 = vmatprep.subr.bf16.mxu0 0
  %2467 = vmatpush1.bf16.msra.mxu0 0
  %2468 = vmatprep.subr.bf16.mxu0 0
  %2469 = vmatpush1.bf16.msra.mxu0 0
  %2470 = vmatprep.subr.bf16.mxu0 0
  %2471 = vmatpush1.bf16.msra.mxu0 0
  %2472 = vmatprep.subr.bf16.mxu0 0
  %2473 = vmatpush1.bf16.msra.mxu0 %v2456
  %2474 = vmatprep.subr.bf16.mxu0 0
  %2475 = vmatpush2.bf16.msra.mxu0 0
  %2476 = vmatprep.subr.bf16.mxu0 0
  %2477 = vmatpush2.bf16.msra.mxu0 0
  %2478 = vmatprep.subr.bf16.mxu0 0
  %2479 = vmatpush2.bf16.msra.mxu0 0
  %2480 = vmatprep.subr.bf16.mxu0 0
  %2481 = vmatpush2.bf16.msra.mxu0 0
  %2482 = vmatprep.subr.bf16.mxu0 0
  %2483 = vmatpush2.bf16.msra.mxu0 0
  %2484 = vmatprep.subr.bf16.mxu0 0
  %2485 = vmatpush2.bf16.msra.mxu0 0
  %2486 = vmatprep.subr.bf16.mxu0 0
  %2487 = vmatpush2.bf16.msra.mxu0 0
  %2488 = vmatprep.subr.bf16.mxu0 0
  %2489 = vmatpush2.bf16.msra.mxu0 0
  %2490 = vmatprep.mubr.bf16.mxu0 0
  %2491 = vmatmul.mubr.bf16.gmra.mxu0 %v2453
  %v2492 = vpop.f32.mrf.mxu0
  %v2493 = vadd.f32 0.0, %v2492
  %v2494 = vpop.f32.mrf.mxu0
  %v2495 = vpop.f32.mrf.mxu0
  %v2496 = vpop.f32.mrf.mxu0
  %2497 = vdwg.mxu0
  %v2499 = vsel %vm1253, %v2286, 0
  %v2502 = vsel %vm1656, %v2178, 0
  %2504 = vmatprep.subr.bf16.mxu0 0
  %2505 = vmatpush1.bf16.msra.mxu0 0
  %2506 = vmatprep.subr.bf16.mxu0 0
  %2507 = vmatpush1.bf16.msra.mxu0 0
  %2508 = vmatprep.subr.bf16.mxu0 0
  %2509 = vmatpush1.bf16.msra.mxu0 0
  %2510 = vmatprep.subr.bf16.mxu0 0
  %2511 = vmatpush1.bf16.msra.mxu0 0
  %2512 = vmatprep.subr.bf16.mxu0 0
  %2513 = vmatpush1.bf16.msra.mxu0 0
  %2514 = vmatprep.subr.bf16.mxu0 0
  %2515 = vmatpush1.bf16.msra.mxu0 0
  %2516 = vmatprep.subr.bf16.mxu0 0
  %2517 = vmatpush1.bf16.msra.mxu0 0
  %2518 = vmatprep.subr.bf16.mxu0 0
  %2519 = vmatpush1.bf16.msra.mxu0 %v2502
  %2520 = vmatprep.subr.bf16.mxu0 0
  %2521 = vmatpush2.bf16.msra.mxu0 0
  %2522 = vmatprep.subr.bf16.mxu0 0
  %2523 = vmatpush2.bf16.msra.mxu0 0
  %2524 = vmatprep.subr.bf16.mxu0 0
  %2525 = vmatpush2.bf16.msra.mxu0 0
  %2526 = vmatprep.subr.bf16.mxu0 0
  %2527 = vmatpush2.bf16.msra.mxu0 0
  %2528 = vmatprep.subr.bf16.mxu0 0
  %2529 = vmatpush2.bf16.msra.mxu0 0
  %2530 = vmatprep.subr.bf16.mxu0 0
  %2531 = vmatpush2.bf16.msra.mxu0 0
  %2532 = vmatprep.subr.bf16.mxu0 0
  %2533 = vmatpush2.bf16.msra.mxu0 0
  %2534 = vmatprep.subr.bf16.mxu0 0
  %2535 = vmatpush2.bf16.msra.mxu0 0
  %2536 = vmatprep.mubr.bf16.mxu0 0
  %2537 = vmatmul.mubr.bf16.gmra.mxu0 %v2499
  %v2538 = vpop.f32.mrf.mxu0
  %v2539 = vadd.f32 %v2447, %v2538
  %v2540 = vpop.f32.mrf.mxu0
  %v2541 = vpop.f32.mrf.mxu0
  %v2542 = vpop.f32.mrf.mxu0
  %2543 = vdwg.mxu0
  %v2545 = vsel %vm1253, %v2287, 0
  %v2548 = vsel %vm1656, %v2179, 0
  %2550 = vmatprep.subr.bf16.mxu0 0
  %2551 = vmatpush1.bf16.msra.mxu0 0
  %2552 = vmatprep.subr.bf16.mxu0 0
  %2553 = vmatpush1.bf16.msra.mxu0 0
  %2554 = vmatprep.subr.bf16.mxu0 0
  %2555 = vmatpush1.bf16.msra.mxu0 0
  %2556 = vmatprep.subr.bf16.mxu0 0
  %2557 = vmatpush1.bf16.msra.mxu0 0
  %2558 = vmatprep.subr.bf16.mxu0 0
  %2559 = vmatpush1.bf16.msra.mxu0 0
  %2560 = vmatprep.subr.bf16.mxu0 0
  %2561 = vmatpush1.bf16.msra.mxu0 0
  %2562 = vmatprep.subr.bf16.mxu0 0
  %2563 = vmatpush1.bf16.msra.mxu0 0
  %2564 = vmatprep.subr.bf16.mxu0 0
  %2565 = vmatpush1.bf16.msra.mxu0 %v2548
  %2566 = vmatprep.subr.bf16.mxu0 0
  %2567 = vmatpush2.bf16.msra.mxu0 0
  %2568 = vmatprep.subr.bf16.mxu0 0
  %2569 = vmatpush2.bf16.msra.mxu0 0
  %2570 = vmatprep.subr.bf16.mxu0 0
  %2571 = vmatpush2.bf16.msra.mxu0 0
  %2572 = vmatprep.subr.bf16.mxu0 0
  %2573 = vmatpush2.bf16.msra.mxu0 0
  %2574 = vmatprep.subr.bf16.mxu0 0
  %2575 = vmatpush2.bf16.msra.mxu0 0
  %2576 = vmatprep.subr.bf16.mxu0 0
  %2577 = vmatpush2.bf16.msra.mxu0 0
  %2578 = vmatprep.subr.bf16.mxu0 0
  %2579 = vmatpush2.bf16.msra.mxu0 0
  %2580 = vmatprep.subr.bf16.mxu0 0
  %2581 = vmatpush2.bf16.msra.mxu0 0
  %2582 = vmatprep.mubr.bf16.mxu0 0
  %2583 = vmatmul.mubr.bf16.gmra.mxu0 %v2545
  %v2584 = vpop.f32.mrf.mxu0
  %v2585 = vadd.f32 %v2493, %v2584
  %v2586 = vpop.f32.mrf.mxu0
  %v2587 = vpop.f32.mrf.mxu0
  %v2588 = vpop.f32.mrf.mxu0
  %2589 = vdwg.mxu0
  %vm2590 = vcmp.ge.s32.totalorder %v2169, 32
  %vm2591 = vcmp.lt.s32.totalorder %v2169, 48
  %vm2592 = vmand %vm2590, %vm2591
  %v2593 = vsel %vm2592, 1, 0
  %v2594 = vcvt.s32.f32 %v2593
  %v2595 = vpack.c.bf16 %v2594, %v2594
  %v2596 = vmul.bf16 %v2157, %v2595
  %v2597 = vmul.bf16 %v2158, %v2595
  %v2598 = vmul.bf16 %v2166, %v2595
  %v2599 = vmul.bf16 %v2167, %v2595
  %2600 = vmatprep.subr.bf16.mxu0 0
  %2601 = vmatpush1.bf16.xpose.msra.mxu0 0
  %2602 = vmatprep.subr.bf16.mxu0 0
  %2603 = vmatpush1.bf16.xpose.msra.mxu0 0
  %2604 = vmatprep.subr.bf16.mxu0 0
  %2605 = vmatpush1.bf16.xpose.msra.mxu0 0
  %2606 = vmatprep.subr.bf16.mxu0 0
  %2607 = vmatpush1.bf16.xpose.msra.mxu0 0
  %2608 = vmatprep.subr.bf16.mxu0 0
  %2609 = vmatpush1.bf16.xpose.msra.mxu0 0
  %2610 = vmatprep.subr.bf16.mxu0 0
  %2611 = vmatpush1.bf16.xpose.msra.mxu0 0
  %2612 = vmatprep.subr.bf16.mxu0 0
  %2613 = vmatpush1.bf16.xpose.msra.mxu0 0
  %2614 = vmatprep.subr.bf16.mxu0 0
  %2615 = vmatpush1.bf16.xpose.msra.mxu0 %v2596
  %2616 = vmatprep.subr.bf16.mxu0 0
  %2617 = vmatpush2.bf16.xpose.msra.mxu0 0
  %2618 = vmatprep.subr.bf16.mxu0 0
  %2619 = vmatpush2.bf16.xpose.msra.mxu0 0
  %2620 = vmatprep.subr.bf16.mxu0 0
  %2621 = vmatpush2.bf16.xpose.msra.mxu0 0
  %2622 = vmatprep.subr.bf16.mxu0 0
  %2623 = vmatpush2.bf16.xpose.msra.mxu0 0
  %2624 = vmatprep.subr.bf16.mxu0 0
  %2625 = vmatpush2.bf16.xpose.msra.mxu0 0
  %2626 = vmatprep.subr.bf16.mxu0 0
  %2627 = vmatpush2.bf16.xpose.msra.mxu0 0
  %2628 = vmatprep.subr.bf16.mxu0 0
  %2629 = vmatpush2.bf16.xpose.msra.mxu0 0
  %2630 = vmatprep.subr.bf16.mxu0 0
  %2631 = vmatpush2.bf16.xpose.msra.mxu0 0
  %2632 = vmatprep.mubr.bf16.mxu0 0
  %2633 = vmatmul.mubr.bf16.gmra.mxu0 %v2148
  %v2634 = vpop.f32.mrf.mxu0
  %v2635 = vadd.f32 0.0, %v2634
  %v2636 = vpop.f32.mrf.mxu0
  %v2637 = vpop.f32.mrf.mxu0
  %v2638 = vpop.f32.mrf.mxu0
  %2639 = vdwg.mxu0
  %2640 = vmatprep.subr.bf16.mxu0 0
  %2641 = vmatpush1.bf16.xpose.msra.mxu0 0
  %2642 = vmatprep.subr.bf16.mxu0 0
  %2643 = vmatpush1.bf16.xpose.msra.mxu0 0
  %2644 = vmatprep.subr.bf16.mxu0 0
  %2645 = vmatpush1.bf16.xpose.msra.mxu0 0
  %2646 = vmatprep.subr.bf16.mxu0 0
  %2647 = vmatpush1.bf16.xpose.msra.mxu0 0
  %2648 = vmatprep.subr.bf16.mxu0 0
  %2649 = vmatpush1.bf16.xpose.msra.mxu0 0
  %2650 = vmatprep.subr.bf16.mxu0 0
  %2651 = vmatpush1.bf16.xpose.msra.mxu0 0
  %2652 = vmatprep.subr.bf16.mxu0 0
  %2653 = vmatpush1.bf16.xpose.msra.mxu0 0
  %2654 = vmatprep.subr.bf16.mxu0 0
  %2655 = vmatpush1.bf16.xpose.msra.mxu0 %v2597
  %2656 = vmatprep.subr.bf16.mxu0 0
  %2657 = vmatpush2.bf16.xpose.msra.mxu0 0
  %2658 = vmatprep.subr.bf16.mxu0 0
  %2659 = vmatpush2.bf16.xpose.msra.mxu0 0
  %2660 = vmatprep.subr.bf16.mxu0 0
  %2661 = vmatpush2.bf16.xpose.msra.mxu0 0
  %2662 = vmatprep.subr.bf16.mxu0 0
  %2663 = vmatpush2.bf16.xpose.msra.mxu0 0
  %2664 = vmatprep.subr.bf16.mxu0 0
  %2665 = vmatpush2.bf16.xpose.msra.mxu0 0
  %2666 = vmatprep.subr.bf16.mxu0 0
  %2667 = vmatpush2.bf16.xpose.msra.mxu0 0
  %2668 = vmatprep.subr.bf16.mxu0 0
  %2669 = vmatpush2.bf16.xpose.msra.mxu0 0
  %2670 = vmatprep.subr.bf16.mxu0 0
  %2671 = vmatpush2.bf16.xpose.msra.mxu0 0
  %2672 = vmatprep.mubr.bf16.mxu0 0
  %2673 = vmatmul.mubr.bf16.gmra.mxu0 %v2149
  %v2674 = vpop.f32.mrf.mxu0
  %v2675 = vadd.f32 0.0, %v2674
  %v2676 = vpop.f32.mrf.mxu0
  %v2677 = vpop.f32.mrf.mxu0
  %v2678 = vpop.f32.mrf.mxu0
  %2679 = vdwg.mxu0
  %v2680 = vmul.f32 %v2635, 0.25
  %v2681 = vmul.f32 %v2675, 0.25
  %v2682 = vsel %vm1253, %v2680, -inf
  %2683 = vmax.xlane.f32.xlu0 %v2682
  %v2684 = vpop.xlane.xlu0 %2683
  %v2685 = vsel %vm1253, %v2681, -inf
  %2686 = vmax.xlane.f32.xlu0 %v2685
  %v2687 = vpop.xlane.xlu0 %2686
  %v2688 = vsub.f32 %v2680, %v2684
  %v2689 = vsub.f32 %v2681, %v2687
  %v2690 = vmul.f32 %v2688, 1.442695
  %v2691 = vpow.pop %v2690
  %v2692 = vmul.f32 %v2689, 1.442695
  %v2693 = vpow.pop %v2692
  %v2694 = vsel %vm1253, %v2691, 0.0
  %2695 = vadd.xlane.f32.xlu0 %v2694
  %v2696 = vpop.xlane.xlu0 %2695
  %v2697 = vsel %vm1253, %v2693, 0.0
  %2698 = vadd.xlane.f32.xlu0 %v2697
  %v2699 = vpop.xlane.xlu0 %2698
  %v2700 = vrcp.pop %v2696
  %v2701 = vrcp.pop %v2699
  %v2702 = vmul.f32 %v2691, %v2700
  %v2703 = vmul.f32 %v2693, %v2701
  %v2704 = vadd.f32 %v2402, %v2702
  %v2705 = vadd.f32 %v2403, %v2703
  %v2706 = vpack.c.bf16 %v2702, %v2702
  %v2707 = vpack.c.bf16 %v2703, %v2703
  %v2709 = vsel %vm1253, %v2706, 0
  %v2712 = vsel %vm1656, %v2598, 0
  %2714 = vmatprep.subr.bf16.mxu0 0
  %2715 = vmatpush1.bf16.msra.mxu0 0
  %2716 = vmatprep.subr.bf16.mxu0 0
  %2717 = vmatpush1.bf16.msra.mxu0 0
  %2718 = vmatprep.subr.bf16.mxu0 0
  %2719 = vmatpush1.bf16.msra.mxu0 0
  %2720 = vmatprep.subr.bf16.mxu0 0
  %2721 = vmatpush1.bf16.msra.mxu0 0
  %2722 = vmatprep.subr.bf16.mxu0 0
  %2723 = vmatpush1.bf16.msra.mxu0 0
  %2724 = vmatprep.subr.bf16.mxu0 0
  %2725 = vmatpush1.bf16.msra.mxu0 0
  %2726 = vmatprep.subr.bf16.mxu0 0
  %2727 = vmatpush1.bf16.msra.mxu0 0
  %2728 = vmatprep.subr.bf16.mxu0 0
  %2729 = vmatpush1.bf16.msra.mxu0 %v2712
  %2730 = vmatprep.subr.bf16.mxu0 0
  %2731 = vmatpush2.bf16.msra.mxu0 0
  %2732 = vmatprep.subr.bf16.mxu0 0
  %2733 = vmatpush2.bf16.msra.mxu0 0
  %2734 = vmatprep.subr.bf16.mxu0 0
  %2735 = vmatpush2.bf16.msra.mxu0 0
  %2736 = vmatprep.subr.bf16.mxu0 0
  %2737 = vmatpush2.bf16.msra.mxu0 0
  %2738 = vmatprep.subr.bf16.mxu0 0
  %2739 = vmatpush2.bf16.msra.mxu0 0
  %2740 = vmatprep.subr.bf16.mxu0 0
  %2741 = vmatpush2.bf16.msra.mxu0 0
  %2742 = vmatprep.subr.bf16.mxu0 0
  %2743 = vmatpush2.bf16.msra.mxu0 0
  %2744 = vmatprep.subr.bf16.mxu0 0
  %2745 = vmatpush2.bf16.msra.mxu0 0
  %2746 = vmatprep.mubr.bf16.mxu0 0
  %2747 = vmatmul.mubr.bf16.gmra.mxu0 %v2709
  %v2748 = vpop.f32.mrf.mxu0
  %v2749 = vadd.f32 0.0, %v2748
  %v2750 = vpop.f32.mrf.mxu0
  %v2751 = vpop.f32.mrf.mxu0
  %v2752 = vpop.f32.mrf.mxu0
  %2753 = vdwg.mxu0
  %v2755 = vsel %vm1253, %v2707, 0
  %v2758 = vsel %vm1656, %v2599, 0
  %2760 = vmatprep.subr.bf16.mxu0 0
  %2761 = vmatpush1.bf16.msra.mxu0 0
  %2762 = vmatprep.subr.bf16.mxu0 0
  %2763 = vmatpush1.bf16.msra.mxu0 0
  %2764 = vmatprep.subr.bf16.mxu0 0
  %2765 = vmatpush1.bf16.msra.mxu0 0
  %2766 = vmatprep.subr.bf16.mxu0 0
  %2767 = vmatpush1.bf16.msra.mxu0 0
  %2768 = vmatprep.subr.bf16.mxu0 0
  %2769 = vmatpush1.bf16.msra.mxu0 0
  %2770 = vmatprep.subr.bf16.mxu0 0
  %2771 = vmatpush1.bf16.msra.mxu0 0
  %2772 = vmatprep.subr.bf16.mxu0 0
  %2773 = vmatpush1.bf16.msra.mxu0 0
  %2774 = vmatprep.subr.bf16.mxu0 0
  %2775 = vmatpush1.bf16.msra.mxu0 %v2758
  %2776 = vmatprep.subr.bf16.mxu0 0
  %2777 = vmatpush2.bf16.msra.mxu0 0
  %2778 = vmatprep.subr.bf16.mxu0 0
  %2779 = vmatpush2.bf16.msra.mxu0 0
  %2780 = vmatprep.subr.bf16.mxu0 0
  %2781 = vmatpush2.bf16.msra.mxu0 0
  %2782 = vmatprep.subr.bf16.mxu0 0
  %2783 = vmatpush2.bf16.msra.mxu0 0
  %2784 = vmatprep.subr.bf16.mxu0 0
  %2785 = vmatpush2.bf16.msra.mxu0 0
  %2786 = vmatprep.subr.bf16.mxu0 0
  %2787 = vmatpush2.bf16.msra.mxu0 0
  %2788 = vmatprep.subr.bf16.mxu0 0
  %2789 = vmatpush2.bf16.msra.mxu0 0
  %2790 = vmatprep.subr.bf16.mxu0 0
  %2791 = vmatpush2.bf16.msra.mxu0 0
  %2792 = vmatprep.mubr.bf16.mxu0 0
  %2793 = vmatmul.mubr.bf16.gmra.mxu0 %v2755
  %v2794 = vpop.f32.mrf.mxu0
  %v2795 = vadd.f32 0.0, %v2794
  %v2796 = vpop.f32.mrf.mxu0
  %v2797 = vpop.f32.mrf.mxu0
  %v2798 = vpop.f32.mrf.mxu0
  %2799 = vdwg.mxu0
  %v2800 = vadd.f32 %v2539, %v2749
  %v2801 = vadd.f32 %v2585, %v2795
  %vm2802 = vcmp.ge.s32.totalorder %v2169, 48
  %vm2803 = vcmp.lt.s32.totalorder %v2169, 64
  %vm2804 = vmand %vm2802, %vm2803
  %v2805 = vsel %vm2804, 1, 0
  %v2806 = vcvt.s32.f32 %v2805
  %v2807 = vpack.c.bf16 %v2806, %v2806
  %v2808 = vmul.bf16 %v2157, %v2807
  %v2809 = vmul.bf16 %v2158, %v2807
  %v2810 = vmul.bf16 %v2166, %v2807
  %v2811 = vmul.bf16 %v2167, %v2807
  %2812 = vmatprep.subr.bf16.mxu0 0
  %2813 = vmatpush1.bf16.xpose.msra.mxu0 0
  %2814 = vmatprep.subr.bf16.mxu0 0
  %2815 = vmatpush1.bf16.xpose.msra.mxu0 0
  %2816 = vmatprep.subr.bf16.mxu0 0
  %2817 = vmatpush1.bf16.xpose.msra.mxu0 0
  %2818 = vmatprep.subr.bf16.mxu0 0
  %2819 = vmatpush1.bf16.xpose.msra.mxu0 0
  %2820 = vmatprep.subr.bf16.mxu0 0
  %2821 = vmatpush1.bf16.xpose.msra.mxu0 0
  %2822 = vmatprep.subr.bf16.mxu0 0
  %2823 = vmatpush1.bf16.xpose.msra.mxu0 0
  %2824 = vmatprep.subr.bf16.mxu0 0
  %2825 = vmatpush1.bf16.xpose.msra.mxu0 0
  %2826 = vmatprep.subr.bf16.mxu0 0
  %2827 = vmatpush1.bf16.xpose.msra.mxu0 %v2808
  %2828 = vmatprep.subr.bf16.mxu0 0
  %2829 = vmatpush2.bf16.xpose.msra.mxu0 0
  %2830 = vmatprep.subr.bf16.mxu0 0
  %2831 = vmatpush2.bf16.xpose.msra.mxu0 0
  %2832 = vmatprep.subr.bf16.mxu0 0
  %2833 = vmatpush2.bf16.xpose.msra.mxu0 0
  %2834 = vmatprep.subr.bf16.mxu0 0
  %2835 = vmatpush2.bf16.xpose.msra.mxu0 0
  %2836 = vmatprep.subr.bf16.mxu0 0
  %2837 = vmatpush2.bf16.xpose.msra.mxu0 0
  %2838 = vmatprep.subr.bf16.mxu0 0
  %2839 = vmatpush2.bf16.xpose.msra.mxu0 0
  %2840 = vmatprep.subr.bf16.mxu0 0
  %2841 = vmatpush2.bf16.xpose.msra.mxu0 0
  %2842 = vmatprep.subr.bf16.mxu0 0
  %2843 = vmatpush2.bf16.xpose.msra.mxu0 0
  %2844 = vmatprep.mubr.bf16.mxu0 0
  %2845 = vmatmul.mubr.bf16.gmra.mxu0 %v2148
  %v2846 = vpop.f32.mrf.mxu0
  %v2847 = vadd.f32 0.0, %v2846
  %v2848 = vpop.f32.mrf.mxu0
  %v2849 = vpop.f32.mrf.mxu0
  %v2850 = vpop.f32.mrf.mxu0
  %2851 = vdwg.mxu0
  %2852 = vmatprep.subr.bf16.mxu0 0
  %2853 = vmatpush1.bf16.xpose.msra.mxu0 0
  %2854 = vmatprep.subr.bf16.mxu0 0
  %2855 = vmatpush1.bf16.xpose.msra.mxu0 0
  %2856 = vmatprep.subr.bf16.mxu0 0
  %2857 = vmatpush1.bf16.xpose.msra.mxu0 0
  %2858 = vmatprep.subr.bf16.mxu0 0
  %2859 = vmatpush1.bf16.xpose.msra.mxu0 0
  %2860 = vmatprep.subr.bf16.mxu0 0
  %2861 = vmatpush1.bf16.xpose.msra.mxu0 0
  %2862 = vmatprep.subr.bf16.mxu0 0
  %2863 = vmatpush1.bf16.xpose.msra.mxu0 0
  %2864 = vmatprep.subr.bf16.mxu0 0
  %2865 = vmatpush1.bf16.xpose.msra.mxu0 0
  %2866 = vmatprep.subr.bf16.mxu0 0
  %2867 = vmatpush1.bf16.xpose.msra.mxu0 %v2809
  %2868 = vmatprep.subr.bf16.mxu0 0
  %2869 = vmatpush2.bf16.xpose.msra.mxu0 0
  %2870 = vmatprep.subr.bf16.mxu0 0
  %2871 = vmatpush2.bf16.xpose.msra.mxu0 0
  %2872 = vmatprep.subr.bf16.mxu0 0
  %2873 = vmatpush2.bf16.xpose.msra.mxu0 0
  %2874 = vmatprep.subr.bf16.mxu0 0
  %2875 = vmatpush2.bf16.xpose.msra.mxu0 0
  %2876 = vmatprep.subr.bf16.mxu0 0
  %2877 = vmatpush2.bf16.xpose.msra.mxu0 0
  %2878 = vmatprep.subr.bf16.mxu0 0
  %2879 = vmatpush2.bf16.xpose.msra.mxu0 0
  %2880 = vmatprep.subr.bf16.mxu0 0
  %2881 = vmatpush2.bf16.xpose.msra.mxu0 0
  %2882 = vmatprep.subr.bf16.mxu0 0
  %2883 = vmatpush2.bf16.xpose.msra.mxu0 0
  %2884 = vmatprep.mubr.bf16.mxu0 0
  %2885 = vmatmul.mubr.bf16.gmra.mxu0 %v2149
  %v2886 = vpop.f32.mrf.mxu0
  %v2887 = vadd.f32 0.0, %v2886
  %v2888 = vpop.f32.mrf.mxu0
  %v2889 = vpop.f32.mrf.mxu0
  %v2890 = vpop.f32.mrf.mxu0
  %2891 = vdwg.mxu0
  %v2892 = vmul.f32 %v2847, 0.25
  %v2893 = vmul.f32 %v2887, 0.25
  %v2894 = vsel %vm1253, %v2892, -inf
  %2895 = vmax.xlane.f32.xlu0 %v2894
  %v2896 = vpop.xlane.xlu0 %2895
  %v2897 = vsel %vm1253, %v2893, -inf
  %2898 = vmax.xlane.f32.xlu0 %v2897
  %v2899 = vpop.xlane.xlu0 %2898
  %v2900 = vsub.f32 %v2892, %v2896
  %v2901 = vsub.f32 %v2893, %v2899
  %v2902 = vmul.f32 %v2900, 1.442695
  %v2903 = vpow.pop %v2902
  %v2904 = vmul.f32 %v2901, 1.442695
  %v2905 = vpow.pop %v2904
  %v2906 = vsel %vm1253, %v2903, 0.0
  %2907 = vadd.xlane.f32.xlu0 %v2906
  %v2908 = vpop.xlane.xlu0 %2907
  %v2909 = vsel %vm1253, %v2905, 0.0
  %2910 = vadd.xlane.f32.xlu0 %v2909
  %v2911 = vpop.xlane.xlu0 %2910
  %v2912 = vrcp.pop %v2908
  %v2913 = vrcp.pop %v2911
  %v2914 = vmul.f32 %v2903, %v2912
  %v2915 = vmul.f32 %v2905, %v2913
  %v2916 = vadd.f32 %v2704, %v2914
  %v2917 = vadd.f32 %v2705, %v2915
  %v2918 = vpack.c.bf16 %v2914, %v2914
  %v2919 = vpack.c.bf16 %v2915, %v2915
  %v2921 = vsel %vm1253, %v2918, 0
  %v2924 = vsel %vm1656, %v2810, 0
  %2926 = vmatprep.subr.bf16.mxu0 0
  %2927 = vmatpush1.bf16.msra.mxu0 0
  %2928 = vmatprep.subr.bf16.mxu0 0
  %2929 = vmatpush1.bf16.msra.mxu0 0
  %2930 = vmatprep.subr.bf16.mxu0 0
  %2931 = vmatpush1.bf16.msra.mxu0 0
  %2932 = vmatprep.subr.bf16.mxu0 0
  %2933 = vmatpush1.bf16.msra.mxu0 0
  %2934 = vmatprep.subr.bf16.mxu0 0
  %2935 = vmatpush1.bf16.msra.mxu0 0
  %2936 = vmatprep.subr.bf16.mxu0 0
  %2937 = vmatpush1.bf16.msra.mxu0 0
  %2938 = vmatprep.subr.bf16.mxu0 0
  %2939 = vmatpush1.bf16.msra.mxu0 0
  %2940 = vmatprep.subr.bf16.mxu0 0
  %2941 = vmatpush1.bf16.msra.mxu0 %v2924
  %2942 = vmatprep.subr.bf16.mxu0 0
  %2943 = vmatpush2.bf16.msra.mxu0 0
  %2944 = vmatprep.subr.bf16.mxu0 0
  %2945 = vmatpush2.bf16.msra.mxu0 0
  %2946 = vmatprep.subr.bf16.mxu0 0
  %2947 = vmatpush2.bf16.msra.mxu0 0
  %2948 = vmatprep.subr.bf16.mxu0 0
  %2949 = vmatpush2.bf16.msra.mxu0 0
  %2950 = vmatprep.subr.bf16.mxu0 0
  %2951 = vmatpush2.bf16.msra.mxu0 0
  %2952 = vmatprep.subr.bf16.mxu0 0
  %2953 = vmatpush2.bf16.msra.mxu0 0
  %2954 = vmatprep.subr.bf16.mxu0 0
  %2955 = vmatpush2.bf16.msra.mxu0 0
  %2956 = vmatprep.subr.bf16.mxu0 0
  %2957 = vmatpush2.bf16.msra.mxu0 0
  %2958 = vmatprep.mubr.bf16.mxu0 0
  %2959 = vmatmul.mubr.bf16.gmra.mxu0 %v2921
  %v2960 = vpop.f32.mrf.mxu0
  %v2961 = vadd.f32 0.0, %v2960
  %v2962 = vpop.f32.mrf.mxu0
  %v2963 = vpop.f32.mrf.mxu0
  %v2964 = vpop.f32.mrf.mxu0
  %2965 = vdwg.mxu0
  %v2967 = vsel %vm1253, %v2919, 0
  %v2970 = vsel %vm1656, %v2811, 0
  %2972 = vmatprep.subr.bf16.mxu0 0
  %2973 = vmatpush1.bf16.msra.mxu0 0
  %2974 = vmatprep.subr.bf16.mxu0 0
  %2975 = vmatpush1.bf16.msra.mxu0 0
  %2976 = vmatprep.subr.bf16.mxu0 0
  %2977 = vmatpush1.bf16.msra.mxu0 0
  %2978 = vmatprep.subr.bf16.mxu0 0
  %2979 = vmatpush1.bf16.msra.mxu0 0
  %2980 = vmatprep.subr.bf16.mxu0 0
  %2981 = vmatpush1.bf16.msra.mxu0 0
  %2982 = vmatprep.subr.bf16.mxu0 0
  %2983 = vmatpush1.bf16.msra.mxu0 0
  %2984 = vmatprep.subr.bf16.mxu0 0
  %2985 = vmatpush1.bf16.msra.mxu0 0
  %2986 = vmatprep.subr.bf16.mxu0 0
  %2987 = vmatpush1.bf16.msra.mxu0 %v2970
  %2988 = vmatprep.subr.bf16.mxu0 0
  %2989 = vmatpush2.bf16.msra.mxu0 0
  %2990 = vmatprep.subr.bf16.mxu0 0
  %2991 = vmatpush2.bf16.msra.mxu0 0
  %2992 = vmatprep.subr.bf16.mxu0 0
  %2993 = vmatpush2.bf16.msra.mxu0 0
  %2994 = vmatprep.subr.bf16.mxu0 0
  %2995 = vmatpush2.bf16.msra.mxu0 0
  %2996 = vmatprep.subr.bf16.mxu0 0
  %2997 = vmatpush2.bf16.msra.mxu0 0
  %2998 = vmatprep.subr.bf16.mxu0 0
  %2999 = vmatpush2.bf16.msra.mxu0 0
  %3000 = vmatprep.subr.bf16.mxu0 0
  %3001 = vmatpush2.bf16.msra.mxu0 0
  %3002 = vmatprep.subr.bf16.mxu0 0
  %3003 = vmatpush2.bf16.msra.mxu0 0
  %3004 = vmatprep.mubr.bf16.mxu0 0
  %3005 = vmatmul.mubr.bf16.gmra.mxu0 %v2967
  %v3006 = vpop.f32.mrf.mxu0
  %v3007 = vadd.f32 0.0, %v3006
  %v3008 = vpop.f32.mrf.mxu0
  %v3009 = vpop.f32.mrf.mxu0
  %v3010 = vpop.f32.mrf.mxu0
  %3011 = vdwg.mxu0
  %v3012 = vadd.f32 %v2800, %v2961
  %v3013 = vadd.f32 %v2801, %v3007
  %vm3014 = vcmp.ge.s32.totalorder %v2169, 64
  %vm3015 = vcmp.lt.s32.totalorder %v2169, 80
  %vm3016 = vmand %vm3014, %vm3015
  %v3017 = vsel %vm3016, 1, 0
  %v3018 = vcvt.s32.f32 %v3017
  %v3019 = vpack.c.bf16 %v3018, %v3018
  %v3020 = vmul.bf16 %v2157, %v3019
  %v3021 = vmul.bf16 %v2158, %v3019
  %v3022 = vmul.bf16 %v2166, %v3019
  %v3023 = vmul.bf16 %v2167, %v3019
  %3024 = vmatprep.subr.bf16.mxu0 0
  %3025 = vmatpush1.bf16.xpose.msra.mxu0 0
  %3026 = vmatprep.subr.bf16.mxu0 0
  %3027 = vmatpush1.bf16.xpose.msra.mxu0 0
  %3028 = vmatprep.subr.bf16.mxu0 0
  %3029 = vmatpush1.bf16.xpose.msra.mxu0 0
  %3030 = vmatprep.subr.bf16.mxu0 0
  %3031 = vmatpush1.bf16.xpose.msra.mxu0 0
  %3032 = vmatprep.subr.bf16.mxu0 0
  %3033 = vmatpush1.bf16.xpose.msra.mxu0 0
  %3034 = vmatprep.subr.bf16.mxu0 0
  %3035 = vmatpush1.bf16.xpose.msra.mxu0 0
  %3036 = vmatprep.subr.bf16.mxu0 0
  %3037 = vmatpush1.bf16.xpose.msra.mxu0 0
  %3038 = vmatprep.subr.bf16.mxu0 0
  %3039 = vmatpush1.bf16.xpose.msra.mxu0 %v3020
  %3040 = vmatprep.subr.bf16.mxu0 0
  %3041 = vmatpush2.bf16.xpose.msra.mxu0 0
  %3042 = vmatprep.subr.bf16.mxu0 0
  %3043 = vmatpush2.bf16.xpose.msra.mxu0 0
  %3044 = vmatprep.subr.bf16.mxu0 0
  %3045 = vmatpush2.bf16.xpose.msra.mxu0 0
  %3046 = vmatprep.subr.bf16.mxu0 0
  %3047 = vmatpush2.bf16.xpose.msra.mxu0 0
  %3048 = vmatprep.subr.bf16.mxu0 0
  %3049 = vmatpush2.bf16.xpose.msra.mxu0 0
  %3050 = vmatprep.subr.bf16.mxu0 0
  %3051 = vmatpush2.bf16.xpose.msra.mxu0 0
  %3052 = vmatprep.subr.bf16.mxu0 0
  %3053 = vmatpush2.bf16.xpose.msra.mxu0 0
  %3054 = vmatprep.subr.bf16.mxu0 0
  %3055 = vmatpush2.bf16.xpose.msra.mxu0 0
  %3056 = vmatprep.mubr.bf16.mxu0 0
  %3057 = vmatmul.mubr.bf16.gmra.mxu0 %v2148
  %v3058 = vpop.f32.mrf.mxu0
  %v3059 = vadd.f32 0.0, %v3058
  %v3060 = vpop.f32.mrf.mxu0
  %v3061 = vpop.f32.mrf.mxu0
  %v3062 = vpop.f32.mrf.mxu0
  %3063 = vdwg.mxu0
  %3064 = vmatprep.subr.bf16.mxu0 0
  %3065 = vmatpush1.bf16.xpose.msra.mxu0 0
  %3066 = vmatprep.subr.bf16.mxu0 0
  %3067 = vmatpush1.bf16.xpose.msra.mxu0 0
  %3068 = vmatprep.subr.bf16.mxu0 0
  %3069 = vmatpush1.bf16.xpose.msra.mxu0 0
  %3070 = vmatprep.subr.bf16.mxu0 0
  %3071 = vmatpush1.bf16.xpose.msra.mxu0 0
  %3072 = vmatprep.subr.bf16.mxu0 0
  %3073 = vmatpush1.bf16.xpose.msra.mxu0 0
  %3074 = vmatprep.subr.bf16.mxu0 0
  %3075 = vmatpush1.bf16.xpose.msra.mxu0 0
  %3076 = vmatprep.subr.bf16.mxu0 0
  %3077 = vmatpush1.bf16.xpose.msra.mxu0 0
  %3078 = vmatprep.subr.bf16.mxu0 0
  %3079 = vmatpush1.bf16.xpose.msra.mxu0 %v3021
  %3080 = vmatprep.subr.bf16.mxu0 0
  %3081 = vmatpush2.bf16.xpose.msra.mxu0 0
  %3082 = vmatprep.subr.bf16.mxu0 0
  %3083 = vmatpush2.bf16.xpose.msra.mxu0 0
  %3084 = vmatprep.subr.bf16.mxu0 0
  %3085 = vmatpush2.bf16.xpose.msra.mxu0 0
  %3086 = vmatprep.subr.bf16.mxu0 0
  %3087 = vmatpush2.bf16.xpose.msra.mxu0 0
  %3088 = vmatprep.subr.bf16.mxu0 0
  %3089 = vmatpush2.bf16.xpose.msra.mxu0 0
  %3090 = vmatprep.subr.bf16.mxu0 0
  %3091 = vmatpush2.bf16.xpose.msra.mxu0 0
  %3092 = vmatprep.subr.bf16.mxu0 0
  %3093 = vmatpush2.bf16.xpose.msra.mxu0 0
  %3094 = vmatprep.subr.bf16.mxu0 0
  %3095 = vmatpush2.bf16.xpose.msra.mxu0 0
  %3096 = vmatprep.mubr.bf16.mxu0 0
  %3097 = vmatmul.mubr.bf16.gmra.mxu0 %v2149
  %v3098 = vpop.f32.mrf.mxu0
  %v3099 = vadd.f32 0.0, %v3098
  %v3100 = vpop.f32.mrf.mxu0
  %v3101 = vpop.f32.mrf.mxu0
  %v3102 = vpop.f32.mrf.mxu0
  %3103 = vdwg.mxu0
  %v3104 = vmul.f32 %v3059, 0.25
  %v3105 = vmul.f32 %v3099, 0.25
  %v3106 = vsel %vm1253, %v3104, -inf
  %3107 = vmax.xlane.f32.xlu0 %v3106
  %v3108 = vpop.xlane.xlu0 %3107
  %v3109 = vsel %vm1253, %v3105, -inf
  %3110 = vmax.xlane.f32.xlu0 %v3109
  %v3111 = vpop.xlane.xlu0 %3110
  %v3112 = vsub.f32 %v3104, %v3108
  %v3113 = vsub.f32 %v3105, %v3111
  %v3114 = vmul.f32 %v3112, 1.442695
  %v3115 = vpow.pop %v3114
  %v3116 = vmul.f32 %v3113, 1.442695
  %v3117 = vpow.pop %v3116
  %v3118 = vsel %vm1253, %v3115, 0.0
  %3119 = vadd.xlane.f32.xlu0 %v3118
  %v3120 = vpop.xlane.xlu0 %3119
  %v3121 = vsel %vm1253, %v3117, 0.0
  %3122 = vadd.xlane.f32.xlu0 %v3121
  %v3123 = vpop.xlane.xlu0 %3122
  %v3124 = vrcp.pop %v3120
  %v3125 = vrcp.pop %v3123
  %v3126 = vmul.f32 %v3115, %v3124
  %v3127 = vmul.f32 %v3117, %v3125
  %v3128 = vadd.f32 %v2916, %v3126
  %v3129 = vadd.f32 %v2917, %v3127
  %v3130 = vpack.c.bf16 %v3126, %v3126
  %v3131 = vpack.c.bf16 %v3127, %v3127
  %v3133 = vsel %vm1253, %v3130, 0
  %v3136 = vsel %vm1656, %v3022, 0
  %3138 = vmatprep.subr.bf16.mxu0 0
  %3139 = vmatpush1.bf16.msra.mxu0 0
  %3140 = vmatprep.subr.bf16.mxu0 0
  %3141 = vmatpush1.bf16.msra.mxu0 0
  %3142 = vmatprep.subr.bf16.mxu0 0
  %3143 = vmatpush1.bf16.msra.mxu0 0
  %3144 = vmatprep.subr.bf16.mxu0 0
  %3145 = vmatpush1.bf16.msra.mxu0 0
  %3146 = vmatprep.subr.bf16.mxu0 0
  %3147 = vmatpush1.bf16.msra.mxu0 0
  %3148 = vmatprep.subr.bf16.mxu0 0
  %3149 = vmatpush1.bf16.msra.mxu0 0
  %3150 = vmatprep.subr.bf16.mxu0 0
  %3151 = vmatpush1.bf16.msra.mxu0 0
  %3152 = vmatprep.subr.bf16.mxu0 0
  %3153 = vmatpush1.bf16.msra.mxu0 %v3136
  %3154 = vmatprep.subr.bf16.mxu0 0
  %3155 = vmatpush2.bf16.msra.mxu0 0
  %3156 = vmatprep.subr.bf16.mxu0 0
  %3157 = vmatpush2.bf16.msra.mxu0 0
  %3158 = vmatprep.subr.bf16.mxu0 0
  %3159 = vmatpush2.bf16.msra.mxu0 0
  %3160 = vmatprep.subr.bf16.mxu0 0
  %3161 = vmatpush2.bf16.msra.mxu0 0
  %3162 = vmatprep.subr.bf16.mxu0 0
  %3163 = vmatpush2.bf16.msra.mxu0 0
  %3164 = vmatprep.subr.bf16.mxu0 0
  %3165 = vmatpush2.bf16.msra.mxu0 0
  %3166 = vmatprep.subr.bf16.mxu0 0
  %3167 = vmatpush2.bf16.msra.mxu0 0
  %3168 = vmatprep.subr.bf16.mxu0 0
  %3169 = vmatpush2.bf16.msra.mxu0 0
  %3170 = vmatprep.mubr.bf16.mxu0 0
  %3171 = vmatmul.mubr.bf16.gmra.mxu0 %v3133
  %v3172 = vpop.f32.mrf.mxu0
  %v3173 = vadd.f32 0.0, %v3172
  %v3174 = vpop.f32.mrf.mxu0
  %v3175 = vpop.f32.mrf.mxu0
  %v3176 = vpop.f32.mrf.mxu0
  %3177 = vdwg.mxu0
  %v3179 = vsel %vm1253, %v3131, 0
  %v3182 = vsel %vm1656, %v3023, 0
  %3184 = vmatprep.subr.bf16.mxu0 0
  %3185 = vmatpush1.bf16.msra.mxu0 0
  %3186 = vmatprep.subr.bf16.mxu0 0
  %3187 = vmatpush1.bf16.msra.mxu0 0
  %3188 = vmatprep.subr.bf16.mxu0 0
  %3189 = vmatpush1.bf16.msra.mxu0 0
  %3190 = vmatprep.subr.bf16.mxu0 0
  %3191 = vmatpush1.bf16.msra.mxu0 0
  %3192 = vmatprep.subr.bf16.mxu0 0
  %3193 = vmatpush1.bf16.msra.mxu0 0
  %3194 = vmatprep.subr.bf16.mxu0 0
  %3195 = vmatpush1.bf16.msra.mxu0 0
  %3196 = vmatprep.subr.bf16.mxu0 0
  %3197 = vmatpush1.bf16.msra.mxu0 0
  %3198 = vmatprep.subr.bf16.mxu0 0
  %3199 = vmatpush1.bf16.msra.mxu0 %v3182
  %3200 = vmatprep.subr.bf16.mxu0 0
  %3201 = vmatpush2.bf16.msra.mxu0 0
  %3202 = vmatprep.subr.bf16.mxu0 0
  %3203 = vmatpush2.bf16.msra.mxu0 0
  %3204 = vmatprep.subr.bf16.mxu0 0
  %3205 = vmatpush2.bf16.msra.mxu0 0
  %3206 = vmatprep.subr.bf16.mxu0 0
  %3207 = vmatpush2.bf16.msra.mxu0 0
  %3208 = vmatprep.subr.bf16.mxu0 0
  %3209 = vmatpush2.bf16.msra.mxu0 0
  %3210 = vmatprep.subr.bf16.mxu0 0
  %3211 = vmatpush2.bf16.msra.mxu0 0
  %3212 = vmatprep.subr.bf16.mxu0 0
  %3213 = vmatpush2.bf16.msra.mxu0 0
  %3214 = vmatprep.subr.bf16.mxu0 0
  %3215 = vmatpush2.bf16.msra.mxu0 0
  %3216 = vmatprep.mubr.bf16.mxu0 0
  %3217 = vmatmul.mubr.bf16.gmra.mxu0 %v3179
  %v3218 = vpop.f32.mrf.mxu0
  %v3219 = vadd.f32 0.0, %v3218
  %v3220 = vpop.f32.mrf.mxu0
  %v3221 = vpop.f32.mrf.mxu0
  %v3222 = vpop.f32.mrf.mxu0
  %3223 = vdwg.mxu0
  %v3224 = vadd.f32 %v3012, %v3173
  %v3225 = vadd.f32 %v3013, %v3219
  %vm3226 = vcmp.ge.s32.totalorder %v2169, 80
  %vm3227 = vcmp.lt.s32.totalorder %v2169, 96
  %vm3228 = vmand %vm3226, %vm3227
  %v3229 = vsel %vm3228, 1, 0
  %v3230 = vcvt.s32.f32 %v3229
  %v3231 = vpack.c.bf16 %v3230, %v3230
  %v3232 = vmul.bf16 %v2157, %v3231
  %v3233 = vmul.bf16 %v2158, %v3231
  %v3234 = vmul.bf16 %v2166, %v3231
  %v3235 = vmul.bf16 %v2167, %v3231
  %3236 = vmatprep.subr.bf16.mxu0 0
  %3237 = vmatpush1.bf16.xpose.msra.mxu0 0
  %3238 = vmatprep.subr.bf16.mxu0 0
  %3239 = vmatpush1.bf16.xpose.msra.mxu0 0
  %3240 = vmatprep.subr.bf16.mxu0 0
  %3241 = vmatpush1.bf16.xpose.msra.mxu0 0
  %3242 = vmatprep.subr.bf16.mxu0 0
  %3243 = vmatpush1.bf16.xpose.msra.mxu0 0
  %3244 = vmatprep.subr.bf16.mxu0 0
  %3245 = vmatpush1.bf16.xpose.msra.mxu0 0
  %3246 = vmatprep.subr.bf16.mxu0 0
  %3247 = vmatpush1.bf16.xpose.msra.mxu0 0
  %3248 = vmatprep.subr.bf16.mxu0 0
  %3249 = vmatpush1.bf16.xpose.msra.mxu0 0
  %3250 = vmatprep.subr.bf16.mxu0 0
  %3251 = vmatpush1.bf16.xpose.msra.mxu0 %v3232
  %3252 = vmatprep.subr.bf16.mxu0 0
  %3253 = vmatpush2.bf16.xpose.msra.mxu0 0
  %3254 = vmatprep.subr.bf16.mxu0 0
  %3255 = vmatpush2.bf16.xpose.msra.mxu0 0
  %3256 = vmatprep.subr.bf16.mxu0 0
  %3257 = vmatpush2.bf16.xpose.msra.mxu0 0
  %3258 = vmatprep.subr.bf16.mxu0 0
  %3259 = vmatpush2.bf16.xpose.msra.mxu0 0
  %3260 = vmatprep.subr.bf16.mxu0 0
  %3261 = vmatpush2.bf16.xpose.msra.mxu0 0
  %3262 = vmatprep.subr.bf16.mxu0 0
  %3263 = vmatpush2.bf16.xpose.msra.mxu0 0
  %3264 = vmatprep.subr.bf16.mxu0 0
  %3265 = vmatpush2.bf16.xpose.msra.mxu0 0
  %3266 = vmatprep.subr.bf16.mxu0 0
  %3267 = vmatpush2.bf16.xpose.msra.mxu0 0
  %3268 = vmatprep.mubr.bf16.mxu0 0
  %3269 = vmatmul.mubr.bf16.gmra.mxu0 %v2148
  %v3270 = vpop.f32.mrf.mxu0
  %v3271 = vadd.f32 0.0, %v3270
  %v3272 = vpop.f32.mrf.mxu0
  %v3273 = vpop.f32.mrf.mxu0
  %v3274 = vpop.f32.mrf.mxu0
  %3275 = vdwg.mxu0
  %3276 = vmatprep.subr.bf16.mxu0 0
  %3277 = vmatpush1.bf16.xpose.msra.mxu0 0
  %3278 = vmatprep.subr.bf16.mxu0 0
  %3279 = vmatpush1.bf16.xpose.msra.mxu0 0
  %3280 = vmatprep.subr.bf16.mxu0 0
  %3281 = vmatpush1.bf16.xpose.msra.mxu0 0
  %3282 = vmatprep.subr.bf16.mxu0 0
  %3283 = vmatpush1.bf16.xpose.msra.mxu0 0
  %3284 = vmatprep.subr.bf16.mxu0 0
  %3285 = vmatpush1.bf16.xpose.msra.mxu0 0
  %3286 = vmatprep.subr.bf16.mxu0 0
  %3287 = vmatpush1.bf16.xpose.msra.mxu0 0
  %3288 = vmatprep.subr.bf16.mxu0 0
  %3289 = vmatpush1.bf16.xpose.msra.mxu0 0
  %3290 = vmatprep.subr.bf16.mxu0 0
  %3291 = vmatpush1.bf16.xpose.msra.mxu0 %v3233
  %3292 = vmatprep.subr.bf16.mxu0 0
  %3293 = vmatpush2.bf16.xpose.msra.mxu0 0
  %3294 = vmatprep.subr.bf16.mxu0 0
  %3295 = vmatpush2.bf16.xpose.msra.mxu0 0
  %3296 = vmatprep.subr.bf16.mxu0 0
  %3297 = vmatpush2.bf16.xpose.msra.mxu0 0
  %3298 = vmatprep.subr.bf16.mxu0 0
  %3299 = vmatpush2.bf16.xpose.msra.mxu0 0
  %3300 = vmatprep.subr.bf16.mxu0 0
  %3301 = vmatpush2.bf16.xpose.msra.mxu0 0
  %3302 = vmatprep.subr.bf16.mxu0 0
  %3303 = vmatpush2.bf16.xpose.msra.mxu0 0
  %3304 = vmatprep.subr.bf16.mxu0 0
  %3305 = vmatpush2.bf16.xpose.msra.mxu0 0
  %3306 = vmatprep.subr.bf16.mxu0 0
  %3307 = vmatpush2.bf16.xpose.msra.mxu0 0
  %3308 = vmatprep.mubr.bf16.mxu0 0
  %3309 = vmatmul.mubr.bf16.gmra.mxu0 %v2149
  %v3310 = vpop.f32.mrf.mxu0
  %v3311 = vadd.f32 0.0, %v3310
  %v3312 = vpop.f32.mrf.mxu0
  %v3313 = vpop.f32.mrf.mxu0
  %v3314 = vpop.f32.mrf.mxu0
  %3315 = vdwg.mxu0
  %v3316 = vmul.f32 %v3271, 0.25
  %v3317 = vmul.f32 %v3311, 0.25
  %v3318 = vsel %vm1253, %v3316, -inf
  %3319 = vmax.xlane.f32.xlu0 %v3318
  %v3320 = vpop.xlane.xlu0 %3319
  %v3321 = vsel %vm1253, %v3317, -inf
  %3322 = vmax.xlane.f32.xlu0 %v3321
  %v3323 = vpop.xlane.xlu0 %3322
  %v3324 = vsub.f32 %v3316, %v3320
  %v3325 = vsub.f32 %v3317, %v3323
  %v3326 = vmul.f32 %v3324, 1.442695
  %v3327 = vpow.pop %v3326
  %v3328 = vmul.f32 %v3325, 1.442695
  %v3329 = vpow.pop %v3328
  %v3330 = vsel %vm1253, %v3327, 0.0
  %3331 = vadd.xlane.f32.xlu0 %v3330
  %v3332 = vpop.xlane.xlu0 %3331
  %v3333 = vsel %vm1253, %v3329, 0.0
  %3334 = vadd.xlane.f32.xlu0 %v3333
  %v3335 = vpop.xlane.xlu0 %3334
  %v3336 = vrcp.pop %v3332
  %v3337 = vrcp.pop %v3335
  %v3338 = vmul.f32 %v3327, %v3336
  %v3339 = vmul.f32 %v3329, %v3337
  %v3340 = vadd.f32 %v3128, %v3338
  %v3341 = vadd.f32 %v3129, %v3339
  %v3342 = vpack.c.bf16 %v3338, %v3338
  %v3343 = vpack.c.bf16 %v3339, %v3339
  %v3345 = vsel %vm1253, %v3342, 0
  %v3348 = vsel %vm1656, %v3234, 0
  %3350 = vmatprep.subr.bf16.mxu0 0
  %3351 = vmatpush1.bf16.msra.mxu0 0
  %3352 = vmatprep.subr.bf16.mxu0 0
  %3353 = vmatpush1.bf16.msra.mxu0 0
  %3354 = vmatprep.subr.bf16.mxu0 0
  %3355 = vmatpush1.bf16.msra.mxu0 0
  %3356 = vmatprep.subr.bf16.mxu0 0
  %3357 = vmatpush1.bf16.msra.mxu0 0
  %3358 = vmatprep.subr.bf16.mxu0 0
  %3359 = vmatpush1.bf16.msra.mxu0 0
  %3360 = vmatprep.subr.bf16.mxu0 0
  %3361 = vmatpush1.bf16.msra.mxu0 0
  %3362 = vmatprep.subr.bf16.mxu0 0
  %3363 = vmatpush1.bf16.msra.mxu0 0
  %3364 = vmatprep.subr.bf16.mxu0 0
  %3365 = vmatpush1.bf16.msra.mxu0 %v3348
  %3366 = vmatprep.subr.bf16.mxu0 0
  %3367 = vmatpush2.bf16.msra.mxu0 0
  %3368 = vmatprep.subr.bf16.mxu0 0
  %3369 = vmatpush2.bf16.msra.mxu0 0
  %3370 = vmatprep.subr.bf16.mxu0 0
  %3371 = vmatpush2.bf16.msra.mxu0 0
  %3372 = vmatprep.subr.bf16.mxu0 0
  %3373 = vmatpush2.bf16.msra.mxu0 0
  %3374 = vmatprep.subr.bf16.mxu0 0
  %3375 = vmatpush2.bf16.msra.mxu0 0
  %3376 = vmatprep.subr.bf16.mxu0 0
  %3377 = vmatpush2.bf16.msra.mxu0 0
  %3378 = vmatprep.subr.bf16.mxu0 0
  %3379 = vmatpush2.bf16.msra.mxu0 0
  %3380 = vmatprep.subr.bf16.mxu0 0
  %3381 = vmatpush2.bf16.msra.mxu0 0
  %3382 = vmatprep.mubr.bf16.mxu0 0
  %3383 = vmatmul.mubr.bf16.gmra.mxu0 %v3345
  %v3384 = vpop.f32.mrf.mxu0
  %v3385 = vadd.f32 0.0, %v3384
  %v3386 = vpop.f32.mrf.mxu0
  %v3387 = vpop.f32.mrf.mxu0
  %v3388 = vpop.f32.mrf.mxu0
  %3389 = vdwg.mxu0
  %v3391 = vsel %vm1253, %v3343, 0
  %v3394 = vsel %vm1656, %v3235, 0
  %3396 = vmatprep.subr.bf16.mxu0 0
  %3397 = vmatpush1.bf16.msra.mxu0 0
  %3398 = vmatprep.subr.bf16.mxu0 0
  %3399 = vmatpush1.bf16.msra.mxu0 0
  %3400 = vmatprep.subr.bf16.mxu0 0
  %3401 = vmatpush1.bf16.msra.mxu0 0
  %3402 = vmatprep.subr.bf16.mxu0 0
  %3403 = vmatpush1.bf16.msra.mxu0 0
  %3404 = vmatprep.subr.bf16.mxu0 0
  %3405 = vmatpush1.bf16.msra.mxu0 0
  %3406 = vmatprep.subr.bf16.mxu0 0
  %3407 = vmatpush1.bf16.msra.mxu0 0
  %3408 = vmatprep.subr.bf16.mxu0 0
  %3409 = vmatpush1.bf16.msra.mxu0 0
  %3410 = vmatprep.subr.bf16.mxu0 0
  %3411 = vmatpush1.bf16.msra.mxu0 %v3394
  %3412 = vmatprep.subr.bf16.mxu0 0
  %3413 = vmatpush2.bf16.msra.mxu0 0
  %3414 = vmatprep.subr.bf16.mxu0 0
  %3415 = vmatpush2.bf16.msra.mxu0 0
  %3416 = vmatprep.subr.bf16.mxu0 0
  %3417 = vmatpush2.bf16.msra.mxu0 0
  %3418 = vmatprep.subr.bf16.mxu0 0
  %3419 = vmatpush2.bf16.msra.mxu0 0
  %3420 = vmatprep.subr.bf16.mxu0 0
  %3421 = vmatpush2.bf16.msra.mxu0 0
  %3422 = vmatprep.subr.bf16.mxu0 0
  %3423 = vmatpush2.bf16.msra.mxu0 0
  %3424 = vmatprep.subr.bf16.mxu0 0
  %3425 = vmatpush2.bf16.msra.mxu0 0
  %3426 = vmatprep.subr.bf16.mxu0 0
  %3427 = vmatpush2.bf16.msra.mxu0 0
  %3428 = vmatprep.mubr.bf16.mxu0 0
  %3429 = vmatmul.mubr.bf16.gmra.mxu0 %v3391
  %v3430 = vpop.f32.mrf.mxu0
  %v3431 = vadd.f32 0.0, %v3430
  %v3432 = vpop.f32.mrf.mxu0
  %v3433 = vpop.f32.mrf.mxu0
  %v3434 = vpop.f32.mrf.mxu0
  %3435 = vdwg.mxu0
  %v3436 = vadd.f32 %v3224, %v3385
  %v3437 = vadd.f32 %v3225, %v3431
  %vm3438 = vcmp.ge.s32.totalorder %v2169, 96
  %vm3439 = vcmp.lt.s32.totalorder %v2169, 112
  %vm3440 = vmand %vm3438, %vm3439
  %v3441 = vsel %vm3440, 1, 0
  %v3442 = vcvt.s32.f32 %v3441
  %v3443 = vpack.c.bf16 %v3442, %v3442
  %v3444 = vmul.bf16 %v2157, %v3443
  %v3445 = vmul.bf16 %v2158, %v3443
  %v3446 = vmul.bf16 %v2166, %v3443
  %v3447 = vmul.bf16 %v2167, %v3443
  %3448 = vmatprep.subr.bf16.mxu0 0
  %3449 = vmatpush1.bf16.xpose.msra.mxu0 0
  %3450 = vmatprep.subr.bf16.mxu0 0
  %3451 = vmatpush1.bf16.xpose.msra.mxu0 0
  %3452 = vmatprep.subr.bf16.mxu0 0
  %3453 = vmatpush1.bf16.xpose.msra.mxu0 0
  %3454 = vmatprep.subr.bf16.mxu0 0
  %3455 = vmatpush1.bf16.xpose.msra.mxu0 0
  %3456 = vmatprep.subr.bf16.mxu0 0
  %3457 = vmatpush1.bf16.xpose.msra.mxu0 0
  %3458 = vmatprep.subr.bf16.mxu0 0
  %3459 = vmatpush1.bf16.xpose.msra.mxu0 0
  %3460 = vmatprep.subr.bf16.mxu0 0
  %3461 = vmatpush1.bf16.xpose.msra.mxu0 0
  %3462 = vmatprep.subr.bf16.mxu0 0
  %3463 = vmatpush1.bf16.xpose.msra.mxu0 %v3444
  %3464 = vmatprep.subr.bf16.mxu0 0
  %3465 = vmatpush2.bf16.xpose.msra.mxu0 0
  %3466 = vmatprep.subr.bf16.mxu0 0
  %3467 = vmatpush2.bf16.xpose.msra.mxu0 0
  %3468 = vmatprep.subr.bf16.mxu0 0
  %3469 = vmatpush2.bf16.xpose.msra.mxu0 0
  %3470 = vmatprep.subr.bf16.mxu0 0
  %3471 = vmatpush2.bf16.xpose.msra.mxu0 0
  %3472 = vmatprep.subr.bf16.mxu0 0
  %3473 = vmatpush2.bf16.xpose.msra.mxu0 0
  %3474 = vmatprep.subr.bf16.mxu0 0
  %3475 = vmatpush2.bf16.xpose.msra.mxu0 0
  %3476 = vmatprep.subr.bf16.mxu0 0
  %3477 = vmatpush2.bf16.xpose.msra.mxu0 0
  %3478 = vmatprep.subr.bf16.mxu0 0
  %3479 = vmatpush2.bf16.xpose.msra.mxu0 0
  %3480 = vmatprep.mubr.bf16.mxu0 0
  %3481 = vmatmul.mubr.bf16.gmra.mxu0 %v2148
  %v3482 = vpop.f32.mrf.mxu0
  %v3483 = vadd.f32 0.0, %v3482
  %v3484 = vpop.f32.mrf.mxu0
  %v3485 = vpop.f32.mrf.mxu0
  %v3486 = vpop.f32.mrf.mxu0
  %3487 = vdwg.mxu0
  %3488 = vmatprep.subr.bf16.mxu0 0
  %3489 = vmatpush1.bf16.xpose.msra.mxu0 0
  %3490 = vmatprep.subr.bf16.mxu0 0
  %3491 = vmatpush1.bf16.xpose.msra.mxu0 0
  %3492 = vmatprep.subr.bf16.mxu0 0
  %3493 = vmatpush1.bf16.xpose.msra.mxu0 0
  %3494 = vmatprep.subr.bf16.mxu0 0
  %3495 = vmatpush1.bf16.xpose.msra.mxu0 0
  %3496 = vmatprep.subr.bf16.mxu0 0
  %3497 = vmatpush1.bf16.xpose.msra.mxu0 0
  %3498 = vmatprep.subr.bf16.mxu0 0
  %3499 = vmatpush1.bf16.xpose.msra.mxu0 0
  %3500 = vmatprep.subr.bf16.mxu0 0
  %3501 = vmatpush1.bf16.xpose.msra.mxu0 0
  %3502 = vmatprep.subr.bf16.mxu0 0
  %3503 = vmatpush1.bf16.xpose.msra.mxu0 %v3445
  %3504 = vmatprep.subr.bf16.mxu0 0
  %3505 = vmatpush2.bf16.xpose.msra.mxu0 0
  %3506 = vmatprep.subr.bf16.mxu0 0
  %3507 = vmatpush2.bf16.xpose.msra.mxu0 0
  %3508 = vmatprep.subr.bf16.mxu0 0
  %3509 = vmatpush2.bf16.xpose.msra.mxu0 0
  %3510 = vmatprep.subr.bf16.mxu0 0
  %3511 = vmatpush2.bf16.xpose.msra.mxu0 0
  %3512 = vmatprep.subr.bf16.mxu0 0
  %3513 = vmatpush2.bf16.xpose.msra.mxu0 0
  %3514 = vmatprep.subr.bf16.mxu0 0
  %3515 = vmatpush2.bf16.xpose.msra.mxu0 0
  %3516 = vmatprep.subr.bf16.mxu0 0
  %3517 = vmatpush2.bf16.xpose.msra.mxu0 0
  %3518 = vmatprep.subr.bf16.mxu0 0
  %3519 = vmatpush2.bf16.xpose.msra.mxu0 0
  %3520 = vmatprep.mubr.bf16.mxu0 0
  %3521 = vmatmul.mubr.bf16.gmra.mxu0 %v2149
  %v3522 = vpop.f32.mrf.mxu0
  %v3523 = vadd.f32 0.0, %v3522
  %v3524 = vpop.f32.mrf.mxu0
  %v3525 = vpop.f32.mrf.mxu0
  %v3526 = vpop.f32.mrf.mxu0
  %3527 = vdwg.mxu0
  %v3528 = vmul.f32 %v3483, 0.25
  %v3529 = vmul.f32 %v3523, 0.25
  %v3530 = vsel %vm1253, %v3528, -inf
  %3531 = vmax.xlane.f32.xlu0 %v3530
  %v3532 = vpop.xlane.xlu0 %3531
  %v3533 = vsel %vm1253, %v3529, -inf
  %3534 = vmax.xlane.f32.xlu0 %v3533
  %v3535 = vpop.xlane.xlu0 %3534
  %v3536 = vsub.f32 %v3528, %v3532
  %v3537 = vsub.f32 %v3529, %v3535
  %v3538 = vmul.f32 %v3536, 1.442695
  %v3539 = vpow.pop %v3538
  %v3540 = vmul.f32 %v3537, 1.442695
  %v3541 = vpow.pop %v3540
  %v3542 = vsel %vm1253, %v3539, 0.0
  %3543 = vadd.xlane.f32.xlu0 %v3542
  %v3544 = vpop.xlane.xlu0 %3543
  %v3545 = vsel %vm1253, %v3541, 0.0
  %3546 = vadd.xlane.f32.xlu0 %v3545
  %v3547 = vpop.xlane.xlu0 %3546
  %v3548 = vrcp.pop %v3544
  %v3549 = vrcp.pop %v3547
  %v3550 = vmul.f32 %v3539, %v3548
  %v3551 = vmul.f32 %v3541, %v3549
  %v3552 = vadd.f32 %v3340, %v3550
  %v3553 = vadd.f32 %v3341, %v3551
  %v3554 = vpack.c.bf16 %v3550, %v3550
  %v3555 = vpack.c.bf16 %v3551, %v3551
  %v3557 = vsel %vm1253, %v3554, 0
  %v3560 = vsel %vm1656, %v3446, 0
  %3562 = vmatprep.subr.bf16.mxu0 0
  %3563 = vmatpush1.bf16.msra.mxu0 0
  %3564 = vmatprep.subr.bf16.mxu0 0
  %3565 = vmatpush1.bf16.msra.mxu0 0
  %3566 = vmatprep.subr.bf16.mxu0 0
  %3567 = vmatpush1.bf16.msra.mxu0 0
  %3568 = vmatprep.subr.bf16.mxu0 0
  %3569 = vmatpush1.bf16.msra.mxu0 0
  %3570 = vmatprep.subr.bf16.mxu0 0
  %3571 = vmatpush1.bf16.msra.mxu0 0
  %3572 = vmatprep.subr.bf16.mxu0 0
  %3573 = vmatpush1.bf16.msra.mxu0 0
  %3574 = vmatprep.subr.bf16.mxu0 0
  %3575 = vmatpush1.bf16.msra.mxu0 0
  %3576 = vmatprep.subr.bf16.mxu0 0
  %3577 = vmatpush1.bf16.msra.mxu0 %v3560
  %3578 = vmatprep.subr.bf16.mxu0 0
  %3579 = vmatpush2.bf16.msra.mxu0 0
  %3580 = vmatprep.subr.bf16.mxu0 0
  %3581 = vmatpush2.bf16.msra.mxu0 0
  %3582 = vmatprep.subr.bf16.mxu0 0
  %3583 = vmatpush2.bf16.msra.mxu0 0
  %3584 = vmatprep.subr.bf16.mxu0 0
  %3585 = vmatpush2.bf16.msra.mxu0 0
  %3586 = vmatprep.subr.bf16.mxu0 0
  %3587 = vmatpush2.bf16.msra.mxu0 0
  %3588 = vmatprep.subr.bf16.mxu0 0
  %3589 = vmatpush2.bf16.msra.mxu0 0
  %3590 = vmatprep.subr.bf16.mxu0 0
  %3591 = vmatpush2.bf16.msra.mxu0 0
  %3592 = vmatprep.subr.bf16.mxu0 0
  %3593 = vmatpush2.bf16.msra.mxu0 0
  %3594 = vmatprep.mubr.bf16.mxu0 0
  %3595 = vmatmul.mubr.bf16.gmra.mxu0 %v3557
  %v3596 = vpop.f32.mrf.mxu0
  %v3597 = vadd.f32 0.0, %v3596
  %v3598 = vpop.f32.mrf.mxu0
  %v3599 = vpop.f32.mrf.mxu0
  %v3600 = vpop.f32.mrf.mxu0
  %3601 = vdwg.mxu0
  %v3603 = vsel %vm1253, %v3555, 0
  %v3606 = vsel %vm1656, %v3447, 0
  %3608 = vmatprep.subr.bf16.mxu0 0
  %3609 = vmatpush1.bf16.msra.mxu0 0
  %3610 = vmatprep.subr.bf16.mxu0 0
  %3611 = vmatpush1.bf16.msra.mxu0 0
  %3612 = vmatprep.subr.bf16.mxu0 0
  %3613 = vmatpush1.bf16.msra.mxu0 0
  %3614 = vmatprep.subr.bf16.mxu0 0
  %3615 = vmatpush1.bf16.msra.mxu0 0
  %3616 = vmatprep.subr.bf16.mxu0 0
  %3617 = vmatpush1.bf16.msra.mxu0 0
  %3618 = vmatprep.subr.bf16.mxu0 0
  %3619 = vmatpush1.bf16.msra.mxu0 0
  %3620 = vmatprep.subr.bf16.mxu0 0
  %3621 = vmatpush1.bf16.msra.mxu0 0
  %3622 = vmatprep.subr.bf16.mxu0 0
  %3623 = vmatpush1.bf16.msra.mxu0 %v3606
  %3624 = vmatprep.subr.bf16.mxu0 0
  %3625 = vmatpush2.bf16.msra.mxu0 0
  %3626 = vmatprep.subr.bf16.mxu0 0
  %3627 = vmatpush2.bf16.msra.mxu0 0
  %3628 = vmatprep.subr.bf16.mxu0 0
  %3629 = vmatpush2.bf16.msra.mxu0 0
  %3630 = vmatprep.subr.bf16.mxu0 0
  %3631 = vmatpush2.bf16.msra.mxu0 0
  %3632 = vmatprep.subr.bf16.mxu0 0
  %3633 = vmatpush2.bf16.msra.mxu0 0
  %3634 = vmatprep.subr.bf16.mxu0 0
  %3635 = vmatpush2.bf16.msra.mxu0 0
  %3636 = vmatprep.subr.bf16.mxu0 0
  %3637 = vmatpush2.bf16.msra.mxu0 0
  %3638 = vmatprep.subr.bf16.mxu0 0
  %3639 = vmatpush2.bf16.msra.mxu0 0
  %3640 = vmatprep.mubr.bf16.mxu0 0
  %3641 = vmatmul.mubr.bf16.gmra.mxu0 %v3603
  %v3642 = vpop.f32.mrf.mxu0
  %v3643 = vadd.f32 0.0, %v3642
  %v3644 = vpop.f32.mrf.mxu0
  %v3645 = vpop.f32.mrf.mxu0
  %v3646 = vpop.f32.mrf.mxu0
  %3647 = vdwg.mxu0
  %v3648 = vadd.f32 %v3436, %v3597
  %v3649 = vadd.f32 %v3437, %v3643
  %vm3650 = vcmp.ge.s32.totalorder %v2169, 112
  %vm3651 = vcmp.lt.s32.totalorder %v2169, 128
  %vm3652 = vmand %vm3650, %vm3651
  %v3653 = vsel %vm3652, 1, 0
  %v3654 = vcvt.s32.f32 %v3653
  %v3655 = vpack.c.bf16 %v3654, %v3654
  %v3656 = vmul.bf16 %v2157, %v3655
  %v3657 = vmul.bf16 %v2158, %v3655
  %v3658 = vmul.bf16 %v2166, %v3655
  %v3659 = vmul.bf16 %v2167, %v3655
  %3660 = vmatprep.subr.bf16.mxu0 0
  %3661 = vmatpush1.bf16.xpose.msra.mxu0 0
  %3662 = vmatprep.subr.bf16.mxu0 0
  %3663 = vmatpush1.bf16.xpose.msra.mxu0 0
  %3664 = vmatprep.subr.bf16.mxu0 0
  %3665 = vmatpush1.bf16.xpose.msra.mxu0 0
  %3666 = vmatprep.subr.bf16.mxu0 0
  %3667 = vmatpush1.bf16.xpose.msra.mxu0 0
  %3668 = vmatprep.subr.bf16.mxu0 0
  %3669 = vmatpush1.bf16.xpose.msra.mxu0 0
  %3670 = vmatprep.subr.bf16.mxu0 0
  %3671 = vmatpush1.bf16.xpose.msra.mxu0 0
  %3672 = vmatprep.subr.bf16.mxu0 0
  %3673 = vmatpush1.bf16.xpose.msra.mxu0 0
  %3674 = vmatprep.subr.bf16.mxu0 0
  %3675 = vmatpush1.bf16.xpose.msra.mxu0 %v3656
  %3676 = vmatprep.subr.bf16.mxu0 0
  %3677 = vmatpush2.bf16.xpose.msra.mxu0 0
  %3678 = vmatprep.subr.bf16.mxu0 0
  %3679 = vmatpush2.bf16.xpose.msra.mxu0 0
  %3680 = vmatprep.subr.bf16.mxu0 0
  %3681 = vmatpush2.bf16.xpose.msra.mxu0 0
  %3682 = vmatprep.subr.bf16.mxu0 0
  %3683 = vmatpush2.bf16.xpose.msra.mxu0 0
  %3684 = vmatprep.subr.bf16.mxu0 0
  %3685 = vmatpush2.bf16.xpose.msra.mxu0 0
  %3686 = vmatprep.subr.bf16.mxu0 0
  %3687 = vmatpush2.bf16.xpose.msra.mxu0 0
  %3688 = vmatprep.subr.bf16.mxu0 0
  %3689 = vmatpush2.bf16.xpose.msra.mxu0 0
  %3690 = vmatprep.subr.bf16.mxu0 0
  %3691 = vmatpush2.bf16.xpose.msra.mxu0 0
  %3692 = vmatprep.mubr.bf16.mxu0 0
  %3693 = vmatmul.mubr.bf16.gmra.mxu0 %v2148
  %v3694 = vpop.f32.mrf.mxu0
  %v3695 = vadd.f32 0.0, %v3694
  %v3696 = vpop.f32.mrf.mxu0
  %v3697 = vpop.f32.mrf.mxu0
  %v3698 = vpop.f32.mrf.mxu0
  %3699 = vdwg.mxu0
  %3700 = vmatprep.subr.bf16.mxu0 0
  %3701 = vmatpush1.bf16.xpose.msra.mxu0 0
  %3702 = vmatprep.subr.bf16.mxu0 0
  %3703 = vmatpush1.bf16.xpose.msra.mxu0 0
  %3704 = vmatprep.subr.bf16.mxu0 0
  %3705 = vmatpush1.bf16.xpose.msra.mxu0 0
  %3706 = vmatprep.subr.bf16.mxu0 0
  %3707 = vmatpush1.bf16.xpose.msra.mxu0 0
  %3708 = vmatprep.subr.bf16.mxu0 0
  %3709 = vmatpush1.bf16.xpose.msra.mxu0 0
  %3710 = vmatprep.subr.bf16.mxu0 0
  %3711 = vmatpush1.bf16.xpose.msra.mxu0 0
  %3712 = vmatprep.subr.bf16.mxu0 0
  %3713 = vmatpush1.bf16.xpose.msra.mxu0 0
  %3714 = vmatprep.subr.bf16.mxu0 0
  %3715 = vmatpush1.bf16.xpose.msra.mxu0 %v3657
  %3716 = vmatprep.subr.bf16.mxu0 0
  %3717 = vmatpush2.bf16.xpose.msra.mxu0 0
  %3718 = vmatprep.subr.bf16.mxu0 0
  %3719 = vmatpush2.bf16.xpose.msra.mxu0 0
  %3720 = vmatprep.subr.bf16.mxu0 0
  %3721 = vmatpush2.bf16.xpose.msra.mxu0 0
  %3722 = vmatprep.subr.bf16.mxu0 0
  %3723 = vmatpush2.bf16.xpose.msra.mxu0 0
  %3724 = vmatprep.subr.bf16.mxu0 0
  %3725 = vmatpush2.bf16.xpose.msra.mxu0 0
  %3726 = vmatprep.subr.bf16.mxu0 0
  %3727 = vmatpush2.bf16.xpose.msra.mxu0 0
  %3728 = vmatprep.subr.bf16.mxu0 0
  %3729 = vmatpush2.bf16.xpose.msra.mxu0 0
  %3730 = vmatprep.subr.bf16.mxu0 0
  %3731 = vmatpush2.bf16.xpose.msra.mxu0 0
  %3732 = vmatprep.mubr.bf16.mxu0 0
  %3733 = vmatmul.mubr.bf16.gmra.mxu0 %v2149
  %v3734 = vpop.f32.mrf.mxu0
  %v3735 = vadd.f32 0.0, %v3734
  %v3736 = vpop.f32.mrf.mxu0
  %v3737 = vpop.f32.mrf.mxu0
  %v3738 = vpop.f32.mrf.mxu0
  %3739 = vdwg.mxu0
  %v3740 = vmul.f32 %v3695, 0.25
  %v3741 = vmul.f32 %v3735, 0.25
  %v3742 = vsel %vm1253, %v3740, -inf
  %3743 = vmax.xlane.f32.xlu0 %v3742
  %v3744 = vpop.xlane.xlu0 %3743
  %v3745 = vsel %vm1253, %v3741, -inf
  %3746 = vmax.xlane.f32.xlu0 %v3745
  %v3747 = vpop.xlane.xlu0 %3746
  %v3748 = vsub.f32 %v3740, %v3744
  %v3749 = vsub.f32 %v3741, %v3747
  %v3750 = vmul.f32 %v3748, 1.442695
  %v3751 = vpow.pop %v3750
  %v3752 = vmul.f32 %v3749, 1.442695
  %v3753 = vpow.pop %v3752
  %v3754 = vsel %vm1253, %v3751, 0.0
  %3755 = vadd.xlane.f32.xlu0 %v3754
  %v3756 = vpop.xlane.xlu0 %3755
  %v3757 = vsel %vm1253, %v3753, 0.0
  %3758 = vadd.xlane.f32.xlu0 %v3757
  %v3759 = vpop.xlane.xlu0 %3758
  %v3760 = vrcp.pop %v3756
  %v3761 = vrcp.pop %v3759
  %v3762 = vmul.f32 %v3751, %v3760
  %v3763 = vmul.f32 %v3753, %v3761
  %v3764 = vadd.f32 %v3552, %v3762
  %v3765 = vadd.f32 %v3553, %v3763
  %v3766 = vpack.c.bf16 %v3762, %v3762
  %v3767 = vpack.c.bf16 %v3763, %v3763
  %v3769 = vsel %vm1253, %v3766, 0
  %v3772 = vsel %vm1656, %v3658, 0
  %3774 = vmatprep.subr.bf16.mxu0 0
  %3775 = vmatpush1.bf16.msra.mxu0 0
  %3776 = vmatprep.subr.bf16.mxu0 0
  %3777 = vmatpush1.bf16.msra.mxu0 0
  %3778 = vmatprep.subr.bf16.mxu0 0
  %3779 = vmatpush1.bf16.msra.mxu0 0
  %3780 = vmatprep.subr.bf16.mxu0 0
  %3781 = vmatpush1.bf16.msra.mxu0 0
  %3782 = vmatprep.subr.bf16.mxu0 0
  %3783 = vmatpush1.bf16.msra.mxu0 0
  %3784 = vmatprep.subr.bf16.mxu0 0
  %3785 = vmatpush1.bf16.msra.mxu0 0
  %3786 = vmatprep.subr.bf16.mxu0 0
  %3787 = vmatpush1.bf16.msra.mxu0 0
  %3788 = vmatprep.subr.bf16.mxu0 0
  %3789 = vmatpush1.bf16.msra.mxu0 %v3772
  %3790 = vmatprep.subr.bf16.mxu0 0
  %3791 = vmatpush2.bf16.msra.mxu0 0
  %3792 = vmatprep.subr.bf16.mxu0 0
  %3793 = vmatpush2.bf16.msra.mxu0 0
  %3794 = vmatprep.subr.bf16.mxu0 0
  %3795 = vmatpush2.bf16.msra.mxu0 0
  %3796 = vmatprep.subr.bf16.mxu0 0
  %3797 = vmatpush2.bf16.msra.mxu0 0
  %3798 = vmatprep.subr.bf16.mxu0 0
  %3799 = vmatpush2.bf16.msra.mxu0 0
  %3800 = vmatprep.subr.bf16.mxu0 0
  %3801 = vmatpush2.bf16.msra.mxu0 0
  %3802 = vmatprep.subr.bf16.mxu0 0
  %3803 = vmatpush2.bf16.msra.mxu0 0
  %3804 = vmatprep.subr.bf16.mxu0 0
  %3805 = vmatpush2.bf16.msra.mxu0 0
  %3806 = vmatprep.mubr.bf16.mxu0 0
  %3807 = vmatmul.mubr.bf16.gmra.mxu0 %v3769
  %v3808 = vpop.f32.mrf.mxu0
  %v3809 = vadd.f32 0.0, %v3808
  %v3810 = vpop.f32.mrf.mxu0
  %v3811 = vpop.f32.mrf.mxu0
  %v3812 = vpop.f32.mrf.mxu0
  %3813 = vdwg.mxu0
  %v3815 = vsel %vm1253, %v3767, 0
  %v3818 = vsel %vm1656, %v3659, 0
  %3820 = vmatprep.subr.bf16.mxu0 0
  %3821 = vmatpush1.bf16.msra.mxu0 0
  %3822 = vmatprep.subr.bf16.mxu0 0
  %3823 = vmatpush1.bf16.msra.mxu0 0
  %3824 = vmatprep.subr.bf16.mxu0 0
  %3825 = vmatpush1.bf16.msra.mxu0 0
  %3826 = vmatprep.subr.bf16.mxu0 0
  %3827 = vmatpush1.bf16.msra.mxu0 0
  %3828 = vmatprep.subr.bf16.mxu0 0
  %3829 = vmatpush1.bf16.msra.mxu0 0
  %3830 = vmatprep.subr.bf16.mxu0 0
  %3831 = vmatpush1.bf16.msra.mxu0 0
  %3832 = vmatprep.subr.bf16.mxu0 0
  %3833 = vmatpush1.bf16.msra.mxu0 0
  %3834 = vmatprep.subr.bf16.mxu0 0
  %3835 = vmatpush1.bf16.msra.mxu0 %v3818
  %3836 = vmatprep.subr.bf16.mxu0 0
  %3837 = vmatpush2.bf16.msra.mxu0 0
  %3838 = vmatprep.subr.bf16.mxu0 0
  %3839 = vmatpush2.bf16.msra.mxu0 0
  %3840 = vmatprep.subr.bf16.mxu0 0
  %3841 = vmatpush2.bf16.msra.mxu0 0
  %3842 = vmatprep.subr.bf16.mxu0 0
  %3843 = vmatpush2.bf16.msra.mxu0 0
  %3844 = vmatprep.subr.bf16.mxu0 0
  %3845 = vmatpush2.bf16.msra.mxu0 0
  %3846 = vmatprep.subr.bf16.mxu0 0
  %3847 = vmatpush2.bf16.msra.mxu0 0
  %3848 = vmatprep.subr.bf16.mxu0 0
  %3849 = vmatpush2.bf16.msra.mxu0 0
  %3850 = vmatprep.subr.bf16.mxu0 0
  %3851 = vmatpush2.bf16.msra.mxu0 0
  %3852 = vmatprep.mubr.bf16.mxu0 0
  %3853 = vmatmul.mubr.bf16.gmra.mxu0 %v3815
  %v3854 = vpop.f32.mrf.mxu0
  %v3855 = vadd.f32 0.0, %v3854
  %v3856 = vpop.f32.mrf.mxu0
  %v3857 = vpop.f32.mrf.mxu0
  %v3858 = vpop.f32.mrf.mxu0
  %3859 = vdwg.mxu0
  %v3860 = vadd.f32 %v3648, %v3809
  %v3861 = vadd.f32 %v3649, %v3855
  %v3862 = vmul.f32 %v3764, 0.125
  %v3863 = vmul.f32 %v3765, 0.125
  %v3864 = vld [vmem:[%s2 + $0x38] sm:$0xf]
  %v3865 = vld [vmem:[%s2 + $0x80] sm:$0xf]
  %v3866 = vld [vmem:[%s2 + $0xc8] sm:$0xf]
  %v3867 = vld [vmem:[%s2 + $0x110] sm:$0xf]
  %v3868 = vld [vmem:[%s2 + $0x158] sm:$0xf]
  %v3869 = vld [vmem:[%s2 + $0x1a0] sm:$0xf]
  %v3870 = vld [vmem:[%s2 + $0x1e8] sm:$0xf]
  %v3871 = vld [vmem:[%s2 + $0x230] sm:$0xf]
  %v3872 = vld [vmem:[%s2 + $0x278] sm:$0xf]
  %v3873 = vld [vmem:[%s2 + $0x2c0] sm:$0xf]
  %v3874 = vld [vmem:[%s2 + $0x308] sm:$0xf]
  %v3875 = vld [vmem:[%s2 + $0x350] sm:$0xf]
  %v3876 = vld [vmem:[%s2 + $0x398] sm:$0xf]
  %v3877 = vld [vmem:[%s2 + $0x3e0] sm:$0xf]
  %v3878 = vld [vmem:[%s2 + $0x428] sm:$0xf]
  %v3879 = vld [vmem:[%s2 + $0x470] sm:$0xf]
  %v3880 = vld [vmem:[%s3 + $0xe] sm:$0x1]
  %v3881 = vpack.c.bf16 %v3861, %v3860
  %v3882 = vlaneseq
  %v3883 = vshrl.u32 %v3882, 7
  %v3884 = vsub.s32 0, %v3883
  %v3885 = vrot.slane %v3880, %v3884
  %v3902 = vunpack.c.l.b16 %v3864
  %v3903 = vunpack.c.l.b16 %v3865
  %v3904 = vunpack.c.l.b16 %v3866
  %v3905 = vunpack.c.l.b16 %v3867
  %v3906 = vunpack.c.l.b16 %v3868
  %v3907 = vunpack.c.l.b16 %v3869
  %v3908 = vunpack.c.l.b16 %v3870
  %v3909 = vunpack.c.l.b16 %v3871
  %v3910 = vunpack.c.l.b16 %v3872
  %v3911 = vunpack.c.l.b16 %v3873
  %v3912 = vunpack.c.l.b16 %v3874
  %v3913 = vunpack.c.l.b16 %v3875
  %v3914 = vunpack.c.l.b16 %v3876
  %v3915 = vunpack.c.l.b16 %v3877
  %v3916 = vunpack.c.l.b16 %v3878
  %v3917 = vunpack.c.l.b16 %v3879
  %v3918 = vpack.c.b16 %v3903, %v3902
  %v3919 = vpack.c.b16 %v3905, %v3904
  %v3920 = vpack.c.b16 %v3907, %v3906
  %v3921 = vpack.c.b16 %v3909, %v3908
  %v3922 = vpack.c.b16 %v3911, %v3910
  %v3923 = vpack.c.b16 %v3913, %v3912
  %v3924 = vpack.c.b16 %v3915, %v3914
  %v3925 = vpack.c.b16 %v3917, %v3916
  %3934 = vmatprep.subr.bf16.mxu0 0
  %3935 = vmatpush1.bf16.msra.mxu0 %v3925
  %3936 = vmatprep.subr.bf16.mxu0 0
  %3937 = vmatpush1.bf16.msra.mxu0 %v3924
  %3938 = vmatprep.subr.bf16.mxu0 0
  %3939 = vmatpush1.bf16.msra.mxu0 %v3923
  %3940 = vmatprep.subr.bf16.mxu0 0
  %3941 = vmatpush1.bf16.msra.mxu0 %v3922
  %3942 = vmatprep.subr.bf16.mxu0 0
  %3943 = vmatpush1.bf16.msra.mxu0 %v3921
  %3944 = vmatprep.subr.bf16.mxu0 0
  %3945 = vmatpush1.bf16.msra.mxu0 %v3920
  %3946 = vmatprep.subr.bf16.mxu0 0
  %3947 = vmatpush1.bf16.msra.mxu0 %v3919
  %3948 = vmatprep.subr.bf16.mxu0 0
  %3949 = vmatpush1.bf16.msra.mxu0 %v3918
  %3950 = vmatprep.subr.bf16.mxu0 0
  %3951 = vmatpush2.bf16.msra.mxu0 0
  %3952 = vmatprep.subr.bf16.mxu0 0
  %3953 = vmatpush2.bf16.msra.mxu0 0
  %3954 = vmatprep.subr.bf16.mxu0 0
  %3955 = vmatpush2.bf16.msra.mxu0 0
  %3956 = vmatprep.subr.bf16.mxu0 0
  %3957 = vmatpush2.bf16.msra.mxu0 0
  %3958 = vmatprep.subr.bf16.mxu0 0
  %3959 = vmatpush2.bf16.msra.mxu0 0
  %3960 = vmatprep.subr.bf16.mxu0 0
  %3961 = vmatpush2.bf16.msra.mxu0 0
  %3962 = vmatprep.subr.bf16.mxu0 0
  %3963 = vmatpush2.bf16.msra.mxu0 0
  %3964 = vmatprep.subr.bf16.mxu0 0
  %3965 = vmatpush2.bf16.msra.mxu0 0
  %3966 = vmatprep.mubr.bf16.mxu0 0
  %3967 = vmatmul.mubr.bf16.gmra.mxu0 %v3881
  %v3968 = vpop.f32.mrf.mxu0
  %v3969 = vadd.f32 %v3885, %v3968
  %v3970 = vpop.f32.mrf.mxu0
  %v3971 = vpop.f32.mrf.mxu0
  %v3972 = vadd.f32 %v3885, %v3971
  %v3973 = vpop.f32.mrf.mxu0
  %3974 = vdwg.mxu0
  %v3975 = vadd.f32 %v1857, %v3969
  %v3976 = vadd.f32 %v1858, %v3972
  %v3977 = vadd.f32 %v3862, 1e-08
  %v3978 = vadd.f32 %v3863, 1e-08
  %v3979 = vlog2.pop %v3977
  %v3980 = vmul.f32 %v3979, 0.6931472
  %v3981 = vlog2.pop %v3978
  %v3982 = vmul.f32 %v3981, 0.6931472
  %v3983 = vmul.f32 %v3862, %v3980
  %v3984 = vmul.f32 %v3863, %v3982
  %v3985 = vsel %vm1253, %v3983, 0.0
  %3986 = vadd.xlane.f32.xlu0 %v3985
  %v3987 = vpop.xlane.xlu0 %3986
  %v3988 = vsel %vm1253, %v3984, 0.0
  %3989 = vadd.xlane.f32.xlu0 %v3988
  %v3990 = vpop.xlane.xlu0 %3989
  %v3991 = vsub.f32 0.0, %v3987
  %v3992 = vsub.f32 0.0, %v3990
  %v3993 = vadd.f32 %v3991, %v3992
  %v3994 = vrot.slane %v3993, 4
  %v3995 = vadd.f32 %v3993, %v3994
  %v3996 = vrot.slane %v3995, 2
  %v3997 = vadd.f32 %v3995, %v3996
  %v3998 = vrot.slane %v3997, 1
  %v3999 = vadd.f32 %v3997, %v3998
  %v4000 = vrcp.pop 16.0
  %v4001 = vmul.f32 %v3999, %v4000
  %v4002 = vsub.f32 %v4001, 0.01
  %v4003 = vtanh.pop %v4002
  %v4004 = vmul.f32 %v4003, -0.05
  %4005 = vmax.xlane.f32.xlu0 %v3975
  %v4006 = vpop.xlane.xlu0 %4005
  %4007 = vmax.xlane.f32.xlu0 %v3976
  %v4008 = vpop.xlane.xlu0 %4007
  %v4009 = vsub.f32 %v3975, %v4006
  %v4010 = vsub.f32 %v3976, %v4008
  %v4011 = vmul.f32 %v4009, 1.442695
  %v4012 = vpow.pop %v4011
  %v4013 = vmul.f32 %v4010, 1.442695
  %v4014 = vpow.pop %v4013
  %4015 = vadd.xlane.f32.xlu0 %v4012
  %v4016 = vpop.xlane.xlu0 %4015
  %4017 = vadd.xlane.f32.xlu0 %v4014
  %v4018 = vpop.xlane.xlu0 %4017
  %v4019 = vrcp.pop %v4016
  %v4020 = vrcp.pop %v4018
  %v4021 = vlog2.pop %v4016
  %v4022 = vmul.f32 %v4021, 0.6931472
  %v4023 = vlog2.pop %v4018
  %v4024 = vmul.f32 %v4023, 0.6931472
  %v4025 = vadd.f32 %v4006, %v4022
  %v4026 = vadd.f32 %v4008, %v4024
  %v4027 = vmul.f32 %v4012, %v3975
  %v4028 = vmul.f32 %v4014, %v3976
  %4029 = vadd.xlane.f32.xlu0 %v4027
  %v4030 = vpop.xlane.xlu0 %4029
  %4031 = vadd.xlane.f32.xlu0 %v4028
  %v4032 = vpop.xlane.xlu0 %4031
  %v4033 = vmul.f32 %v4019, %v4030
  %v4034 = vmul.f32 %v4020, %v4032
  %v4035 = vsub.f32 %v4025, %v4033
  %v4036 = vsub.f32 %v4026, %v4034
  %v4037 = vsub.f32 0.0, %v4035
  %v4038 = vsub.f32 0.0, %v4036
  %v4039 = vrot.slane %v4037, 4
  %v4040 = vmax.f32 %v4037, %v4039
  %v4041 = vrot.slane %v4040, 2
  %v4042 = vmax.f32 %v4040, %v4041
  %v4043 = vrot.slane %v4042, 1
  %v4044 = vmax.f32 %v4042, %v4043
  %v4045 = vrot.slane %v4038, 4
  %v4046 = vmax.f32 %v4038, %v4045
  %v4047 = vrot.slane %v4046, 2
  %v4048 = vmax.f32 %v4046, %v4047
  %v4049 = vrot.slane %v4048, 1
  %v4050 = vmax.f32 %v4048, %v4049
  %v4051 = vsub.f32 %v4037, %v4044
  %v4052 = vsub.f32 %v4038, %v4050
  %v4053 = vmul.f32 %v4051, 1.442695
  %v4054 = vpow.pop %v4053
  %v4055 = vmul.f32 %v4052, 1.442695
  %v4056 = vpow.pop %v4055
  %v4057 = vrot.slane %v4054, 4
  %v4058 = vadd.f32 %v4054, %v4057
  %v4059 = vrot.slane %v4058, 2
  %v4060 = vadd.f32 %v4058, %v4059
  %v4061 = vrot.slane %v4060, 1
  %v4062 = vadd.f32 %v4060, %v4061
  %v4063 = vrot.slane %v4056, 4
  %v4064 = vadd.f32 %v4056, %v4063
  %v4065 = vrot.slane %v4064, 2
  %v4066 = vadd.f32 %v4064, %v4065
  %v4067 = vrot.slane %v4066, 1
  %v4068 = vadd.f32 %v4066, %v4067
  %v4069 = vrcp.pop %v4062
  %v4070 = vrcp.pop %v4068
  %v4071 = vmul.f32 %v4054, %v4069
  %v4072 = vmul.f32 %v4056, %v4070
  %v4073 = vmul.f32 %v4071, 8.0
  %v4074 = vmul.f32 %v4072, 8.0
  %v4075 = vmul.f32 %v3975, %v4073
  %v4076 = vmul.f32 %v3976, %v4074
  %v4077 = vld [vmem:[%s3 + $0x14] sm:$0x1]
  %v4078 = vld [vmem:[%s3 + $0x15] sm:$0x1]
  %4079 = vadd.xlane.f32.xlu0 %v4075
  %v4080 = vpop.xlane.xlu0 %4079
  %4081 = vadd.xlane.f32.xlu0 %v4076
  %v4082 = vpop.xlane.xlu0 %4081
  %v4083 = vmul.f32 %v4080, %v1865
  %v4084 = vmul.f32 %v4082, %v1865
  %v4085 = vsub.f32 %v4075, %v4083
  %v4086 = vsub.f32 %v4076, %v4084
  %v4087 = vmul.f32 %v4085, %v4085
  %v4088 = vmul.f32 %v4086, %v4086
  %4089 = vadd.xlane.f32.xlu0 %v4087
  %v4090 = vpop.xlane.xlu0 %4089
  %4091 = vadd.xlane.f32.xlu0 %v4088
  %v4092 = vpop.xlane.xlu0 %4091
  %v4093 = vmul.f32 %v4090, %v1865
  %v4094 = vmul.f32 %v4092, %v1865
  %v4095 = vadd.f32 %v4093, 1e-05
  %v4096 = vadd.f32 %v4094, 1e-05
  %v4097 = vrsqrt.pop %v4095
  %v4098 = vrsqrt.pop %v4096
  %v4099 = vmul.f32 %v4085, %v4097
  %v4100 = vmul.f32 %v4086, %v4098
  %v4101 = vlaneseq
  %v4102 = vshrl.u32 %v4101, 7
  %v4103 = vsub.s32 0, %v4102
  %v4104 = vrot.slane %v4077, %v4103
  %v4105 = vmul.f32 %v4099, %v4104
  %v4106 = vmul.f32 %v4100, %v4104
  %v4107 = vlaneseq
  %v4108 = vshrl.u32 %v4107, 7
  %v4109 = vsub.s32 0, %v4108
  %v4110 = vrot.slane %v4078, %v4109
  %v4111 = vadd.f32 %v4105, %v4110
  %v4112 = vadd.f32 %v4106, %v4110
  %v4113 = vld [vmem:[%s2 + $0x3c] sm:$0xf]
  %v4114 = vld [vmem:[%s2 + $0x84] sm:$0xf]
  %v4115 = vld [vmem:[%s2 + $0xcc] sm:$0xf]
  %v4116 = vld [vmem:[%s2 + $0x114] sm:$0xf]
  %v4117 = vld [vmem:[%s2 + $0x15c] sm:$0xf]
  %v4118 = vld [vmem:[%s2 + $0x1a4] sm:$0xf]
  %v4119 = vld [vmem:[%s2 + $0x1ec] sm:$0xf]
  %v4120 = vld [vmem:[%s2 + $0x234] sm:$0xf]
  %v4121 = vld [vmem:[%s2 + $0x27c] sm:$0xf]
  %v4122 = vld [vmem:[%s2 + $0x2c4] sm:$0xf]
  %v4123 = vld [vmem:[%s2 + $0x30c] sm:$0xf]
  %v4124 = vld [vmem:[%s2 + $0x354] sm:$0xf]
  %v4125 = vld [vmem:[%s2 + $0x39c] sm:$0xf]
  %v4126 = vld [vmem:[%s2 + $0x3e4] sm:$0xf]
  %v4127 = vld [vmem:[%s2 + $0x42c] sm:$0xf]
  %v4128 = vld [vmem:[%s2 + $0x474] sm:$0xf]
  %v4129 = vld [vmem:[%s3 + $0xf] sm:$0x1]
  %v4130 = vpack.c.bf16 %v4112, %v4111
  %v4131 = vlaneseq
  %v4132 = vshrl.u32 %v4131, 7
  %v4133 = vsub.s32 0, %v4132
  %v4134 = vrot.slane %v4129, %v4133
  %v4151 = vunpack.c.l.b16 %v4113
  %v4152 = vunpack.c.l.b16 %v4114
  %v4153 = vunpack.c.l.b16 %v4115
  %v4154 = vunpack.c.l.b16 %v4116
  %v4155 = vunpack.c.l.b16 %v4117
  %v4156 = vunpack.c.l.b16 %v4118
  %v4157 = vunpack.c.l.b16 %v4119
  %v4158 = vunpack.c.l.b16 %v4120
  %v4159 = vunpack.c.l.b16 %v4121
  %v4160 = vunpack.c.l.b16 %v4122
  %v4161 = vunpack.c.l.b16 %v4123
  %v4162 = vunpack.c.l.b16 %v4124
  %v4163 = vunpack.c.l.b16 %v4125
  %v4164 = vunpack.c.l.b16 %v4126
  %v4165 = vunpack.c.l.b16 %v4127
  %v4166 = vunpack.c.l.b16 %v4128
  %v4167 = vpack.c.b16 %v4152, %v4151
  %v4168 = vpack.c.b16 %v4154, %v4153
  %v4169 = vpack.c.b16 %v4156, %v4155
  %v4170 = vpack.c.b16 %v4158, %v4157
  %v4171 = vpack.c.b16 %v4160, %v4159
  %v4172 = vpack.c.b16 %v4162, %v4161
  %v4173 = vpack.c.b16 %v4164, %v4163
  %v4174 = vpack.c.b16 %v4166, %v4165
  %4183 = vmatprep.subr.bf16.mxu0 0
  %4184 = vmatpush1.bf16.msra.mxu0 %v4174
  %4185 = vmatprep.subr.bf16.mxu0 0
  %4186 = vmatpush1.bf16.msra.mxu0 %v4173
  %4187 = vmatprep.subr.bf16.mxu0 0
  %4188 = vmatpush1.bf16.msra.mxu0 %v4172
  %4189 = vmatprep.subr.bf16.mxu0 0
  %4190 = vmatpush1.bf16.msra.mxu0 %v4171
  %4191 = vmatprep.subr.bf16.mxu0 0
  %4192 = vmatpush1.bf16.msra.mxu0 %v4170
  %4193 = vmatprep.subr.bf16.mxu0 0
  %4194 = vmatpush1.bf16.msra.mxu0 %v4169
  %4195 = vmatprep.subr.bf16.mxu0 0
  %4196 = vmatpush1.bf16.msra.mxu0 %v4168
  %4197 = vmatprep.subr.bf16.mxu0 0
  %4198 = vmatpush1.bf16.msra.mxu0 %v4167
  %4199 = vmatprep.subr.bf16.mxu0 0
  %4200 = vmatpush2.bf16.msra.mxu0 0
  %4201 = vmatprep.subr.bf16.mxu0 0
  %4202 = vmatpush2.bf16.msra.mxu0 0
  %4203 = vmatprep.subr.bf16.mxu0 0
  %4204 = vmatpush2.bf16.msra.mxu0 0
  %4205 = vmatprep.subr.bf16.mxu0 0
  %4206 = vmatpush2.bf16.msra.mxu0 0
  %4207 = vmatprep.subr.bf16.mxu0 0
  %4208 = vmatpush2.bf16.msra.mxu0 0
  %4209 = vmatprep.subr.bf16.mxu0 0
  %4210 = vmatpush2.bf16.msra.mxu0 0
  %4211 = vmatprep.subr.bf16.mxu0 0
  %4212 = vmatpush2.bf16.msra.mxu0 0
  %4213 = vmatprep.subr.bf16.mxu0 0
  %4214 = vmatpush2.bf16.msra.mxu0 0
  %4215 = vmatprep.mubr.bf16.mxu0 0
  %4216 = vmatmul.mubr.bf16.gmra.mxu0 %v4130
  %v4217 = vpop.f32.mrf.mxu0
  %v4218 = vadd.f32 %v4134, %v4217
  %v4219 = vpop.f32.mrf.mxu0
  %v4220 = vpop.f32.mrf.mxu0
  %v4221 = vadd.f32 %v4134, %v4220
  %v4222 = vpop.f32.mrf.mxu0
  %4223 = vdwg.mxu0
  %v4224 = vtanh.pop %v4218
  %v4225 = vtanh.pop %v4221
  %v4226 = vadd.f32 %v4075, %v4224
  %v4227 = vadd.f32 %v4076, %v4225
  %v4228 = vld [vmem:[%s2 + $0x40] sm:$0xf]
  %v4229 = vld [vmem:[%s2 + $0x88] sm:$0xf]
  %v4230 = vld [vmem:[%s2 + $0xd0] sm:$0xf]
  %v4231 = vld [vmem:[%s2 + $0x118] sm:$0xf]
  %v4232 = vld [vmem:[%s2 + $0x160] sm:$0xf]
  %v4233 = vld [vmem:[%s2 + $0x1a8] sm:$0xf]
  %v4234 = vld [vmem:[%s2 + $0x1f0] sm:$0xf]
  %v4235 = vld [vmem:[%s2 + $0x238] sm:$0xf]
  %v4236 = vld [vmem:[%s2 + $0x280] sm:$0xf]
  %v4237 = vld [vmem:[%s2 + $0x2c8] sm:$0xf]
  %v4238 = vld [vmem:[%s2 + $0x310] sm:$0xf]
  %v4239 = vld [vmem:[%s2 + $0x358] sm:$0xf]
  %v4240 = vld [vmem:[%s2 + $0x3a0] sm:$0xf]
  %v4241 = vld [vmem:[%s2 + $0x3e8] sm:$0xf]
  %v4242 = vld [vmem:[%s2 + $0x430] sm:$0xf]
  %v4243 = vld [vmem:[%s2 + $0x478] sm:$0xf]
  %v4244 = vld [vmem:[%s3 + $0x10] sm:$0x1]
  %v4245 = vpack.c.bf16 %v4227, %v4226
  %v4246 = vlaneseq
  %v4247 = vshrl.u32 %v4246, 7
  %v4248 = vsub.s32 0, %v4247
  %v4249 = vrot.slane %v4244, %v4248
  %v4266 = vunpack.c.l.b16 %v4228
  %v4267 = vunpack.c.l.b16 %v4229
  %v4268 = vunpack.c.l.b16 %v4230
  %v4269 = vunpack.c.l.b16 %v4231
  %v4270 = vunpack.c.l.b16 %v4232
  %v4271 = vunpack.c.l.b16 %v4233
  %v4272 = vunpack.c.l.b16 %v4234
  %v4273 = vunpack.c.l.b16 %v4235
  %v4274 = vunpack.c.l.b16 %v4236
  %v4275 = vunpack.c.l.b16 %v4237
  %v4276 = vunpack.c.l.b16 %v4238
  %v4277 = vunpack.c.l.b16 %v4239
  %v4278 = vunpack.c.l.b16 %v4240
  %v4279 = vunpack.c.l.b16 %v4241
  %v4280 = vunpack.c.l.b16 %v4242
  %v4281 = vunpack.c.l.b16 %v4243
  %v4282 = vpack.c.b16 %v4267, %v4266
  %v4283 = vpack.c.b16 %v4269, %v4268
  %v4284 = vpack.c.b16 %v4271, %v4270
  %v4285 = vpack.c.b16 %v4273, %v4272
  %v4286 = vpack.c.b16 %v4275, %v4274
  %v4287 = vpack.c.b16 %v4277, %v4276
  %v4288 = vpack.c.b16 %v4279, %v4278
  %v4289 = vpack.c.b16 %v4281, %v4280
  %4298 = vmatprep.subr.bf16.mxu0 0
  %4299 = vmatpush1.bf16.msra.mxu0 %v4289
  %4300 = vmatprep.subr.bf16.mxu0 0
  %4301 = vmatpush1.bf16.msra.mxu0 %v4288
  %4302 = vmatprep.subr.bf16.mxu0 0
  %4303 = vmatpush1.bf16.msra.mxu0 %v4287
  %4304 = vmatprep.subr.bf16.mxu0 0
  %4305 = vmatpush1.bf16.msra.mxu0 %v4286
  %4306 = vmatprep.subr.bf16.mxu0 0
  %4307 = vmatpush1.bf16.msra.mxu0 %v4285
  %4308 = vmatprep.subr.bf16.mxu0 0
  %4309 = vmatpush1.bf16.msra.mxu0 %v4284
  %4310 = vmatprep.subr.bf16.mxu0 0
  %4311 = vmatpush1.bf16.msra.mxu0 %v4283
  %4312 = vmatprep.subr.bf16.mxu0 0
  %4313 = vmatpush1.bf16.msra.mxu0 %v4282
  %4314 = vmatprep.subr.bf16.mxu0 0
  %4315 = vmatpush2.bf16.msra.mxu0 0
  %4316 = vmatprep.subr.bf16.mxu0 0
  %4317 = vmatpush2.bf16.msra.mxu0 0
  %4318 = vmatprep.subr.bf16.mxu0 0
  %4319 = vmatpush2.bf16.msra.mxu0 0
  %4320 = vmatprep.subr.bf16.mxu0 0
  %4321 = vmatpush2.bf16.msra.mxu0 0
  %4322 = vmatprep.subr.bf16.mxu0 0
  %4323 = vmatpush2.bf16.msra.mxu0 0
  %4324 = vmatprep.subr.bf16.mxu0 0
  %4325 = vmatpush2.bf16.msra.mxu0 0
  %4326 = vmatprep.subr.bf16.mxu0 0
  %4327 = vmatpush2.bf16.msra.mxu0 0
  %4328 = vmatprep.subr.bf16.mxu0 0
  %4329 = vmatpush2.bf16.msra.mxu0 0
  %4330 = vmatprep.mubr.bf16.mxu0 0
  %4331 = vmatmul.mubr.bf16.gmra.mxu0 %v4245
  %v4332 = vpop.f32.mrf.mxu0
  %v4333 = vadd.f32 %v4249, %v4332
  %v4334 = vpop.f32.mrf.mxu0
  %v4335 = vpop.f32.mrf.mxu0
  %v4336 = vadd.f32 %v4249, %v4335
  %v4337 = vpop.f32.mrf.mxu0
  %4338 = vdwg.mxu0
  %v4339 = vmul.f32 %v4333, %v4333
  %v4340 = vmul.f32 %v4336, %v4336
  %v4341 = vmul.f32 %v4333, %v4339
  %v4342 = vmul.f32 %v4336, %v4340
  %v4343 = vmul.f32 %v4341, 0.044715
  %v4344 = vmul.f32 %v4342, 0.044715
  %v4345 = vadd.f32 %v4333, %v4343
  %v4346 = vadd.f32 %v4336, %v4344
  %v4347 = vmul.f32 %v4345, 0.7978846
  %v4348 = vmul.f32 %v4346, 0.7978846
  %v4349 = vtanh.pop %v4347
  %v4350 = vtanh.pop %v4348
  %v4351 = vadd.f32 %v4349, 1.0
  %v4352 = vadd.f32 %v4350, 1.0
  %v4353 = vmul.f32 %v4351, 0.5
  %v4354 = vmul.f32 %v4352, 0.5
  %v4355 = vmul.f32 %v4333, %v4353
  %v4356 = vmul.f32 %v4336, %v4354
  %v4357 = vadd.f32 %v4226, %v4355
  %v4358 = vadd.f32 %v4227, %v4356
  %v4359 = vrot.slane %v4357, 4
  %v4360 = vadd.f32 %v4357, %v4359
  %v4361 = vrot.slane %v4360, 2
  %v4362 = vadd.f32 %v4360, %v4361
  %v4363 = vrot.slane %v4362, 1
  %v4364 = vadd.f32 %v4362, %v4363
  %v4365 = vrot.slane %v4358, 4
  %v4366 = vadd.f32 %v4358, %v4365
  %v4367 = vrot.slane %v4366, 2
  %v4368 = vadd.f32 %v4366, %v4367
  %v4369 = vrot.slane %v4368, 1
  %v4370 = vadd.f32 %v4368, %v4369
  %v4371 = vrcp.pop 8.0
  %v4372 = vmul.f32 %v4364, %v4371
  %v4373 = vmul.f32 %v4370, %v4371
  %v4374 = vld [vmem:[%s2 + $0x44] sm:$0xf]
  %v4375 = vld [vmem:[%s2 + $0x8c] sm:$0xf]
  %v4376 = vld [vmem:[%s2 + $0xd4] sm:$0xf]
  %v4377 = vld [vmem:[%s2 + $0x11c] sm:$0xf]
  %v4378 = vld [vmem:[%s2 + $0x164] sm:$0xf]
  %v4379 = vld [vmem:[%s2 + $0x1ac] sm:$0xf]
  %v4380 = vld [vmem:[%s2 + $0x1f4] sm:$0xf]
  %v4381 = vld [vmem:[%s2 + $0x23c] sm:$0xf]
  %v4382 = vld [vmem:[%s2 + $0x284] sm:$0xf]
  %v4383 = vld [vmem:[%s2 + $0x2cc] sm:$0xf]
  %v4384 = vld [vmem:[%s2 + $0x314] sm:$0xf]
  %v4385 = vld [vmem:[%s2 + $0x35c] sm:$0xf]
  %v4386 = vld [vmem:[%s2 + $0x3a4] sm:$0xf]
  %v4387 = vld [vmem:[%s2 + $0x3ec] sm:$0xf]
  %v4388 = vld [vmem:[%s2 + $0x434] sm:$0xf]
  %v4389 = vld [vmem:[%s2 + $0x47c] sm:$0xf]
  %v4390 = vld [vmem:[%s3 + $0x11] sm:$0x1]
  %v4391 = vpack.c.bf16 %v4372, %v4372
  %v4392 = vpack.c.bf16 %v4373, %v4373
  %v4393 = vlaneseq
  %v4394 = vshrl.u32 %v4393, 7
  %v4395 = vsub.s32 0, %v4394
  %v4396 = vrot.slane %v4390, %v4395
  %v4399 = vunpack.c.l.b16 %v4391
  %v4400 = vunpack.c.l.b16 %v4392
  %vm4401 = vcmask 1041409
  %v4402 = vsel %vm4401, %v4400, %v4399
  %v4403 = vpack.c.b16 %v4402, %v4402
  %v4421 = vunpack.c.l.b16 %v4374
  %v4422 = vunpack.c.l.b16 %v4375
  %v4423 = vunpack.c.l.b16 %v4376
  %v4424 = vunpack.c.l.b16 %v4377
  %v4425 = vunpack.c.l.b16 %v4378
  %v4426 = vunpack.c.l.b16 %v4379
  %v4427 = vunpack.c.l.b16 %v4380
  %v4428 = vunpack.c.l.b16 %v4381
  %v4429 = vunpack.c.l.b16 %v4382
  %v4430 = vunpack.c.l.b16 %v4383
  %v4431 = vunpack.c.l.b16 %v4384
  %v4432 = vunpack.c.l.b16 %v4385
  %v4433 = vunpack.c.l.b16 %v4386
  %v4434 = vunpack.c.l.b16 %v4387
  %v4435 = vunpack.c.l.b16 %v4388
  %v4436 = vunpack.c.l.b16 %v4389
  %v4437 = vpack.c.b16 %v4422, %v4421
  %v4438 = vpack.c.b16 %v4424, %v4423
  %v4439 = vpack.c.b16 %v4426, %v4425
  %v4440 = vpack.c.b16 %v4428, %v4427
  %v4441 = vpack.c.b16 %v4430, %v4429
  %v4442 = vpack.c.b16 %v4432, %v4431
  %v4443 = vpack.c.b16 %v4434, %v4433
  %v4444 = vpack.c.b16 %v4436, %v4435
  %4453 = vmatprep.subr.bf16.mxu0 0
  %4454 = vmatpush1.bf16.msra.mxu0 %v4444
  %4455 = vmatprep.subr.bf16.mxu0 0
  %4456 = vmatpush1.bf16.msra.mxu0 %v4443
  %4457 = vmatprep.subr.bf16.mxu0 0
  %4458 = vmatpush1.bf16.msra.mxu0 %v4442
  %4459 = vmatprep.subr.bf16.mxu0 0
  %4460 = vmatpush1.bf16.msra.mxu0 %v4441
  %4461 = vmatprep.subr.bf16.mxu0 0
  %4462 = vmatpush1.bf16.msra.mxu0 %v4440
  %4463 = vmatprep.subr.bf16.mxu0 0
  %4464 = vmatpush1.bf16.msra.mxu0 %v4439
  %4465 = vmatprep.subr.bf16.mxu0 0
  %4466 = vmatpush1.bf16.msra.mxu0 %v4438
  %4467 = vmatprep.subr.bf16.mxu0 0
  %4468 = vmatpush1.bf16.msra.mxu0 %v4437
  %4469 = vmatprep.subr.bf16.mxu0 0
  %4470 = vmatpush2.bf16.msra.mxu0 0
  %4471 = vmatprep.subr.bf16.mxu0 0
  %4472 = vmatpush2.bf16.msra.mxu0 0
  %4473 = vmatprep.subr.bf16.mxu0 0
  %4474 = vmatpush2.bf16.msra.mxu0 0
  %4475 = vmatprep.subr.bf16.mxu0 0
  %4476 = vmatpush2.bf16.msra.mxu0 0
  %4477 = vmatprep.subr.bf16.mxu0 0
  %4478 = vmatpush2.bf16.msra.mxu0 0
  %4479 = vmatprep.subr.bf16.mxu0 0
  %4480 = vmatpush2.bf16.msra.mxu0 0
  %4481 = vmatprep.subr.bf16.mxu0 0
  %4482 = vmatpush2.bf16.msra.mxu0 0
  %4483 = vmatprep.subr.bf16.mxu0 0
  %4484 = vmatpush2.bf16.msra.mxu0 0
  %4485 = vmatprep.mubr.bf16.mxu0 0
  %4486 = vmatmul.mubr.bf16.gmra.mxu0 %v4403
  %v4487 = vpop.f32.mrf.mxu0
  %v4488 = vadd.f32 %v4396, %v4487
  %v4489 = vpop.f32.mrf.mxu0
  %v4490 = vpop.f32.mrf.mxu0
  %v4491 = vpop.f32.mrf.mxu0
  %4492 = vdwg.mxu0
  %4493 = vst [vmem:[%s4] sm:$0xff] %v926
  %4494 = vst [vmem:[%s4 + $0x8] sm:$0xff] %v927
  %4495 = vst [vmem:[%s4 + $0x10] sm:$0xff] %v1165
  %4496 = vst [vmem:[%s4 + $0x18] sm:$0xff] %v1166
  %4497 = vst [vmem:[%s4 + $0x20] sm:$0xff] %v1857
  %4498 = vst [vmem:[%s4 + $0x28] sm:$0xff] %v1858
  %4499 = vst [vmem:[%s4 + $0x30] sm:$0xff] %v4357
  %4500 = vst [vmem:[%s4 + $0x38] sm:$0xff] %v4358
  %4501 = vst [vmem:[%s4 + $0x40] sm:$0x3] %v4488
  %4502 = vst [vmem:[%s5] sm:$0xff] 0.0
  %4503 = vst [vmem:[%s5 + $0x8] sm:$0xff] 0.0
  %4504 = vst [vmem:[%s5 + $0x10] sm:$0xff] 0.0
  %4505 = vst [vmem:[%s5 + $0x18] sm:$0xff] 0.0
  %4506 = vst [vmem:[%s5 + $0x20] sm:$0xff] 0.0
  %4507 = vst [vmem:[%s5 + $0x28] sm:$0xff] 0.0
  %4508 = vst [vmem:[%s5 + $0x30] sm:$0x1] 0.0
  %4509 = vst.msk [vmem:[%s5] sm:$0xff] %vm1253, %v1274
  %4510 = vst.msk [vmem:[%s5 + $0x8] sm:$0xff] %vm1253, %v1275
  %4511 = vst.msk [vmem:[%s5 + $0x10] sm:$0xff] %vm1253, %v3862
  %4512 = vst.msk [vmem:[%s5 + $0x18] sm:$0xff] %vm1253, %v3863
  %vm4513 = vcmask 7168
  %4514 = vst.msk [vmem:[%s5 + $0x20] sm:$0xff] %vm4513, %v4071
  %4515 = vst.msk [vmem:[%s5 + $0x28] sm:$0xff] %vm4513, %v4072
  %v4516 = vadd.f32 %v4004, 0.0
  %4517 = vst [vmem:[%s5 + $0x30] sm:$0x1] %v4516
  // Predicated region
  $region18: #{sden_forward.1} parent=0 // pred_check
    _
  $region19: #{sden_forward.1} parent=0 // pred_check_branch
    %4519 = sbr.rel (0) target = $region21
  $region20: #{sden_forward.1} parent=0 // pred_region
    _
  $region21: #{sden_forward.1} parent=0 // pred_fallthru
    _
  // Predicated region
  $region22: #{sden_forward.1} parent=0 // pred_check
    _
  $region23: #{sden_forward.1} parent=0 // pred_check_branch
    %4521 = sbr.rel (0) target = $region25
  $region24: #{sden_forward.1} parent=0 // pred_region
    _
  $region25: #{sden_forward.1} parent=0 // pred_fallthru
    _
  // Predicated region
  $region26: #{sden_forward.1} parent=0 // pred_check
    _
  $region27: #{sden_forward.1} parent=0 // pred_check_branch
    %4523 = sbr.rel (0) target = $region29
  $region28: #{sden_forward.1} parent=0 // pred_region
    _
  $region29: #{sden_forward.1} parent=0 // pred_fallthru
    _
  // Predicated region
  $region30: #{sden_forward.1} parent=0 // pred_check
    _
  $region31: #{sden_forward.1} parent=0 // pred_check_branch
    %4525 = sbr.rel (0) target = $region33
  $region32: #{sden_forward.1} parent=0 // pred_region
    _
  $region33: #{sden_forward.1} parent=0 // pred_fallthru
    _

</llo_original>
